<compile_context>
chip_gen: v7x
topology: tpu7x:2x2x1
jax: 0.10.0
libtpu: 0.0.40
codegen_flags: <defaults>
</compile_context>

<pallas_src>
import math
import functools

import jax
import jax.numpy as jnp
from jax.experimental import pallas as pl
from jax.experimental.pallas import tpu as pltpu

_INV_SQRT2 = 1.0 / math.sqrt(2.0)


def _round_up(a, b):
    return (a + b - 1) // b * b


def _diffwave_block_kernel(C, TL, HP, D, L,
                           x_ref, halo_ref, cond_ref, t_ref,
                           wk_ref, bk_ref, wo_ref, bo_ref,
                           res_ref, skip_ref):
    """One (batch, L-tile) grid step.

    x_ref    : (1, C, TL)      float32   residual-stream input tile
    halo_ref : (1, 1, C, 2*HP) bfloat16  HP columns before + HP columns after tile
    cond_ref : (1, NM, TL)     bfloat16  mel conditioning tile
    t_ref    : (1, C, 1)       float32   precomputed fc_timestep(t)
    wk_ref   : (2C, 3C+NM)     bfloat16  fused [tap(l-d)|tap(l)|tap(l+d)|cond] weights
    bk_ref   : (2C, 1)         float32   dil_b + cond_b
    wo_ref   : (2C, C)         bfloat16  conv_out weight
    bo_ref   : (2C, 1)         float32   conv_out bias
    res_ref / skip_ref : (1, C, TL) float32 outputs (lane-dense, TL >= 128)
    """
    i = pl.program_id(1)
    col0 = i * TL                                   # global column of tile start

    x_raw = x_ref[0]                                # (C, TL) f32 (residual input)
    t_col = t_ref[0]                                # (C, 1)  f32

    # --- x + t with conv-'same' zero padding outside [0, L) ------------------
    lane_c = jax.lax.broadcasted_iota(jnp.int32, (1, TL), 1)
    valid_c = ((col0 + lane_c) < L).astype(jnp.float32)
    xt = ((x_raw + t_col) * valid_c).astype(jnp.bfloat16)            # (C, TL)

    halo = halo_ref[0, 0].astype(jnp.float32)                        # (C, 2*HP)
    lane_h = jax.lax.broadcasted_iota(jnp.int32, (1, 2 * HP), 1)
    g = jnp.where(lane_h < HP,
                  col0 - HP + lane_h,               # left-halo global positions
                  col0 + TL + (lane_h - HP))        # right-halo global positions
    valid_h = ((g >= 0) & (g < L)).astype(jnp.float32)
    halo_t = ((halo + t_col) * valid_h).astype(jnp.bfloat16)         # (C, 2*HP)

    # --- halo-extended tile (lane-aligned concat), shifted tap views ---------
    # xt_ext column c corresponds to global position col0 - HP + c.
    xt_ext = jnp.concatenate([halo_t[:, :HP], xt, halo_t[:, HP:]],
                             axis=1)                                  # (C, TL+2HP)
    x_m = xt_ext[:, HP - D: HP - D + TL]            # (x + t)(l - d)
    x_p = xt_ext[:, HP + D: HP + D + TL]            # (x + t)(l + d)

    cond = cond_ref[0]                              # (NM, TL) bf16

    # --- fused dilated conv + 1x1 conditioner: one K = 3C+NM contraction -----
    xk = jnp.concatenate([x_m, xt, x_p, cond], axis=0)               # (3C+NM, TL)
    y = (jnp.dot(wk_ref[...], xk, preferred_element_type=jnp.float32)
         + bk_ref[...])                                              # (2C, TL) f32

    # gated activation (chunk along channel / sublane axis)
    gate = jnp.tanh(y[:C]) * jax.nn.sigmoid(y[C:])                   # (C, TL) f32

    # conv_out (1x1)
    out = (jnp.dot(wo_ref[...], gate.astype(jnp.bfloat16),
                   preferred_element_type=jnp.float32)
           + bo_ref[...])                                            # (2C, TL) f32

    res_ref[0] = (out[:C] + x_raw) * _INV_SQRT2
    skip_ref[0] = out[C:]


def diffwave_block(x, t, cond, params, dilation, tile_l=1024):
    """DiffWaveBlock.forward.  x: (B, C, L), t: (B, LW), cond: (B, N_MELS, L).

    Returns ((conv_out_res + input)/sqrt(2), skip), both (B, C, L), matching PyTorch.
    """
    B, C, L = x.shape
    d = int(dilation)

    if cond is None:
        # TODO(synk): dedicated no-conditioning kernel; a zero conditioner is an
        # exact (if slightly wasteful) stand-in for with_conditioning=False.
        cond = jnp.zeros((B, 8, L), jnp.float32)
        cond_w = jnp.zeros((2 * C, 8), jnp.float32)
        cond_b = jnp.zeros((2 * C,), jnp.float32)
    else:
        cond_w = params['cond_w'][:, :, 0]
        cond_b = params['cond_b']
    NM = cond.shape[1]

    # tile / halo sizing: TL and HP are lane-aligned, TL >= HP >= dilation.
    HP = _round_up(d, 128)
    TL = _round_up(max(min(tile_l, _round_up(L, 128)), HP), 128)
    nT = -(-L // TL)
    Lp = nT * TL

    x32 = x.astype(jnp.float32)
    cond_bf = cond.astype(jnp.bfloat16)
    if Lp != L:
        x32 = jnp.pad(x32, ((0, 0), (0, 0), (0, Lp - L)))
        cond_bf = jnp.pad(cond_bf, ((0, 0), (0, 0), (0, Lp - L)))

    # per-tile halos: the HP columns before and after each tile (zeros off-end).
    xb = x32.astype(jnp.bfloat16)
    xl = jnp.pad(xb, ((0, 0), (0, 0), (HP, 0)))[:, :, :Lp]
    xr = jnp.pad(xb, ((0, 0), (0, 0), (0, TL)))[:, :, TL:]
    left = xl.reshape(B, C, nT, TL)[:, :, :, :HP]
    right = xr.reshape(B, C, nT, TL)[:, :, :, :HP]
    halo = jnp.transpose(jnp.concatenate([left, right], axis=-1),
                         (0, 2, 1, 3))                               # (B, nT, C, 2HP)

    # fc_timestep precomputed once (an M=1 matmul has no business on the MXU).
    t_proj = (t.astype(jnp.float32) @ params['fc_w'].astype(jnp.float32).T
              + params['fc_b'].astype(jnp.float32))[:, :, None]      # (B, C, 1)

    # fused conv weights: [tap(l-d) | tap(l) | tap(l+d) | conditioner].
    wd = params['dil_w'].astype(jnp.float32)                          # (2C, C, 3)
    wk = jnp.concatenate([wd[:, :, 0], wd[:, :, 1], wd[:, :, 2],
                          cond_w.astype(jnp.float32)],
                         axis=1).astype(jnp.bfloat16)                 # (2C, 3C+NM)
    bk = (params['dil_b'].astype(jnp.float32)
          + cond_b.astype(jnp.float32))[:, None]                      # (2C, 1)
    wo = params['out_w'][:, :, 0].astype(jnp.bfloat16)                # (2C, C)
    bo = params['out_b'].astype(jnp.float32)[:, None]                 # (2C, 1)

    K = 3 * C + NM
    kernel = functools.partial(_diffwave_block_kernel, C, TL, HP, d, L)

    res, skip = pl.pallas_call(
        kernel,
        out_shape=(jax.ShapeDtypeStruct((B, C, Lp), jnp.float32),
                   jax.ShapeDtypeStruct((B, C, Lp), jnp.float32)),
        grid_spec=pltpu.PrefetchScalarGridSpec(
            num_scalar_prefetch=0,
            grid=(B, nT),
            in_specs=[
                pl.BlockSpec((1, C, TL), lambda b, i: (b, 0, i)),            # x
                pl.BlockSpec((1, 1, C, 2 * HP), lambda b, i: (b, i, 0, 0)),  # halo
                pl.BlockSpec((1, NM, TL), lambda b, i: (b, 0, i)),           # cond
                pl.BlockSpec((1, C, 1), lambda b, i: (b, 0, 0)),             # t_proj
                # weights / biases: constant block index -> VMEM-resident,
                # not re-DMA'd per grid step.
                pl.BlockSpec((2 * C, K), lambda b, i: (0, 0)),
                pl.BlockSpec((2 * C, 1), lambda b, i: (0, 0)),
                pl.BlockSpec((2 * C, C), lambda b, i: (0, 0)),
                pl.BlockSpec((2 * C, 1), lambda b, i: (0, 0)),
            ],
            out_specs=(
                pl.BlockSpec((1, C, TL), lambda b, i: (b, 0, i)),
                pl.BlockSpec((1, C, TL), lambda b, i: (b, 0, i)),
            ),
        ),
        compiler_params=pltpu.CompilerParams(
            dimension_semantics=("parallel", "parallel"),
            vmem_limit_bytes=32 * 1024 * 1024),
    )(x32, halo, cond_bf, t_proj, wk, bk, wo, bo)

    if Lp != L:
        res = res[:, :, :L]
        skip = skip[:, :, :L]
    return res, skip


def reference(x, t, cond, params, dilation):
    """Plain-JAX reference mirroring the PyTorch forward (for validation)."""
    C = x.shape[1]
    dn = ('NCH', 'OIH', 'NCH')
    t_p = t @ params['fc_w'].T + params['fc_b']                    # (B, C)
    xx = x + t_p[:, :, None]
    y = jax.lax.conv_general_dilated(
        xx, params['dil_w'], window_strides=(1,),
        padding=[(dilation, dilation)], rhs_dilation=(dilation,),
        dimension_numbers=dn) + params['dil_b'][None, :, None]
    y = y + jax.lax.conv_general_dilated(
        cond, params['cond_w'], window_strides=(1,), padding=[(0, 0)],
        dimension_numbers=dn) + params['cond_b'][None, :, None]
    gate = jnp.tanh(y[:, :C]) * jax.nn.sigmoid(y[:, C:])
    out = jax.lax.conv_general_dilated(
        gate, params['out_w'], window_strides=(1,), padding=[(0, 0)],
        dimension_numbers=dn) + params['out_b'][None, :, None]
    return (out[:, :C] + x) / jnp.sqrt(2.0), out[:, C:]


if __name__ == "__main__":
    # Shapes consistent with the module: the PyTorch forward hardcodes batch=1
    # and residual_channels=64 (expand(1, 64, ...)); L is a small stand-in for
    # SAMPLE_RATE * SAMPLE_LENGTH_SECONDS and is deliberately NOT a multiple of
    # the L-tile so the padding/masking path is exercised.
    B = 1
    C = 64            # residual_channels
    L = 1920          # sequence length -> 2 L-tiles of 1024 (last one padded)
    LW = 32           # layer_width (timestep embedding dim)
    N_MELS = 16       # conditioning mel channels
    layer_index, dilation_mod = 2, 10
    dilation = 2 ** (layer_index % dilation_mod)   # = 4

    key = jax.random.PRNGKey(0)
    ks = jax.random.split(key, 11)

    def kaiming(k, shape, fan_in):
        return (jax.random.normal(k, shape, jnp.float32)
                * math.sqrt(2.0 / fan_in))

    params = {
        'fc_w':   kaiming(ks[0], (C, LW), LW),
        'fc_b':   jax.random.normal(ks[1], (C,), jnp.float32) * 0.01,
        'dil_w':  kaiming(ks[2], (2 * C, C, 3), C * 3),
        'dil_b':  jax.random.normal(ks[3], (2 * C,), jnp.float32) * 0.01,
        'cond_w': kaiming(ks[4], (2 * C, N_MELS, 1), N_MELS),
        'cond_b': jax.random.normal(ks[5], (2 * C,), jnp.float32) * 0.01,
        'out_w':  kaiming(ks[6], (2 * C, C, 1), C),
        'out_b':  jax.random.normal(ks[7], (2 * C,), jnp.float32) * 0.01,
    }

    x = jax.random.normal(ks[8], (B, C, L), jnp.float32)
    t = jax.random.normal(ks[9], (B, LW), jnp.float32)
    cond = jax.random.normal(ks[10], (B, N_MELS, L), jnp.float32)

    fn = jax.jit(functools.partial(diffwave_block, dilation=dilation))
    res, skip = fn(x, t, cond, params)
    jax.block_until_ready((res, skip))

    res_ref, skip_ref = reference(x, t, cond, params, dilation)
    assert res.shape == (B, C, L) and skip.shape == (B, C, L)

    def rel_err(a, b):
        return float(jnp.linalg.norm((a - b).ravel())
                     / (jnp.linalg.norm(b.ravel()) + 1e-8))

    # bf16 matmul operands with f32 accumulation -> sub-percent relative error.
    assert rel_err(res, res_ref) < 2e-2, rel_err(res, res_ref)
    assert rel_err(skip, skip_ref) < 2e-2, rel_err(skip, skip_ref)

    print("KERNEL_OK")
</pallas_src>

<mosaic_0001>
module attributes {stable_mosaic.version = 11 : i64} {
  func.func @_diffwave_block_kernel(%arg0: i32, %arg1: i32, %arg2: memref<1x64x1024xf32, #tpu.memory_space<vmem>>, %arg3: memref<1x1x64x256xbf16, #tpu.memory_space<vmem>>, %arg4: memref<1x16x1024xbf16, #tpu.memory_space<vmem>>, %arg5: memref<1x64x1xf32, #tpu.memory_space<vmem>>, %arg6: memref<128x208xbf16, #tpu.memory_space<vmem>>, %arg7: memref<128x1xf32, #tpu.memory_space<vmem>>, %arg8: memref<128x64xbf16, #tpu.memory_space<vmem>>, %arg9: memref<128x1xf32, #tpu.memory_space<vmem>>, %arg10: memref<1x64x1024xf32, #tpu.memory_space<vmem>>, %arg11: memref<1x64x1024xf32, #tpu.memory_space<vmem>>) attributes {dimension_semantics = [#tpu.dimension_semantics<parallel>, #tpu.dimension_semantics<parallel>], iteration_bounds = array<i64: 1, 2>, scalar_prefetch = 0 : i64, scratch_operands = 0 : i64, tpu.core_type = #tpu.core_type<tc>, window_params = [{transform_indices = @transform_0, window_bounds = array<i64: 1, 64, 1024>}, {transform_indices = @transform_1, window_bounds = array<i64: 1, 1, 64, 256>}, {transform_indices = @transform_2, window_bounds = array<i64: 1, 16, 1024>}, {transform_indices = @transform_3, window_bounds = array<i64: 1, 64, 1>}, {pipeline_mode = #tpu.pipeline_mode<synchronous>, transform_indices = @transform_4, window_bounds = array<i64: 128, 208>}, {pipeline_mode = #tpu.pipeline_mode<synchronous>, transform_indices = @transform_5, window_bounds = array<i64: 128, 1>}, {pipeline_mode = #tpu.pipeline_mode<synchronous>, transform_indices = @transform_6, window_bounds = array<i64: 128, 64>}, {pipeline_mode = #tpu.pipeline_mode<synchronous>, transform_indices = @transform_7, window_bounds = array<i64: 128, 1>}, {transform_indices = @transform_8, window_bounds = array<i64: 1, 64, 1024>}, {transform_indices = @transform_9, window_bounds = array<i64: 1, 64, 1024>}]} {
    %c1024_i32 = arith.constant 1024 : i32
    %0 = arith.muli %arg1, %c1024_i32 : i32
    %c0 = arith.constant 0 : index
    %c0_0 = arith.constant 0 : index
    %c0_1 = arith.constant 0 : index
    %1 = vector.load %arg2[%c0, %c0_0, %c0_1] : memref<1x64x1024xf32, #tpu.memory_space<vmem>>, vector<1x64x1024xf32>
    %2 = vector.shape_cast %1 : vector<1x64x1024xf32> to vector<64x1024xf32>
    %c0_2 = arith.constant 0 : index
    %c0_3 = arith.constant 0 : index
    %c0_4 = arith.constant 0 : index
    %3 = vector.load %arg5[%c0_2, %c0_3, %c0_4] : memref<1x64x1xf32, #tpu.memory_space<vmem>>, vector<1x64x1xf32>
    %4 = vector.shape_cast %3 : vector<1x64x1xf32> to vector<64x1xf32>
    %5 = tpu.iota {dimensions = array<i32: 1>} : vector<1x1024xi32>
    %6 = vector.broadcast %0 : i32 to vector<1x1024xi32>
    %7 = arith.addi %6, %5 : vector<1x1024xi32>
    %c1920_i32 = arith.constant 1920 : i32
    %8 = vector.broadcast %c1920_i32 : i32 to vector<1x1024xi32>
    %9 = arith.cmpi slt, %7, %8 : vector<1x1024xi32>
    %10 = arith.extui %9 : vector<1x1024xi1> to vector<1x1024xi32>
    %11 = arith.sitofp %10 : vector<1x1024xi32> to vector<1x1024xf32>
    %12 = vector.broadcast %4 : vector<64x1xf32> to vector<64x1024xf32>
    %13 = arith.addf %2, %12 : vector<64x1024xf32>
    %14 = vector.broadcast %11 : vector<1x1024xf32> to vector<64x1024xf32>
    %15 = arith.mulf %13, %14 : vector<64x1024xf32>
    %16 = arith.truncf %15 : vector<64x1024xf32> to vector<64x1024xbf16>
    %c0_5 = arith.constant 0 : index
    %c0_6 = arith.constant 0 : index
    %c0_7 = arith.constant 0 : index
    %c0_8 = arith.constant 0 : index
    %17 = vector.load %arg3[%c0_5, %c0_6, %c0_7, %c0_8] : memref<1x1x64x256xbf16, #tpu.memory_space<vmem>>, vector<1x1x64x256xbf16>
    %18 = vector.shape_cast %17 : vector<1x1x64x256xbf16> to vector<64x256xbf16>
    %19 = arith.extf %18 : vector<64x256xbf16> to vector<64x256xf32>
    %20 = tpu.iota {dimensions = array<i32: 1>} : vector<1x256xi32>
    %c128_i32 = arith.constant 128 : i32
    %21 = vector.broadcast %c128_i32 : i32 to vector<1x256xi32>
    %22 = arith.cmpi slt, %20, %21 : vector<1x256xi32>
    %c128_i32_9 = arith.constant 128 : i32
    %23 = arith.subi %0, %c128_i32_9 : i32
    %24 = vector.broadcast %23 : i32 to vector<1x256xi32>
    %25 = arith.addi %24, %20 : vector<1x256xi32>
    %c1024_i32_10 = arith.constant 1024 : i32
    %26 = arith.addi %0, %c1024_i32_10 : i32
    %c128_i32_11 = arith.constant 128 : i32
    %27 = vector.broadcast %c128_i32_11 : i32 to vector<1x256xi32>
    %28 = arith.subi %20, %27 : vector<1x256xi32>
    %29 = vector.broadcast %26 : i32 to vector<1x256xi32>
    %30 = arith.addi %29, %28 : vector<1x256xi32>
    %31 = arith.select %22, %25, %30 : vector<1x256xi1>, vector<1x256xi32>
    %c0_i32 = arith.constant 0 : i32
    %32 = vector.broadcast %c0_i32 : i32 to vector<1x256xi32>
    %33 = arith.cmpi sge, %31, %32 : vector<1x256xi32>
    %c1920_i32_12 = arith.constant 1920 : i32
    %34 = vector.broadcast %c1920_i32_12 : i32 to vector<1x256xi32>
    %35 = arith.cmpi slt, %31, %34 : vector<1x256xi32>
    %36 = arith.andi %33, %35 : vector<1x256xi1>
    %37 = arith.extui %36 : vector<1x256xi1> to vector<1x256xi32>
    %38 = arith.sitofp %37 : vector<1x256xi32> to vector<1x256xf32>
    %39 = vector.broadcast %4 : vector<64x1xf32> to vector<64x256xf32>
    %40 = arith.addf %19, %39 : vector<64x256xf32>
    %41 = vector.broadcast %38 : vector<1x256xf32> to vector<64x256xf32>
    %42 = arith.mulf %40, %41 : vector<64x256xf32>
    %43 = arith.truncf %42 : vector<64x256xf32> to vector<64x256xbf16>
    %44 = vector.extract_strided_slice %43 {offsets = [0, 0], sizes = [64, 128], strides = [1, 1]} : vector<64x256xbf16> to vector<64x128xbf16>
    %45 = vector.extract_strided_slice %43 {offsets = [0, 128], sizes = [64, 128], strides = [1, 1]} : vector<64x256xbf16> to vector<64x128xbf16>
    %46 = tpu.concatenate %44, %16, %45 in 1 : vector<64x128xbf16>, vector<64x1024xbf16>, vector<64x128xbf16> -> vector<64x1280xbf16>
    %47 = vector.extract_strided_slice %46 {offsets = [0, 124], sizes = [64, 1024], strides = [1, 1]} : vector<64x1280xbf16> to vector<64x1024xbf16>
    %48 = vector.extract_strided_slice %46 {offsets = [0, 132], sizes = [64, 1024], strides = [1, 1]} : vector<64x1280xbf16> to vector<64x1024xbf16>
    %c0_13 = arith.constant 0 : index
    %c0_14 = arith.constant 0 : index
    %c0_15 = arith.constant 0 : index
    %49 = vector.load %arg4[%c0_13, %c0_14, %c0_15] : memref<1x16x1024xbf16, #tpu.memory_space<vmem>>, vector<1x16x1024xbf16>
    %50 = vector.shape_cast %49 : vector<1x16x1024xbf16> to vector<16x1024xbf16>
    %51 = tpu.concatenate %47, %16, %48, %50 in 0 : vector<64x1024xbf16>, vector<64x1024xbf16>, vector<64x1024xbf16>, vector<16x1024xbf16> -> vector<208x1024xbf16>
    %c0_16 = arith.constant 0 : index
    %c0_17 = arith.constant 0 : index
    %52 = vector.load %arg6[%c0_16, %c0_17] : memref<128x208xbf16, #tpu.memory_space<vmem>>, vector<128x208xbf16>
    %cst = arith.constant dense<0.000000e+00> : vector<128x1024xf32>
    %53 = tpu.matmul %52, %51, %cst {dimension_numbers = #tpu.dot_dimension_numbers<[1], [0], [0], [1], [0, 0, 1, 1], [], []>} : vector<128x208xbf16>, vector<208x1024xbf16>, vector<128x1024xf32> -> vector<128x1024xf32>
    %c0_18 = arith.constant 0 : index
    %c0_19 = arith.constant 0 : index
    %54 = vector.load %arg7[%c0_18, %c0_19] : memref<128x1xf32, #tpu.memory_space<vmem>>, vector<128x1xf32>
    %55 = vector.broadcast %54 : vector<128x1xf32> to vector<128x1024xf32>
    %56 = arith.addf %53, %55 : vector<128x1024xf32>
    %57 = vector.extract_strided_slice %56 {offsets = [0, 0], sizes = [64, 1024], strides = [1, 1]} : vector<128x1024xf32> to vector<64x1024xf32>
    %58 = math.tanh %57 : vector<64x1024xf32>
    %59 = vector.extract_strided_slice %56 {offsets = [64, 0], sizes = [64, 1024], strides = [1, 1]} : vector<128x1024xf32> to vector<64x1024xf32>
    %60 = arith.negf %59 : vector<64x1024xf32>
    %61 = math.exp %60 : vector<64x1024xf32>
    %cst_20 = arith.constant 1.000000e+00 : f32
    %62 = vector.broadcast %cst_20 : f32 to vector<64x1024xf32>
    %63 = arith.addf %62, %61 : vector<64x1024xf32>
    %64 = arith.divf %62, %63 : vector<64x1024xf32>
    %65 = arith.mulf %58, %64 : vector<64x1024xf32>
    %c0_21 = arith.constant 0 : index
    %c0_22 = arith.constant 0 : index
    %66 = vector.load %arg8[%c0_21, %c0_22] : memref<128x64xbf16, #tpu.memory_space<vmem>>, vector<128x64xbf16>
    %67 = arith.truncf %65 : vector<64x1024xf32> to vector<64x1024xbf16>
    %cst_23 = arith.constant dense<0.000000e+00> : vector<128x1024xf32>
    %68 = tpu.matmul %66, %67, %cst_23 {dimension_numbers = #tpu.dot_dimension_numbers<[1], [0], [0], [1], [0, 0, 1, 1], [], []>} : vector<128x64xbf16>, vector<64x1024xbf16>, vector<128x1024xf32> -> vector<128x1024xf32>
    %c0_24 = arith.constant 0 : index
    %c0_25 = arith.constant 0 : index
    %69 = vector.load %arg9[%c0_24, %c0_25] : memref<128x1xf32, #tpu.memory_space<vmem>>, vector<128x1xf32>
    %70 = vector.broadcast %69 : vector<128x1xf32> to vector<128x1024xf32>
    %71 = arith.addf %68, %70 : vector<128x1024xf32>
    %72 = vector.extract_strided_slice %71 {offsets = [0, 0], sizes = [64, 1024], strides = [1, 1]} : vector<128x1024xf32> to vector<64x1024xf32>
    %73 = arith.addf %72, %2 : vector<64x1024xf32>
    %cst_26 = arith.constant 0.707106769 : f32
    %74 = vector.broadcast %cst_26 : f32 to vector<64x1024xf32>
    %75 = arith.mulf %73, %74 : vector<64x1024xf32>
    %c0_27 = arith.constant 0 : index
    %c0_28 = arith.constant 0 : index
    %c0_29 = arith.constant 0 : index
    %76 = vector.load %arg10[%c0_27, %c0_28, %c0_29] : memref<1x64x1024xf32, #tpu.memory_space<vmem>>, vector<1x64x1024xf32>
    %77 = vector.shape_cast %76 : vector<1x64x1024xf32> to vector<64x1024xf32>
    %78 = vector.shape_cast %75 : vector<64x1024xf32> to vector<1x64x1024xf32>
    tpu.vector_store %arg10[%c0_27, %c0_28, %c0_29], %78 {strides = array<i32>} : memref<1x64x1024xf32, #tpu.memory_space<vmem>>, vector<1x64x1024xf32>,
    %79 = vector.extract_strided_slice %71 {offsets = [64, 0], sizes = [64, 1024], strides = [1, 1]} : vector<128x1024xf32> to vector<64x1024xf32>
    %c0_30 = arith.constant 0 : index
    %c0_31 = arith.constant 0 : index
    %c0_32 = arith.constant 0 : index
    %80 = vector.load %arg11[%c0_30, %c0_31, %c0_32] : memref<1x64x1024xf32, #tpu.memory_space<vmem>>, vector<1x64x1024xf32>
    %81 = vector.shape_cast %80 : vector<1x64x1024xf32> to vector<64x1024xf32>
    %82 = vector.shape_cast %79 : vector<64x1024xf32> to vector<1x64x1024xf32>
    tpu.vector_store %arg11[%c0_30, %c0_31, %c0_32], %82 {strides = array<i32>} : memref<1x64x1024xf32, #tpu.memory_space<vmem>>, vector<1x64x1024xf32>,
    return
  }
  func.func @transform_0(%arg0: i32, %arg1: i32) -> (i32, i32, i32) {
    %c0_i32 = arith.constant 0 : i32
    %c0_i32_0 = arith.constant 0 : i32
    return %arg0, %c0_i32, %arg1 : i32, i32, i32
  }
  func.func @transform_1(%arg0: i32, %arg1: i32) -> (i32, i32, i32, i32) {
    %c0_i32 = arith.constant 0 : i32
    %c0_i32_0 = arith.constant 0 : i32
    %c0_i32_1 = arith.constant 0 : i32
    return %arg0, %arg1, %c0_i32, %c0_i32_0 : i32, i32, i32, i32
  }
  func.func @transform_2(%arg0: i32, %arg1: i32) -> (i32, i32, i32) {
    %c0_i32 = arith.constant 0 : i32
    %c0_i32_0 = arith.constant 0 : i32
    return %arg0, %c0_i32, %arg1 : i32, i32, i32
  }
  func.func @transform_3(%arg0: i32, %arg1: i32) -> (i32, i32, i32) {
    %c0_i32 = arith.constant 0 : i32
    %c0_i32_0 = arith.constant 0 : i32
    %c0_i32_1 = arith.constant 0 : i32
    return %arg0, %c0_i32, %c0_i32_0 : i32, i32, i32
  }
  func.func @transform_4(%arg0: i32, %arg1: i32) -> (i32, i32) {
    %c0_i32 = arith.constant 0 : i32
    %c0_i32_0 = arith.constant 0 : i32
    %c0_i32_1 = arith.constant 0 : i32
    return %c0_i32, %c0_i32_0 : i32, i32
  }
  func.func @transform_5(%arg0: i32, %arg1: i32) -> (i32, i32) {
    %c0_i32 = arith.constant 0 : i32
    %c0_i32_0 = arith.constant 0 : i32
    %c0_i32_1 = arith.constant 0 : i32
    return %c0_i32, %c0_i32_0 : i32, i32
  }
  func.func @transform_6(%arg0: i32, %arg1: i32) -> (i32, i32) {
    %c0_i32 = arith.constant 0 : i32
    %c0_i32_0 = arith.constant 0 : i32
    %c0_i32_1 = arith.constant 0 : i32
    return %c0_i32, %c0_i32_0 : i32, i32
  }
  func.func @transform_7(%arg0: i32, %arg1: i32) -> (i32, i32) {
    %c0_i32 = arith.constant 0 : i32
    %c0_i32_0 = arith.constant 0 : i32
    %c0_i32_1 = arith.constant 0 : i32
    return %c0_i32, %c0_i32_0 : i32, i32
  }
  func.func @transform_8(%arg0: i32, %arg1: i32) -> (i32, i32, i32) {
    %c0_i32 = arith.constant 0 : i32
    %c0_i32_0 = arith.constant 0 : i32
    return %arg0, %c0_i32, %arg1 : i32, i32, i32
  }
  func.func @transform_9(%arg0: i32, %arg1: i32) -> (i32, i32, i32) {
    %c0_i32 = arith.constant 0 : i32
    %c0_i32_0 = arith.constant 0 : i32
    return %arg0, %c0_i32, %arg1 : i32, i32, i32
  }
}

</mosaic_0001>

<llo_original>
// kernel: diffwave_block.1
$region0: #{diffwave_block.1}
  #allocation0 [shape = 'u32[]', space=smem, size = 0x4, offset = 0x4, fixed_abs, tag = 'smem constant byte address 0x4 - core index']
  #allocation1 [shape = 'u32[144,128]{1,0:T(1,128)}', space=vmem, size = 0x12000, scoped, tag = 'internal scratch']
  %s0 = inlined_call_operand.vmem [shape: f32[1,64,2048], index: 0, kind: input, shape index: {}]
  %s1 = inlined_call_operand.vmem [shape: bf16[1,2,64,256], index: 1, kind: input, shape index: {}]
  %s2 = inlined_call_operand.vmem [shape: bf16[1,16,2048], index: 2, kind: input, shape index: {}]
  %s3 = inlined_call_operand.vmem [shape: f32[1,64,1], index: 3, kind: input, shape index: {}]
  %s4 = inlined_call_operand.vmem [shape: bf16[128,208], index: 4, kind: input, shape index: {}]
  %s5 = inlined_call_operand.vmem [shape: f32[128,1], index: 5, kind: input, shape index: {}]
  %s6 = inlined_call_operand.vmem [shape: bf16[128,64], index: 6, kind: input, shape index: {}]
  %s7 = inlined_call_operand.vmem [shape: f32[128,1], index: 7, kind: input, shape index: {}]
  %s8 = inlined_call_operand.vmem [shape: f32[1,64,2048], index: 8, kind: output, shape index: {0}]
  %s9 = inlined_call_operand.vmem [shape: f32[1,64,2048], index: 9, kind: output, shape index: {1}]
  %10 = xla_tuple %s8, %s9
  %s11 = sld [smem:[#allocation0]]
  $region157: #{diffwave_block.1} parent=0
    _
  %s13 = ssub.s32 1, %s11
  %s14 = scalar_select 0, %s13, %s11
  $region1: #{diffwave_block.1} parent=0
    #allocation2 [shape = 'u8[524288]{0}', space=vmem, size = 0x80000, scoped, tag = 'input window, operand 0']
    #allocation3 [shape = 'u8[65536]{0}', space=vmem, size = 0x10000, scoped, tag = 'input window, operand 2']
    #allocation4 [shape = 'u8[524288]{0}', space=vmem, size = 0x80000, scoped, tag = 'output window, operand 0']
    #allocation5 [shape = 'u8[524288]{0}', space=vmem, size = 0x80000, scoped, tag = 'output window, operand 1']
    loop: start=0, step=1, limit=4
    $region2: #{diffwave_block.1} parent=1 // loop_pre_header
      _
    $region3: #{diffwave_block.1} parent=1 // loop_header
      %s16 = sphi 0, %s20
      %p17 = scmp.ge.s32.totalorder %s16, 4
      %s23 = sphi 0, %s35
      %s24 = sphi 0, %s31
      %s25 = sphi 0, %s23
      %s26 = sphi 0, %s24
      %s27 = sphi 0, %s25
      %s28 = sphi 0, %s26
      %s40 = sphi 0, %s42
      %s43 = sphi 0, %s40
      %s44 = sphi 0, %s43
      %s60 = sphi 0, %s44
      %s68 = sphi 0, %s70
      %s71 = sphi 0, %s68
      %s72 = sphi 0, %s71
      %s88 = sphi 0, %s72
      %s96 = sphi 0, %s98
      %s99 = sphi 0, %s96
      %s100 = sphi 0, %s99
      %s116 = sphi 0, %s100
      %s122 = sphi 0, %s124
      %s125 = sphi 0, %s122
      %s126 = sphi 0, %s125
      %s142 = sphi 0, %s126
      %s146 = sphi 0, %s146
      %s148 = sphi 0, %s146
      %s149 = sphi 0, %s148
      %s163 = sphi 0, %s149
      %s167 = sphi 0, %s167
      %s169 = sphi 0, %s167
      %s170 = sphi 0, %s169
      %s184 = sphi 0, %s170
      %s188 = sphi 0, %s188
      %s190 = sphi 0, %s188
      %s191 = sphi 0, %s190
      %s205 = sphi 0, %s191
      %s209 = sphi 0, %s209
      %s211 = sphi 0, %s209
      %s212 = sphi 0, %s211
      %s226 = sphi 0, %s212
      %s234 = sphi 0, %s236
      %s237 = sphi 0, %s234
      %s238 = sphi 0, %s237
      %s254 = sphi 0, %s238
      %s262 = sphi 0, %s264
      %s265 = sphi 0, %s262
      %s266 = sphi 0, %s265
      %s282 = sphi 0, %s266
    $region4: #{diffwave_block.1} parent=1 // loop_header_branch
      %19 = sbr.rel (%p17) target = $region8
    $region5: #{diffwave_block.1} parent=1 // loop_body
      %s21 = ssub.s32 %s16, 1
      %s22 = ssub.s32 %s16, 2
      %s29 = sadd.s32 1, %s24
      %p30 = scmp.ge.s32.totalorder %s29, 2
      %s31 = scalar_select %p30, 0, %s29
      %s32 = sadd.s32 1, %s23
      %s33 = scalar_select %p30, %s32, %s23
      %p34 = scmp.ge.s32.totalorder %s33, 1
      %s35 = scalar_select %p34, 0, %s33
      %s36 = ssub.s32 %s23, %s35
      %s37 = ssub.s32 %s24, %s31
      %s38 = sor.u32 %s36, %s37
      %p39 = scmp.eq.s32.totalorder %s38, 0
      %s41 = sadd.s32 %s40, 1
      %s42 = scalar_select %p39, %s40, %s41
      %p45 = pneg %p39
      %p46 = scmp.eq.s32.totalorder %s16, 1
      %p47 = por %p45, %p46
      %p48 = scmp.ne.s32.totalorder %s40, %s43
      %p49 = scmp.eq.s32.totalorder %s16, 0
      %p50 = por %p48, %p49
      %p51 = scmp.ne.s32.totalorder %s40, %s43
      %p52 = scmp.eq.s32.totalorder %s21, 1
      %p53 = por %p51, %p52
      %p54 = scmp.ne.s32.totalorder %s43, %s44
      %p55 = scmp.eq.s32.totalorder %s21, 0
      %p56 = por %p54, %p55
      %p57 = scmp.ne.s32.totalorder %s43, %s44
      %p58 = scmp.eq.s32.totalorder %s22, 1
      %p59 = por %p57, %p58
      %p61 = scmp.ne.s32.totalorder %s44, %s60
      %p62 = scmp.eq.s32.totalorder %s22, 0
      %p63 = por %p61, %p62
      %s64 = ssub.s32 %s23, %s35
      %s65 = ssub.s32 %s24, %s31
      %s66 = sor.u32 %s64, %s65
      %p67 = scmp.eq.s32.totalorder %s66, 0
      %s69 = sadd.s32 %s68, 1
      %s70 = scalar_select %p67, %s68, %s69
      %p73 = pneg %p67
      %p74 = scmp.eq.s32.totalorder %s16, 1
      %p75 = por %p73, %p74
      %p76 = scmp.ne.s32.totalorder %s68, %s71
      %p77 = scmp.eq.s32.totalorder %s16, 0
      %p78 = por %p76, %p77
      %p79 = scmp.ne.s32.totalorder %s68, %s71
      %p80 = scmp.eq.s32.totalorder %s21, 1
      %p81 = por %p79, %p80
      %p82 = scmp.ne.s32.totalorder %s71, %s72
      %p83 = scmp.eq.s32.totalorder %s21, 0
      %p84 = por %p82, %p83
      %p85 = scmp.ne.s32.totalorder %s71, %s72
      %p86 = scmp.eq.s32.totalorder %s22, 1
      %p87 = por %p85, %p86
      %p89 = scmp.ne.s32.totalorder %s72, %s88
      %p90 = scmp.eq.s32.totalorder %s22, 0
      %p91 = por %p89, %p90
      %s92 = ssub.s32 %s23, %s35
      %s93 = ssub.s32 %s24, %s31
      %s94 = sor.u32 %s92, %s93
      %p95 = scmp.eq.s32.totalorder %s94, 0
      %s97 = sadd.s32 %s96, 1
      %s98 = scalar_select %p95, %s96, %s97
      %p101 = pneg %p95
      %p102 = scmp.eq.s32.totalorder %s16, 1
      %p103 = por %p101, %p102
      %p104 = scmp.ne.s32.totalorder %s96, %s99
      %p105 = scmp.eq.s32.totalorder %s16, 0
      %p106 = por %p104, %p105
      %p107 = scmp.ne.s32.totalorder %s96, %s99
      %p108 = scmp.eq.s32.totalorder %s21, 1
      %p109 = por %p107, %p108
      %p110 = scmp.ne.s32.totalorder %s99, %s100
      %p111 = scmp.eq.s32.totalorder %s21, 0
      %p112 = por %p110, %p111
      %p113 = scmp.ne.s32.totalorder %s99, %s100
      %p114 = scmp.eq.s32.totalorder %s22, 1
      %p115 = por %p113, %p114
      %p117 = scmp.ne.s32.totalorder %s100, %s116
      %p118 = scmp.eq.s32.totalorder %s22, 0
      %p119 = por %p117, %p118
      %s120 = ssub.s32 %s23, %s35
      %p121 = scmp.eq.s32.totalorder %s120, 0
      %s123 = sadd.s32 %s122, 1
      %s124 = scalar_select %p121, %s122, %s123
      %p127 = pneg %p121
      %p128 = scmp.eq.s32.totalorder %s16, 1
      %p129 = por %p127, %p128
      %p130 = scmp.ne.s32.totalorder %s122, %s125
      %p131 = scmp.eq.s32.totalorder %s16, 0
      %p132 = por %p130, %p131
      %p133 = scmp.ne.s32.totalorder %s122, %s125
      %p134 = scmp.eq.s32.totalorder %s21, 1
      %p135 = por %p133, %p134
      %p136 = scmp.ne.s32.totalorder %s125, %s126
      %p137 = scmp.eq.s32.totalorder %s21, 0
      %p138 = por %p136, %p137
      %p139 = scmp.ne.s32.totalorder %s125, %s126
      %p140 = scmp.eq.s32.totalorder %s22, 1
      %p141 = por %p139, %p140
      %p143 = scmp.ne.s32.totalorder %s126, %s142
      %p144 = scmp.eq.s32.totalorder %s22, 0
      %p145 = por %p143, %p144
      %s147 = sadd.s32 %s146, 1
      %p150 = scmp.eq.s32.totalorder %s16, 1
      %p151 = scmp.ne.s32.totalorder %s146, %s148
      %p152 = scmp.eq.s32.totalorder %s16, 0
      %p153 = por %p151, %p152
      %p154 = scmp.ne.s32.totalorder %s146, %s148
      %p155 = scmp.eq.s32.totalorder %s21, 1
      %p156 = por %p154, %p155
      %p157 = scmp.ne.s32.totalorder %s148, %s149
      %p158 = scmp.eq.s32.totalorder %s21, 0
      %p159 = por %p157, %p158
      %p160 = scmp.ne.s32.totalorder %s148, %s149
      %p161 = scmp.eq.s32.totalorder %s22, 1
      %p162 = por %p160, %p161
      %p164 = scmp.ne.s32.totalorder %s149, %s163
      %p165 = scmp.eq.s32.totalorder %s22, 0
      %p166 = por %p164, %p165
      %s168 = sadd.s32 %s167, 1
      %p171 = scmp.eq.s32.totalorder %s16, 1
      %p172 = scmp.ne.s32.totalorder %s167, %s169
      %p173 = scmp.eq.s32.totalorder %s16, 0
      %p174 = por %p172, %p173
      %p175 = scmp.ne.s32.totalorder %s167, %s169
      %p176 = scmp.eq.s32.totalorder %s21, 1
      %p177 = por %p175, %p176
      %p178 = scmp.ne.s32.totalorder %s169, %s170
      %p179 = scmp.eq.s32.totalorder %s21, 0
      %p180 = por %p178, %p179
      %p181 = scmp.ne.s32.totalorder %s169, %s170
      %p182 = scmp.eq.s32.totalorder %s22, 1
      %p183 = por %p181, %p182
      %p185 = scmp.ne.s32.totalorder %s170, %s184
      %p186 = scmp.eq.s32.totalorder %s22, 0
      %p187 = por %p185, %p186
      %s189 = sadd.s32 %s188, 1
      %p192 = scmp.eq.s32.totalorder %s16, 1
      %p193 = scmp.ne.s32.totalorder %s188, %s190
      %p194 = scmp.eq.s32.totalorder %s16, 0
      %p195 = por %p193, %p194
      %p196 = scmp.ne.s32.totalorder %s188, %s190
      %p197 = scmp.eq.s32.totalorder %s21, 1
      %p198 = por %p196, %p197
      %p199 = scmp.ne.s32.totalorder %s190, %s191
      %p200 = scmp.eq.s32.totalorder %s21, 0
      %p201 = por %p199, %p200
      %p202 = scmp.ne.s32.totalorder %s190, %s191
      %p203 = scmp.eq.s32.totalorder %s22, 1
      %p204 = por %p202, %p203
      %p206 = scmp.ne.s32.totalorder %s191, %s205
      %p207 = scmp.eq.s32.totalorder %s22, 0
      %p208 = por %p206, %p207
      %s210 = sadd.s32 %s209, 1
      %p213 = scmp.eq.s32.totalorder %s16, 1
      %p214 = scmp.ne.s32.totalorder %s209, %s211
      %p215 = scmp.eq.s32.totalorder %s16, 0
      %p216 = por %p214, %p215
      %p217 = scmp.ne.s32.totalorder %s209, %s211
      %p218 = scmp.eq.s32.totalorder %s21, 1
      %p219 = por %p217, %p218
      %p220 = scmp.ne.s32.totalorder %s211, %s212
      %p221 = scmp.eq.s32.totalorder %s21, 0
      %p222 = por %p220, %p221
      %p223 = scmp.ne.s32.totalorder %s211, %s212
      %p224 = scmp.eq.s32.totalorder %s22, 1
      %p225 = por %p223, %p224
      %p227 = scmp.ne.s32.totalorder %s212, %s226
      %p228 = scmp.eq.s32.totalorder %s22, 0
      %p229 = por %p227, %p228
      %s230 = ssub.s32 %s23, %s35
      %s231 = ssub.s32 %s24, %s31
      %s232 = sor.u32 %s230, %s231
      %p233 = scmp.eq.s32.totalorder %s232, 0
      %s235 = sadd.s32 %s234, 1
      %s236 = scalar_select %p233, %s234, %s235
      %p239 = pneg %p233
      %p240 = scmp.eq.s32.totalorder %s16, 1
      %p241 = por %p239, %p240
      %p242 = scmp.ne.s32.totalorder %s234, %s237
      %p243 = scmp.eq.s32.totalorder %s16, 0
      %p244 = por %p242, %p243
      %p245 = scmp.ne.s32.totalorder %s234, %s237
      %p246 = scmp.eq.s32.totalorder %s21, 1
      %p247 = por %p245, %p246
      %p248 = scmp.ne.s32.totalorder %s237, %s238
      %p249 = scmp.eq.s32.totalorder %s21, 0
      %p250 = por %p248, %p249
      %p251 = scmp.ne.s32.totalorder %s237, %s238
      %p252 = scmp.eq.s32.totalorder %s22, 1
      %p253 = por %p251, %p252
      %p255 = scmp.ne.s32.totalorder %s238, %s254
      %p256 = scmp.eq.s32.totalorder %s22, 0
      %p257 = por %p255, %p256
      %s258 = ssub.s32 %s23, %s35
      %s259 = ssub.s32 %s24, %s31
      %s260 = sor.u32 %s258, %s259
      %p261 = scmp.eq.s32.totalorder %s260, 0
      %s263 = sadd.s32 %s262, 1
      %s264 = scalar_select %p261, %s262, %s263
      %p267 = pneg %p261
      %p268 = scmp.eq.s32.totalorder %s16, 1
      %p269 = por %p267, %p268
      %p270 = scmp.ne.s32.totalorder %s262, %s265
      %p271 = scmp.eq.s32.totalorder %s16, 0
      %p272 = por %p270, %p271
      %p273 = scmp.ne.s32.totalorder %s262, %s265
      %p274 = scmp.eq.s32.totalorder %s21, 1
      %p275 = por %p273, %p274
      %p276 = scmp.ne.s32.totalorder %s265, %s266
      %p277 = scmp.eq.s32.totalorder %s21, 0
      %p278 = por %p276, %p277
      %p279 = scmp.ne.s32.totalorder %s265, %s266
      %p280 = scmp.eq.s32.totalorder %s22, 1
      %p281 = por %p279, %p280
      %p283 = scmp.ne.s32.totalorder %s266, %s282
      %p284 = scmp.eq.s32.totalorder %s22, 0
      %p285 = por %p283, %p284
      %p286 = scmp.le.s32.totalorder 1, %s16
      %p287 = scmp.lt.s32.totalorder %s16, 3
      %p288 = pnand %p286, %p287
      %p289 = pneg %p288
      // Predicated region
      $region9: #{diffwave_block.1} parent=5 // pred_check
        _
      $region10: #{diffwave_block.1} parent=5 // pred_check_branch
        %291 = sbr.rel (%p288) target = $region12
      $region11: #{diffwave_block.1} parent=5 // pred_region
        %s292 = ssub.s32 %s16, 1
        // Predicated region
        $region13: #{diffwave_block.1} parent=11 // pred_check
          %p293 = pneg %p138
        $region14: #{diffwave_block.1} parent=11 // pred_check_branch
          %295 = sbr.rel (%p293) target = $region16
        $region15: #{diffwave_block.1} parent=11 // pred_region
          %p296 = scmp.lt.s32.totalorder %s25, 0
          %s297 = scalar_select %p296, %s25, 0
          %s298 = smul.addr %s297, 8
          %s299 = smul.addr %s298, 8
          %s300 = scalar_lea.vmem %s3, %s299
        $region16: #{diffwave_block.1} parent=11 // pred_fallthru
          _
        // Predicated region
        $region17: #{diffwave_block.1} parent=11 // pred_check
          %p301 = pneg %p159
        $region18: #{diffwave_block.1} parent=11 // pred_check_branch
          %303 = sbr.rel (%p301) target = $region20
        $region19: #{diffwave_block.1} parent=11 // pred_region
          _
        $region20: #{diffwave_block.1} parent=11 // pred_fallthru
          _
        // Predicated region
        $region21: #{diffwave_block.1} parent=11 // pred_check
          %p304 = pneg %p180
        $region22: #{diffwave_block.1} parent=11 // pred_check_branch
          %306 = sbr.rel (%p304) target = $region24
        $region23: #{diffwave_block.1} parent=11 // pred_region
          _
        $region24: #{diffwave_block.1} parent=11 // pred_fallthru
          _
        // Predicated region
        $region25: #{diffwave_block.1} parent=11 // pred_check
          %p307 = pneg %p201
        $region26: #{diffwave_block.1} parent=11 // pred_check_branch
          %309 = sbr.rel (%p307) target = $region28
        $region27: #{diffwave_block.1} parent=11 // pred_region
          _
        $region28: #{diffwave_block.1} parent=11 // pred_fallthru
          _
        // Predicated region
        $region29: #{diffwave_block.1} parent=11 // pred_check
          %p310 = pneg %p222
        $region30: #{diffwave_block.1} parent=11 // pred_check_branch
          %312 = sbr.rel (%p310) target = $region32
        $region31: #{diffwave_block.1} parent=11 // pred_region
          _
        $region32: #{diffwave_block.1} parent=11 // pred_fallthru
          _
      $region12: #{diffwave_block.1} parent=5 // pred_fallthru
        _
      %p313 = scmp.lt.s32.totalorder %s16, 2
      // Predicated region
      $region33: #{diffwave_block.1} parent=5 // pred_check
        %p314 = pneg %p313
      $region34: #{diffwave_block.1} parent=5 // pred_check_branch
        %316 = sbr.rel (%p314) target = $region36
      $region35: #{diffwave_block.1} parent=5 // pred_region
        // Predicated region
        $region37: #{diffwave_block.1} parent=35 // pred_check
          %p317 = pneg %p50
        $region38: #{diffwave_block.1} parent=35 // pred_check_branch
          %319 = sbr.rel (%p317) target = $region40
        $region39: #{diffwave_block.1} parent=35 // pred_region
          %s320 = sand.u32 %s40, 1
          %s321 = sand.u32 %s40, 1
          %s322 = smul.addr %s321, 512
          %s323 = scalar_lea.vmem [#allocation2], %s322
          %s324 = smul.u32 8, %s24
          %s325 = smul.addr %s23, 128
          %s326 = sadd.s32 %s324, %s325
          %s327 = smul.addr %s326, 8
          %s328 = scalar_lea.vmem %s0, %s327
          // Predicated region
          $region41: #{diffwave_block.1} parent=39 // pred_check
            _
          $region42: #{diffwave_block.1} parent=39 // pred_check_branch
            %330 = sbr.rel (0) target = $region44
          $region43: #{diffwave_block.1} parent=39 // pred_region
            // Predicated region
            $region45: #{diffwave_block.1} parent=43 // pred_check
              _
            $region46: #{diffwave_block.1} parent=43 // pred_check_branch
              %332 = sbr.rel (0) target = $region48
            $region47: #{diffwave_block.1} parent=43 // pred_region
              loop: start=0, step=1, limit=1
              $region49: #{diffwave_block.1} parent=47 // loop_pre_header
                _
              $region50: #{diffwave_block.1} parent=47 // loop_header
                %s334 = sphi 0, %s338
                %p335 = scmp.ge.s32.totalorder %s334, 1
                %s339 = sphi %s328, %s328
                %s340 = sphi %s323, %s323
              $region51: #{diffwave_block.1} parent=47 // loop_header_branch
                %337 = sbr.rel (%p335) target = $region55
              $region52: #{diffwave_block.1} parent=47 // loop_body
                %v341 = vld [vmem:[%s339] sm:$0xff]
                %342 = vst [vmem:[%s340] sm:$0xff] %v341
                %v343 = vld [vmem:[%s339 + $0x8] sm:$0xff]
                %344 = vst [vmem:[%s340 + $0x8] sm:$0xff] %v343
                %v345 = vld [vmem:[%s339 + $0x10] sm:$0xff]
                %346 = vst [vmem:[%s340 + $0x10] sm:$0xff] %v345
                %v347 = vld [vmem:[%s339 + $0x18] sm:$0xff]
                %348 = vst [vmem:[%s340 + $0x18] sm:$0xff] %v347
                %v349 = vld [vmem:[%s339 + $0x20] sm:$0xff]
                %350 = vst [vmem:[%s340 + $0x20] sm:$0xff] %v349
                %v351 = vld [vmem:[%s339 + $0x28] sm:$0xff]
                %352 = vst [vmem:[%s340 + $0x28] sm:$0xff] %v351
                %v353 = vld [vmem:[%s339 + $0x30] sm:$0xff]
                %354 = vst [vmem:[%s340 + $0x30] sm:$0xff] %v353
                %v355 = vld [vmem:[%s339 + $0x38] sm:$0xff]
                %356 = vst [vmem:[%s340 + $0x38] sm:$0xff] %v355
                %v357 = vld [vmem:[%s339 + $0x80] sm:$0xff]
                %358 = vst [vmem:[%s340 + $0x40] sm:$0xff] %v357
                %v359 = vld [vmem:[%s339 + $0x88] sm:$0xff]
                %360 = vst [vmem:[%s340 + $0x48] sm:$0xff] %v359
                %v361 = vld [vmem:[%s339 + $0x90] sm:$0xff]
                %362 = vst [vmem:[%s340 + $0x50] sm:$0xff] %v361
                %v363 = vld [vmem:[%s339 + $0x98] sm:$0xff]
                %364 = vst [vmem:[%s340 + $0x58] sm:$0xff] %v363
                %v365 = vld [vmem:[%s339 + $0xa0] sm:$0xff]
                %366 = vst [vmem:[%s340 + $0x60] sm:$0xff] %v365
                %v367 = vld [vmem:[%s339 + $0xa8] sm:$0xff]
                %368 = vst [vmem:[%s340 + $0x68] sm:$0xff] %v367
                %v369 = vld [vmem:[%s339 + $0xb0] sm:$0xff]
                %370 = vst [vmem:[%s340 + $0x70] sm:$0xff] %v369
                %v371 = vld [vmem:[%s339 + $0xb8] sm:$0xff]
                %372 = vst [vmem:[%s340 + $0x78] sm:$0xff] %v371
                %v373 = vld [vmem:[%s339 + $0x100] sm:$0xff]
                %374 = vst [vmem:[%s340 + $0x80] sm:$0xff] %v373
                %v375 = vld [vmem:[%s339 + $0x108] sm:$0xff]
                %376 = vst [vmem:[%s340 + $0x88] sm:$0xff] %v375
                %v377 = vld [vmem:[%s339 + $0x110] sm:$0xff]
                %378 = vst [vmem:[%s340 + $0x90] sm:$0xff] %v377
                %v379 = vld [vmem:[%s339 + $0x118] sm:$0xff]
                %380 = vst [vmem:[%s340 + $0x98] sm:$0xff] %v379
                %v381 = vld [vmem:[%s339 + $0x120] sm:$0xff]
                %382 = vst [vmem:[%s340 + $0xa0] sm:$0xff] %v381
                %v383 = vld [vmem:[%s339 + $0x128] sm:$0xff]
                %384 = vst [vmem:[%s340 + $0xa8] sm:$0xff] %v383
                %v385 = vld [vmem:[%s339 + $0x130] sm:$0xff]
                %386 = vst [vmem:[%s340 + $0xb0] sm:$0xff] %v385
                %v387 = vld [vmem:[%s339 + $0x138] sm:$0xff]
                %388 = vst [vmem:[%s340 + $0xb8] sm:$0xff] %v387
                %v389 = vld [vmem:[%s339 + $0x180] sm:$0xff]
                %390 = vst [vmem:[%s340 + $0xc0] sm:$0xff] %v389
                %v391 = vld [vmem:[%s339 + $0x188] sm:$0xff]
                %392 = vst [vmem:[%s340 + $0xc8] sm:$0xff] %v391
                %v393 = vld [vmem:[%s339 + $0x190] sm:$0xff]
                %394 = vst [vmem:[%s340 + $0xd0] sm:$0xff] %v393
                %v395 = vld [vmem:[%s339 + $0x198] sm:$0xff]
                %396 = vst [vmem:[%s340 + $0xd8] sm:$0xff] %v395
                %v397 = vld [vmem:[%s339 + $0x1a0] sm:$0xff]
                %398 = vst [vmem:[%s340 + $0xe0] sm:$0xff] %v397
                %v399 = vld [vmem:[%s339 + $0x1a8] sm:$0xff]
                %400 = vst [vmem:[%s340 + $0xe8] sm:$0xff] %v399
                %v401 = vld [vmem:[%s339 + $0x1b0] sm:$0xff]
                %402 = vst [vmem:[%s340 + $0xf0] sm:$0xff] %v401
                %v403 = vld [vmem:[%s339 + $0x1b8] sm:$0xff]
                %404 = vst [vmem:[%s340 + $0xf8] sm:$0xff] %v403
                %v405 = vld [vmem:[%s339 + $0x200] sm:$0xff]
                %406 = vst [vmem:[%s340 + $0x100] sm:$0xff] %v405
                %v407 = vld [vmem:[%s339 + $0x208] sm:$0xff]
                %408 = vst [vmem:[%s340 + $0x108] sm:$0xff] %v407
                %v409 = vld [vmem:[%s339 + $0x210] sm:$0xff]
                %410 = vst [vmem:[%s340 + $0x110] sm:$0xff] %v409
                %v411 = vld [vmem:[%s339 + $0x218] sm:$0xff]
                %412 = vst [vmem:[%s340 + $0x118] sm:$0xff] %v411
                %v413 = vld [vmem:[%s339 + $0x220] sm:$0xff]
                %414 = vst [vmem:[%s340 + $0x120] sm:$0xff] %v413
                %v415 = vld [vmem:[%s339 + $0x228] sm:$0xff]
                %416 = vst [vmem:[%s340 + $0x128] sm:$0xff] %v415
                %v417 = vld [vmem:[%s339 + $0x230] sm:$0xff]
                %418 = vst [vmem:[%s340 + $0x130] sm:$0xff] %v417
                %v419 = vld [vmem:[%s339 + $0x238] sm:$0xff]
                %420 = vst [vmem:[%s340 + $0x138] sm:$0xff] %v419
                %v421 = vld [vmem:[%s339 + $0x280] sm:$0xff]
                %422 = vst [vmem:[%s340 + $0x140] sm:$0xff] %v421
                %v423 = vld [vmem:[%s339 + $0x288] sm:$0xff]
                %424 = vst [vmem:[%s340 + $0x148] sm:$0xff] %v423
                %v425 = vld [vmem:[%s339 + $0x290] sm:$0xff]
                %426 = vst [vmem:[%s340 + $0x150] sm:$0xff] %v425
                %v427 = vld [vmem:[%s339 + $0x298] sm:$0xff]
                %428 = vst [vmem:[%s340 + $0x158] sm:$0xff] %v427
                %v429 = vld [vmem:[%s339 + $0x2a0] sm:$0xff]
                %430 = vst [vmem:[%s340 + $0x160] sm:$0xff] %v429
                %v431 = vld [vmem:[%s339 + $0x2a8] sm:$0xff]
                %432 = vst [vmem:[%s340 + $0x168] sm:$0xff] %v431
                %v433 = vld [vmem:[%s339 + $0x2b0] sm:$0xff]
                %434 = vst [vmem:[%s340 + $0x170] sm:$0xff] %v433
                %v435 = vld [vmem:[%s339 + $0x2b8] sm:$0xff]
                %436 = vst [vmem:[%s340 + $0x178] sm:$0xff] %v435
                %v437 = vld [vmem:[%s339 + $0x300] sm:$0xff]
                %438 = vst [vmem:[%s340 + $0x180] sm:$0xff] %v437
                %v439 = vld [vmem:[%s339 + $0x308] sm:$0xff]
                %440 = vst [vmem:[%s340 + $0x188] sm:$0xff] %v439
                %v441 = vld [vmem:[%s339 + $0x310] sm:$0xff]
                %442 = vst [vmem:[%s340 + $0x190] sm:$0xff] %v441
                %v443 = vld [vmem:[%s339 + $0x318] sm:$0xff]
                %444 = vst [vmem:[%s340 + $0x198] sm:$0xff] %v443
                %v445 = vld [vmem:[%s339 + $0x320] sm:$0xff]
                %446 = vst [vmem:[%s340 + $0x1a0] sm:$0xff] %v445
                %v447 = vld [vmem:[%s339 + $0x328] sm:$0xff]
                %448 = vst [vmem:[%s340 + $0x1a8] sm:$0xff] %v447
                %v449 = vld [vmem:[%s339 + $0x330] sm:$0xff]
                %450 = vst [vmem:[%s340 + $0x1b0] sm:$0xff] %v449
                %v451 = vld [vmem:[%s339 + $0x338] sm:$0xff]
                %452 = vst [vmem:[%s340 + $0x1b8] sm:$0xff] %v451
                %v453 = vld [vmem:[%s339 + $0x380] sm:$0xff]
                %454 = vst [vmem:[%s340 + $0x1c0] sm:$0xff] %v453
                %v455 = vld [vmem:[%s339 + $0x388] sm:$0xff]
                %456 = vst [vmem:[%s340 + $0x1c8] sm:$0xff] %v455
                %v457 = vld [vmem:[%s339 + $0x390] sm:$0xff]
                %458 = vst [vmem:[%s340 + $0x1d0] sm:$0xff] %v457
                %v459 = vld [vmem:[%s339 + $0x398] sm:$0xff]
                %460 = vst [vmem:[%s340 + $0x1d8] sm:$0xff] %v459
                %v461 = vld [vmem:[%s339 + $0x3a0] sm:$0xff]
                %462 = vst [vmem:[%s340 + $0x1e0] sm:$0xff] %v461
                %v463 = vld [vmem:[%s339 + $0x3a8] sm:$0xff]
                %464 = vst [vmem:[%s340 + $0x1e8] sm:$0xff] %v463
                %v465 = vld [vmem:[%s339 + $0x3b0] sm:$0xff]
                %466 = vst [vmem:[%s340 + $0x1f0] sm:$0xff] %v465
                %v467 = vld [vmem:[%s339 + $0x3b8] sm:$0xff]
                %468 = vst [vmem:[%s340 + $0x1f8] sm:$0xff] %v467
              $region53: #{diffwave_block.1} parent=47 // loop_footer
                %s338 = sadd.s32 1, %s334
              $region54: #{diffwave_block.1} parent=47 // loop_footer_branch
                %333 = sbr.rel target = $region50
              $region55: #{diffwave_block.1} parent=47 // loop_exit
                _
            $region48: #{diffwave_block.1} parent=43 // pred_fallthru
              _
            // Predicated region
            $region56: #{diffwave_block.1} parent=43 // pred_check
              _
            $region57: #{diffwave_block.1} parent=43 // pred_check_branch
              %470 = sbr.rel target = $region59
            $region58: #{diffwave_block.1} parent=43 // pred_region
              _
            $region59: #{diffwave_block.1} parent=43 // pred_fallthru
              _
          $region44: #{diffwave_block.1} parent=39 // pred_fallthru
            _
          %471 = vnop
        $region40: #{diffwave_block.1} parent=35 // pred_fallthru
          _
        // Predicated region
        $region60: #{diffwave_block.1} parent=35 // pred_check
          %p472 = pneg %p78
        $region61: #{diffwave_block.1} parent=35 // pred_check_branch
          %474 = sbr.rel (%p472) target = $region63
        $region62: #{diffwave_block.1} parent=35 // pred_region
          %p475 = scmp.lt.s32.totalorder %s23, 0
          %s476 = scalar_select %p475, %s23, 0
          %p477 = scmp.lt.s32.totalorder %s24, 1
          %s478 = scalar_select %p477, %s24, 1
          %s479 = smul.addr %s478, 16
          %s480 = smul.addr %s476, 32
          %s481 = sadd.s32 %s479, %s480
          %s482 = smul.addr %s481, 4
          %s483 = scalar_lea.vmem %s1, %s482
        $region63: #{diffwave_block.1} parent=35 // pred_fallthru
          _
        // Predicated region
        $region64: #{diffwave_block.1} parent=35 // pred_check
          %p484 = pneg %p106
        $region65: #{diffwave_block.1} parent=35 // pred_check_branch
          %486 = sbr.rel (%p484) target = $region67
        $region66: #{diffwave_block.1} parent=35 // pred_region
          %s487 = sand.u32 %s96, 1
          %s488 = sand.u32 %s96, 1
          %s489 = smul.addr %s488, 64
          %s490 = scalar_lea.vmem [#allocation3], %s489
          %s491 = smul.u32 8, %s24
          %s492 = smul.addr %s23, 32
          %s493 = sadd.s32 %s491, %s492
          %s494 = smul.addr %s493, 4
          %s495 = scalar_lea.vmem %s2, %s494
          // Predicated region
          $region68: #{diffwave_block.1} parent=66 // pred_check
            _
          $region69: #{diffwave_block.1} parent=66 // pred_check_branch
            %497 = sbr.rel (0) target = $region71
          $region70: #{diffwave_block.1} parent=66 // pred_region
            // Predicated region
            $region72: #{diffwave_block.1} parent=70 // pred_check
              _
            $region73: #{diffwave_block.1} parent=70 // pred_check_branch
              %499 = sbr.rel (0) target = $region75
            $region74: #{diffwave_block.1} parent=70 // pred_region
              loop: start=0, step=1, limit=1
              $region76: #{diffwave_block.1} parent=74 // loop_pre_header
                _
              $region77: #{diffwave_block.1} parent=74 // loop_header
                %s501 = sphi 0, %s505
                %p502 = scmp.ge.s32.totalorder %s501, 1
                %s506 = sphi %s495, %s495
                %s507 = sphi %s490, %s490
              $region78: #{diffwave_block.1} parent=74 // loop_header_branch
                %504 = sbr.rel (%p502) target = $region82
              $region79: #{diffwave_block.1} parent=74 // loop_body
                %v508 = vld [vmem:[%s506] sm:$0xff]
                %509 = vst [vmem:[%s507] sm:$0xff] %v508
                %v510 = vld [vmem:[%s506 + $0x8] sm:$0xff]
                %511 = vst [vmem:[%s507 + $0x8] sm:$0xff] %v510
                %v512 = vld [vmem:[%s506 + $0x10] sm:$0xff]
                %513 = vst [vmem:[%s507 + $0x10] sm:$0xff] %v512
                %v514 = vld [vmem:[%s506 + $0x18] sm:$0xff]
                %515 = vst [vmem:[%s507 + $0x18] sm:$0xff] %v514
                %v516 = vld [vmem:[%s506 + $0x40] sm:$0xff]
                %517 = vst [vmem:[%s507 + $0x20] sm:$0xff] %v516
                %v518 = vld [vmem:[%s506 + $0x48] sm:$0xff]
                %519 = vst [vmem:[%s507 + $0x28] sm:$0xff] %v518
                %v520 = vld [vmem:[%s506 + $0x50] sm:$0xff]
                %521 = vst [vmem:[%s507 + $0x30] sm:$0xff] %v520
                %v522 = vld [vmem:[%s506 + $0x58] sm:$0xff]
                %523 = vst [vmem:[%s507 + $0x38] sm:$0xff] %v522
              $region80: #{diffwave_block.1} parent=74 // loop_footer
                %s505 = sadd.s32 1, %s501
              $region81: #{diffwave_block.1} parent=74 // loop_footer_branch
                %500 = sbr.rel target = $region77
              $region82: #{diffwave_block.1} parent=74 // loop_exit
                _
            $region75: #{diffwave_block.1} parent=70 // pred_fallthru
              _
            // Predicated region
            $region83: #{diffwave_block.1} parent=70 // pred_check
              _
            $region84: #{diffwave_block.1} parent=70 // pred_check_branch
              %525 = sbr.rel target = $region86
            $region85: #{diffwave_block.1} parent=70 // pred_region
              _
            $region86: #{diffwave_block.1} parent=70 // pred_fallthru
              _
          $region71: #{diffwave_block.1} parent=66 // pred_fallthru
            _
          %526 = vnop
        $region67: #{diffwave_block.1} parent=35 // pred_fallthru
          _
      $region36: #{diffwave_block.1} parent=5 // pred_fallthru
        _
      %p527 = scmp.le.s32.totalorder 1, %s16
      %p528 = scmp.lt.s32.totalorder %s16, 3
      %p529 = pnand %p527, %p528
      %p530 = pneg %p529
      // Predicated region
      $region87: #{diffwave_block.1} parent=5 // pred_check
        _
      $region88: #{diffwave_block.1} parent=5 // pred_check_branch
        %532 = sbr.rel (%p529) target = $region90
      $region89: #{diffwave_block.1} parent=5 // pred_region
        %s533 = ssub.s32 %s16, 1
        %s534 = sand.u32 %s43, 1
        %s535 = sand.u32 %s43, 1
        %s536 = smul.addr %s535, 512
        %s537 = scalar_lea.vmem [#allocation2], %s536
        // Predicated region
        $region91: #{diffwave_block.1} parent=89 // pred_check
          %p538 = pneg %p56
        $region92: #{diffwave_block.1} parent=89 // pred_check_branch
          %540 = sbr.rel (%p538) target = $region94
        $region93: #{diffwave_block.1} parent=89 // pred_region
          _
        $region94: #{diffwave_block.1} parent=89 // pred_fallthru
          _
        %s541 = sand.u32 %s99, 1
        %s542 = sand.u32 %s99, 1
        %s543 = smul.addr %s542, 64
        %s544 = scalar_lea.vmem [#allocation3], %s543
        // Predicated region
        $region95: #{diffwave_block.1} parent=89 // pred_check
          %p545 = pneg %p112
        $region96: #{diffwave_block.1} parent=89 // pred_check_branch
          %547 = sbr.rel (%p545) target = $region98
        $region97: #{diffwave_block.1} parent=89 // pred_region
          _
        $region98: #{diffwave_block.1} parent=89 // pred_fallthru
          _
        %s548 = sand.u32 %s43, 1
        %s549 = sand.u32 %s43, 1
        %s550 = smul.addr %s549, 512
        %s551 = scalar_lea.vmem [#allocation2], %s550
        %p552 = pneg %p56
        %p553 = pneg %p53
        %p554 = scmp.lt.s32.totalorder %s25, 0
        %s555 = scalar_select %p554, %s25, 0
        %p556 = scmp.lt.s32.totalorder %s26, 1
        %s557 = scalar_select %p556, %s26, 1
        %s558 = smul.addr %s557, 16
        %s559 = smul.addr %s555, 32
        %s560 = sadd.s32 %s558, %s559
        %s561 = smul.addr %s560, 4
        %s562 = scalar_lea.vmem %s1, %s561
        %p563 = pneg %p84
        %p564 = pneg %p81
        %s565 = sand.u32 %s99, 1
        %s566 = sand.u32 %s99, 1
        %s567 = smul.addr %s566, 64
        %s568 = scalar_lea.vmem [#allocation3], %s567
        %p569 = pneg %p112
        %p570 = pneg %p109
        %p571 = scmp.lt.s32.totalorder %s25, 0
        %s572 = scalar_select %p571, %s25, 0
        %s573 = smul.addr %s572, 8
        %s574 = smul.addr %s573, 8
        %s575 = scalar_lea.vmem %s3, %s574
        %p576 = pneg %p138
        %p577 = pneg %p135
        %p578 = pneg %p159
        %p579 = pneg %p156
        %p580 = pneg %p180
        %p581 = pneg %p177
        %p582 = pneg %p201
        %p583 = pneg %p198
        %p584 = pneg %p222
        %p585 = pneg %p219
        %p586 = pneg %p250
        %p587 = pneg %p247
        %s588 = sand.u32 %s237, 1
        %s589 = sand.u32 %s237, 1
        %s590 = smul.addr %s589, 512
        %s591 = scalar_lea.vmem [#allocation4], %s590
        %p592 = pneg %p278
        %p593 = pneg %p275
        %s594 = sand.u32 %s265, 1
        %s595 = sand.u32 %s265, 1
        %s596 = smul.addr %s595, 512
        %s597 = scalar_lea.vmem [#allocation5], %s596
        %s598 = smul.u32 8, %s26
        %p599 = scmp.lt.s32.totalorder %s25, 0
        %s600 = scalar_select %p599, %s25, 0
        %p601 = scmp.lt.s32.totalorder %s26, 1
        %s602 = scalar_select %p601, %s26, 1
        %s603 = smul.addr %s602, 16
        %s604 = smul.addr %s600, 32
        %s605 = sadd.s32 %s603, %s604
        %s606 = smul.addr %s605, 4
        %s607 = scalar_lea.vmem %s1, %s606
        %s608 = smul.u32 8, %s26
        %p609 = scmp.lt.s32.totalorder %s25, 0
        %s610 = scalar_select %p609, %s25, 0
        %s611 = smul.addr %s610, 8
        %s612 = smul.addr %s611, 8
        %s613 = scalar_lea.vmem %s3, %s612
        %s614 = smul.u32 8, %s26
        %s615 = smul.u32 8, %s26
        %s617 = smul.u32 %s26, 1024
        %v618 = vld [vmem:[%s537] sm:$0xff]
        %v619 = vld [vmem:[%s537 + $0x8] sm:$0xff]
        %v620 = vld [vmem:[%s537 + $0x10] sm:$0xff]
        %v621 = vld [vmem:[%s537 + $0x18] sm:$0xff]
        %v622 = vld [vmem:[%s537 + $0x20] sm:$0xff]
        %v623 = vld [vmem:[%s537 + $0x28] sm:$0xff]
        %v624 = vld [vmem:[%s537 + $0x30] sm:$0xff]
        %v625 = vld [vmem:[%s537 + $0x38] sm:$0xff]
        %v626 = vld [vmem:[%s537 + $0x40] sm:$0xff]
        %v627 = vld [vmem:[%s537 + $0x48] sm:$0xff]
        %v628 = vld [vmem:[%s537 + $0x50] sm:$0xff]
        %v629 = vld [vmem:[%s537 + $0x58] sm:$0xff]
        %v630 = vld [vmem:[%s537 + $0x60] sm:$0xff]
        %v631 = vld [vmem:[%s537 + $0x68] sm:$0xff]
        %v632 = vld [vmem:[%s537 + $0x70] sm:$0xff]
        %v633 = vld [vmem:[%s537 + $0x78] sm:$0xff]
        %v634 = vld [vmem:[%s537 + $0x80] sm:$0xff]
        %v635 = vld [vmem:[%s537 + $0x88] sm:$0xff]
        %v636 = vld [vmem:[%s537 + $0x90] sm:$0xff]
        %v637 = vld [vmem:[%s537 + $0x98] sm:$0xff]
        %v638 = vld [vmem:[%s537 + $0xa0] sm:$0xff]
        %v639 = vld [vmem:[%s537 + $0xa8] sm:$0xff]
        %v640 = vld [vmem:[%s537 + $0xb0] sm:$0xff]
        %v641 = vld [vmem:[%s537 + $0xb8] sm:$0xff]
        %v642 = vld [vmem:[%s537 + $0xc0] sm:$0xff]
        %v643 = vld [vmem:[%s537 + $0xc8] sm:$0xff]
        %v644 = vld [vmem:[%s537 + $0xd0] sm:$0xff]
        %v645 = vld [vmem:[%s537 + $0xd8] sm:$0xff]
        %v646 = vld [vmem:[%s537 + $0xe0] sm:$0xff]
        %v647 = vld [vmem:[%s537 + $0xe8] sm:$0xff]
        %v648 = vld [vmem:[%s537 + $0xf0] sm:$0xff]
        %v649 = vld [vmem:[%s537 + $0xf8] sm:$0xff]
        %v650 = vld [vmem:[%s537 + $0x100] sm:$0xff]
        %v651 = vld [vmem:[%s537 + $0x108] sm:$0xff]
        %v652 = vld [vmem:[%s537 + $0x110] sm:$0xff]
        %v653 = vld [vmem:[%s537 + $0x118] sm:$0xff]
        %v654 = vld [vmem:[%s537 + $0x120] sm:$0xff]
        %v655 = vld [vmem:[%s537 + $0x128] sm:$0xff]
        %v656 = vld [vmem:[%s537 + $0x130] sm:$0xff]
        %v657 = vld [vmem:[%s537 + $0x138] sm:$0xff]
        %v658 = vld [vmem:[%s537 + $0x140] sm:$0xff]
        %v659 = vld [vmem:[%s537 + $0x148] sm:$0xff]
        %v660 = vld [vmem:[%s537 + $0x150] sm:$0xff]
        %v661 = vld [vmem:[%s537 + $0x158] sm:$0xff]
        %v662 = vld [vmem:[%s537 + $0x160] sm:$0xff]
        %v663 = vld [vmem:[%s537 + $0x168] sm:$0xff]
        %v664 = vld [vmem:[%s537 + $0x170] sm:$0xff]
        %v665 = vld [vmem:[%s537 + $0x178] sm:$0xff]
        %v666 = vld [vmem:[%s537 + $0x180] sm:$0xff]
        %v667 = vld [vmem:[%s537 + $0x188] sm:$0xff]
        %v668 = vld [vmem:[%s537 + $0x190] sm:$0xff]
        %v669 = vld [vmem:[%s537 + $0x198] sm:$0xff]
        %v670 = vld [vmem:[%s537 + $0x1a0] sm:$0xff]
        %v671 = vld [vmem:[%s537 + $0x1a8] sm:$0xff]
        %v672 = vld [vmem:[%s537 + $0x1b0] sm:$0xff]
        %v673 = vld [vmem:[%s537 + $0x1b8] sm:$0xff]
        %v674 = vld [vmem:[%s537 + $0x1c0] sm:$0xff]
        %v675 = vld [vmem:[%s537 + $0x1c8] sm:$0xff]
        %v676 = vld [vmem:[%s537 + $0x1d0] sm:$0xff]
        %v677 = vld [vmem:[%s537 + $0x1d8] sm:$0xff]
        %v678 = vld [vmem:[%s537 + $0x1e0] sm:$0xff]
        %v679 = vld [vmem:[%s537 + $0x1e8] sm:$0xff]
        %v680 = vld [vmem:[%s537 + $0x1f0] sm:$0xff]
        %v681 = vld [vmem:[%s537 + $0x1f8] sm:$0xff]
        %v682 = vld [vmem:[%s613] sm:$0xff]
        %v683 = vld [vmem:[%s613 + $0x8] sm:$0xff]
        %v684 = vld [vmem:[%s613 + $0x10] sm:$0xff]
        %v685 = vld [vmem:[%s613 + $0x18] sm:$0xff]
        %v686 = vld [vmem:[%s613 + $0x20] sm:$0xff]
        %v687 = vld [vmem:[%s613 + $0x28] sm:$0xff]
        %v688 = vld [vmem:[%s613 + $0x30] sm:$0xff]
        %v689 = vld [vmem:[%s613 + $0x38] sm:$0xff]
        %v690 = vlaneseq
        %v691 = vand.u32 %v690, 127
        %v692 = vadd.s32 %v691, 128
        %v693 = vadd.s32 %v691, 256
        %v694 = vadd.s32 %v691, 384
        %v695 = vadd.s32 %v691, 512
        %v696 = vadd.s32 %v691, 640
        %v697 = vadd.s32 %v691, 768
        %v698 = vadd.s32 %v691, 896
        %v699 = vstv %s617
        %v700 = vadd.s32 %v699, %v691
        %v701 = vadd.s32 %v699, %v692
        %v702 = vadd.s32 %v699, %v693
        %v703 = vadd.s32 %v699, %v694
        %v704 = vadd.s32 %v699, %v695
        %v705 = vadd.s32 %v699, %v696
        %v706 = vadd.s32 %v699, %v697
        %v707 = vadd.s32 %v699, %v698
        %vm708 = vcmp.lt.s32.totalorder %v700, 1920
        %vm709 = vcmp.lt.s32.totalorder %v701, 1920
        %vm710 = vcmp.lt.s32.totalorder %v702, 1920
        %vm711 = vcmp.lt.s32.totalorder %v703, 1920
        %vm712 = vcmp.lt.s32.totalorder %v704, 1920
        %vm713 = vcmp.lt.s32.totalorder %v705, 1920
        %vm714 = vcmp.lt.s32.totalorder %v706, 1920
        %vm715 = vcmp.lt.s32.totalorder %v707, 1920
        %v716 = vsel %vm708, 1, 0
        %v717 = vsel %vm709, 1, 0
        %v718 = vsel %vm710, 1, 0
        %v719 = vsel %vm711, 1, 0
        %v720 = vsel %vm712, 1, 0
        %v721 = vsel %vm713, 1, 0
        %v722 = vsel %vm714, 1, 0
        %v723 = vsel %vm715, 1, 0
        %v724 = vcvt.s32.f32 %v716
        %v725 = vcvt.s32.f32 %v717
        %v726 = vcvt.s32.f32 %v718
        %v727 = vcvt.s32.f32 %v719
        %v728 = vcvt.s32.f32 %v720
        %v729 = vcvt.s32.f32 %v721
        %v730 = vcvt.s32.f32 %v722
        %v731 = vcvt.s32.f32 %v723
        %733 = vset.pattern.permute.xlu0 0
        %734 = vperm.xlu0 %733, %v682
        %v735 = vpop.permute.xlu0 %734
        %738 = vset.pattern.permute.xlu0 0
        %739 = vperm.xlu0 %738, %v683
        %v740 = vpop.permute.xlu0 %739
        %743 = vset.pattern.permute.xlu0 0
        %744 = vperm.xlu0 %743, %v684
        %v745 = vpop.permute.xlu0 %744
        %748 = vset.pattern.permute.xlu0 0
        %749 = vperm.xlu0 %748, %v685
        %v750 = vpop.permute.xlu0 %749
        %753 = vset.pattern.permute.xlu0 0
        %754 = vperm.xlu0 %753, %v686
        %v755 = vpop.permute.xlu0 %754
        %758 = vset.pattern.permute.xlu0 0
        %759 = vperm.xlu0 %758, %v687
        %v760 = vpop.permute.xlu0 %759
        %763 = vset.pattern.permute.xlu0 0
        %764 = vperm.xlu0 %763, %v688
        %v765 = vpop.permute.xlu0 %764
        %768 = vset.pattern.permute.xlu0 0
        %769 = vperm.xlu0 %768, %v689
        %v770 = vpop.permute.xlu0 %769
        %v772 = vadd.f32 %v618, %v735
        %v773 = vadd.f32 %v619, %v735
        %v774 = vadd.f32 %v620, %v735
        %v775 = vadd.f32 %v621, %v735
        %v776 = vadd.f32 %v622, %v735
        %v777 = vadd.f32 %v623, %v735
        %v778 = vadd.f32 %v624, %v735
        %v779 = vadd.f32 %v625, %v735
        %v780 = vadd.f32 %v626, %v740
        %v781 = vadd.f32 %v627, %v740
        %v782 = vadd.f32 %v628, %v740
        %v783 = vadd.f32 %v629, %v740
        %v784 = vadd.f32 %v630, %v740
        %v785 = vadd.f32 %v631, %v740
        %v786 = vadd.f32 %v632, %v740
        %v787 = vadd.f32 %v633, %v740
        %v788 = vadd.f32 %v634, %v745
        %v789 = vadd.f32 %v635, %v745
        %v790 = vadd.f32 %v636, %v745
        %v791 = vadd.f32 %v637, %v745
        %v792 = vadd.f32 %v638, %v745
        %v793 = vadd.f32 %v639, %v745
        %v794 = vadd.f32 %v640, %v745
        %v795 = vadd.f32 %v641, %v745
        %v796 = vadd.f32 %v642, %v750
        %v797 = vadd.f32 %v643, %v750
        %v798 = vadd.f32 %v644, %v750
        %v799 = vadd.f32 %v645, %v750
        %v800 = vadd.f32 %v646, %v750
        %v801 = vadd.f32 %v647, %v750
        %v802 = vadd.f32 %v648, %v750
        %v803 = vadd.f32 %v649, %v750
        %v804 = vadd.f32 %v650, %v755
        %v805 = vadd.f32 %v651, %v755
        %v806 = vadd.f32 %v652, %v755
        %v807 = vadd.f32 %v653, %v755
        %v808 = vadd.f32 %v654, %v755
        %v809 = vadd.f32 %v655, %v755
        %v810 = vadd.f32 %v656, %v755
        %v811 = vadd.f32 %v657, %v755
        %v812 = vadd.f32 %v658, %v760
        %v813 = vadd.f32 %v659, %v760
        %v814 = vadd.f32 %v660, %v760
        %v815 = vadd.f32 %v661, %v760
        %v816 = vadd.f32 %v662, %v760
        %v817 = vadd.f32 %v663, %v760
        %v818 = vadd.f32 %v664, %v760
        %v819 = vadd.f32 %v665, %v760
        %v820 = vadd.f32 %v666, %v765
        %v821 = vadd.f32 %v667, %v765
        %v822 = vadd.f32 %v668, %v765
        %v823 = vadd.f32 %v669, %v765
        %v824 = vadd.f32 %v670, %v765
        %v825 = vadd.f32 %v671, %v765
        %v826 = vadd.f32 %v672, %v765
        %v827 = vadd.f32 %v673, %v765
        %v828 = vadd.f32 %v674, %v770
        %v829 = vadd.f32 %v675, %v770
        %v830 = vadd.f32 %v676, %v770
        %v831 = vadd.f32 %v677, %v770
        %v832 = vadd.f32 %v678, %v770
        %v833 = vadd.f32 %v679, %v770
        %v834 = vadd.f32 %v680, %v770
        %v835 = vadd.f32 %v681, %v770
        %v836 = vmul.f32 %v772, %v724
        %v837 = vmul.f32 %v773, %v725
        %v838 = vmul.f32 %v774, %v726
        %v839 = vmul.f32 %v775, %v727
        %v840 = vmul.f32 %v776, %v728
        %v841 = vmul.f32 %v777, %v729
        %v842 = vmul.f32 %v778, %v730
        %v843 = vmul.f32 %v779, %v731
        %v844 = vmul.f32 %v780, %v724
        %v845 = vmul.f32 %v781, %v725
        %v846 = vmul.f32 %v782, %v726
        %v847 = vmul.f32 %v783, %v727
        %v848 = vmul.f32 %v784, %v728
        %v849 = vmul.f32 %v785, %v729
        %v850 = vmul.f32 %v786, %v730
        %v851 = vmul.f32 %v787, %v731
        %v852 = vmul.f32 %v788, %v724
        %v853 = vmul.f32 %v789, %v725
        %v854 = vmul.f32 %v790, %v726
        %v855 = vmul.f32 %v791, %v727
        %v856 = vmul.f32 %v792, %v728
        %v857 = vmul.f32 %v793, %v729
        %v858 = vmul.f32 %v794, %v730
        %v859 = vmul.f32 %v795, %v731
        %v860 = vmul.f32 %v796, %v724
        %v861 = vmul.f32 %v797, %v725
        %v862 = vmul.f32 %v798, %v726
        %v863 = vmul.f32 %v799, %v727
        %v864 = vmul.f32 %v800, %v728
        %v865 = vmul.f32 %v801, %v729
        %v866 = vmul.f32 %v802, %v730
        %v867 = vmul.f32 %v803, %v731
        %v868 = vmul.f32 %v804, %v724
        %v869 = vmul.f32 %v805, %v725
        %v870 = vmul.f32 %v806, %v726
        %v871 = vmul.f32 %v807, %v727
        %v872 = vmul.f32 %v808, %v728
        %v873 = vmul.f32 %v809, %v729
        %v874 = vmul.f32 %v810, %v730
        %v875 = vmul.f32 %v811, %v731
        %v876 = vmul.f32 %v812, %v724
        %v877 = vmul.f32 %v813, %v725
        %v878 = vmul.f32 %v814, %v726
        %v879 = vmul.f32 %v815, %v727
        %v880 = vmul.f32 %v816, %v728
        %v881 = vmul.f32 %v817, %v729
        %v882 = vmul.f32 %v818, %v730
        %v883 = vmul.f32 %v819, %v731
        %v884 = vmul.f32 %v820, %v724
        %v885 = vmul.f32 %v821, %v725
        %v886 = vmul.f32 %v822, %v726
        %v887 = vmul.f32 %v823, %v727
        %v888 = vmul.f32 %v824, %v728
        %v889 = vmul.f32 %v825, %v729
        %v890 = vmul.f32 %v826, %v730
        %v891 = vmul.f32 %v827, %v731
        %v892 = vmul.f32 %v828, %v724
        %v893 = vmul.f32 %v829, %v725
        %v894 = vmul.f32 %v830, %v726
        %v895 = vmul.f32 %v831, %v727
        %v896 = vmul.f32 %v832, %v728
        %v897 = vmul.f32 %v833, %v729
        %v898 = vmul.f32 %v834, %v730
        %v899 = vmul.f32 %v835, %v731
        %v900 = vpack.c.bf16 %v844, %v836
        %v901 = vpack.c.bf16 %v845, %v837
        %v902 = vpack.c.bf16 %v846, %v838
        %v903 = vpack.c.bf16 %v847, %v839
        %v904 = vpack.c.bf16 %v848, %v840
        %v905 = vpack.c.bf16 %v849, %v841
        %v906 = vpack.c.bf16 %v850, %v842
        %v907 = vpack.c.bf16 %v851, %v843
        %v908 = vpack.c.bf16 %v860, %v852
        %v909 = vpack.c.bf16 %v861, %v853
        %v910 = vpack.c.bf16 %v862, %v854
        %v911 = vpack.c.bf16 %v863, %v855
        %v912 = vpack.c.bf16 %v864, %v856
        %v913 = vpack.c.bf16 %v865, %v857
        %v914 = vpack.c.bf16 %v866, %v858
        %v915 = vpack.c.bf16 %v867, %v859
        %v916 = vpack.c.bf16 %v876, %v868
        %v917 = vpack.c.bf16 %v877, %v869
        %v918 = vpack.c.bf16 %v878, %v870
        %v919 = vpack.c.bf16 %v879, %v871
        %v920 = vpack.c.bf16 %v880, %v872
        %v921 = vpack.c.bf16 %v881, %v873
        %v922 = vpack.c.bf16 %v882, %v874
        %v923 = vpack.c.bf16 %v883, %v875
        %v924 = vpack.c.bf16 %v892, %v884
        %v925 = vpack.c.bf16 %v893, %v885
        %v926 = vpack.c.bf16 %v894, %v886
        %v927 = vpack.c.bf16 %v895, %v887
        %v928 = vpack.c.bf16 %v896, %v888
        %v929 = vpack.c.bf16 %v897, %v889
        %v930 = vpack.c.bf16 %v898, %v890
        %v931 = vpack.c.bf16 %v899, %v891
        %v932 = vld [vmem:[%s607] sm:$0xff]
        %v933 = vld [vmem:[%s607 + $0x8] sm:$0xff]
        %v934 = vld [vmem:[%s607 + $0x10] sm:$0xff]
        %v935 = vld [vmem:[%s607 + $0x18] sm:$0xff]
        %v936 = vld [vmem:[%s607 + $0x20] sm:$0xff]
        %v937 = vld [vmem:[%s607 + $0x28] sm:$0xff]
        %v938 = vld [vmem:[%s607 + $0x30] sm:$0xff]
        %v939 = vld [vmem:[%s607 + $0x38] sm:$0xff]
        %v940 = vunpack.c.l.bf16 %v932
        %v941 = vunpack.c.h.bf16 %v932
        %v942 = vunpack.c.l.bf16 %v933
        %v943 = vunpack.c.h.bf16 %v933
        %v944 = vunpack.c.l.bf16 %v934
        %v945 = vunpack.c.h.bf16 %v934
        %v946 = vunpack.c.l.bf16 %v935
        %v947 = vunpack.c.h.bf16 %v935
        %v948 = vunpack.c.l.bf16 %v936
        %v949 = vunpack.c.h.bf16 %v936
        %v950 = vunpack.c.l.bf16 %v937
        %v951 = vunpack.c.h.bf16 %v937
        %v952 = vunpack.c.l.bf16 %v938
        %v953 = vunpack.c.h.bf16 %v938
        %v954 = vunpack.c.l.bf16 %v939
        %v955 = vunpack.c.h.bf16 %v939
        %vm956 = vcmp.lt.s32.totalorder %v691, 128
        %vm957 = vcmp.lt.s32.totalorder %v692, 128
        %s958 = ssub.s32 %s617, 128
        %v959 = vstv %s958
        %v960 = vadd.s32 %v959, %v691
        %v961 = vadd.s32 %v959, %v692
        %s962 = sadd.s32 %s617, 1024
        %v963 = vsub.s32 %v691, 128
        %v964 = vstv %s962
        %v965 = vadd.s32 %v964, %v963
        %v966 = vadd.s32 %v964, %v691
        %v967 = vsel %vm956, %v960, %v965
        %v968 = vsel %vm957, %v961, %v966
        %vm969 = vcmp.ge.s32.totalorder %v967, 0
        %vm970 = vcmp.ge.s32.totalorder %v968, 0
        %vm971 = vcmp.lt.s32.totalorder %v967, 1920
        %vm972 = vcmp.lt.s32.totalorder %v968, 1920
        %vm973 = vmand %vm969, %vm971
        %vm974 = vmand %vm970, %vm972
        %v975 = vsel %vm973, 1, 0
        %v976 = vsel %vm974, 1, 0
        %v977 = vcvt.s32.f32 %v975
        %v978 = vcvt.s32.f32 %v976
        %v979 = vadd.f32 %v940, %v735
        %v980 = vadd.f32 %v941, %v735
        %v981 = vadd.f32 %v942, %v740
        %v982 = vadd.f32 %v943, %v740
        %v983 = vadd.f32 %v944, %v745
        %v984 = vadd.f32 %v945, %v745
        %v985 = vadd.f32 %v946, %v750
        %v986 = vadd.f32 %v947, %v750
        %v987 = vadd.f32 %v948, %v755
        %v988 = vadd.f32 %v949, %v755
        %v989 = vadd.f32 %v950, %v760
        %v990 = vadd.f32 %v951, %v760
        %v991 = vadd.f32 %v952, %v765
        %v992 = vadd.f32 %v953, %v765
        %v993 = vadd.f32 %v954, %v770
        %v994 = vadd.f32 %v955, %v770
        %v995 = vmul.f32 %v979, %v977
        %v996 = vmul.f32 %v980, %v978
        %v997 = vmul.f32 %v981, %v977
        %v998 = vmul.f32 %v982, %v978
        %v999 = vmul.f32 %v983, %v977
        %v1000 = vmul.f32 %v984, %v978
        %v1001 = vmul.f32 %v985, %v977
        %v1002 = vmul.f32 %v986, %v978
        %v1003 = vmul.f32 %v987, %v977
        %v1004 = vmul.f32 %v988, %v978
        %v1005 = vmul.f32 %v989, %v977
        %v1006 = vmul.f32 %v990, %v978
        %v1007 = vmul.f32 %v991, %v977
        %v1008 = vmul.f32 %v992, %v978
        %v1009 = vmul.f32 %v993, %v977
        %v1010 = vmul.f32 %v994, %v978
        %v1011 = vpack.c.bf16 %v997, %v995
        %v1012 = vpack.c.bf16 %v998, %v996
        %v1013 = vpack.c.bf16 %v1001, %v999
        %v1014 = vpack.c.bf16 %v1002, %v1000
        %v1015 = vpack.c.bf16 %v1005, %v1003
        %v1016 = vpack.c.bf16 %v1006, %v1004
        %v1017 = vpack.c.bf16 %v1009, %v1007
        %v1018 = vpack.c.bf16 %v1010, %v1008
        %v1019 = vld [vmem:[%s544] sm:$0xff]
        %v1020 = vld [vmem:[%s544 + $0x8] sm:$0xff]
        %v1021 = vld [vmem:[%s544 + $0x10] sm:$0xff]
        %v1022 = vld [vmem:[%s544 + $0x18] sm:$0xff]
        %v1023 = vld [vmem:[%s544 + $0x20] sm:$0xff]
        %v1024 = vld [vmem:[%s544 + $0x28] sm:$0xff]
        %v1025 = vld [vmem:[%s544 + $0x30] sm:$0xff]
        %v1026 = vld [vmem:[%s544 + $0x38] sm:$0xff]
        %1059 = vrot.lane.b32.xlu0 %v900, 124
        %v1060 = vpop.permute.xlu0 %1059
        %1061 = vrot.lane.b32.xlu0 %v901, 124
        %v1062 = vpop.permute.xlu0 %1061
        %1063 = vrot.lane.b32.xlu0 %v902, 124
        %v1064 = vpop.permute.xlu0 %1063
        %1065 = vrot.lane.b32.xlu0 %v903, 124
        %v1066 = vpop.permute.xlu0 %1065
        %1067 = vrot.lane.b32.xlu0 %v904, 124
        %v1068 = vpop.permute.xlu0 %1067
        %1069 = vrot.lane.b32.xlu0 %v905, 124
        %v1070 = vpop.permute.xlu0 %1069
        %1071 = vrot.lane.b32.xlu0 %v906, 124
        %v1072 = vpop.permute.xlu0 %1071
        %1073 = vrot.lane.b32.xlu0 %v907, 124
        %v1074 = vpop.permute.xlu0 %1073
        %1075 = vrot.lane.b32.xlu0 %v908, 124
        %v1076 = vpop.permute.xlu0 %1075
        %1077 = vrot.lane.b32.xlu0 %v909, 124
        %v1078 = vpop.permute.xlu0 %1077
        %1079 = vrot.lane.b32.xlu0 %v910, 124
        %v1080 = vpop.permute.xlu0 %1079
        %1081 = vrot.lane.b32.xlu0 %v911, 124
        %v1082 = vpop.permute.xlu0 %1081
        %1083 = vrot.lane.b32.xlu0 %v912, 124
        %v1084 = vpop.permute.xlu0 %1083
        %1085 = vrot.lane.b32.xlu0 %v913, 124
        %v1086 = vpop.permute.xlu0 %1085
        %1087 = vrot.lane.b32.xlu0 %v914, 124
        %v1088 = vpop.permute.xlu0 %1087
        %1089 = vrot.lane.b32.xlu0 %v915, 124
        %v1090 = vpop.permute.xlu0 %1089
        %1091 = vrot.lane.b32.xlu0 %v916, 124
        %v1092 = vpop.permute.xlu0 %1091
        %1093 = vrot.lane.b32.xlu0 %v917, 124
        %v1094 = vpop.permute.xlu0 %1093
        %1095 = vrot.lane.b32.xlu0 %v918, 124
        %v1096 = vpop.permute.xlu0 %1095
        %1097 = vrot.lane.b32.xlu0 %v919, 124
        %v1098 = vpop.permute.xlu0 %1097
        %1099 = vrot.lane.b32.xlu0 %v920, 124
        %v1100 = vpop.permute.xlu0 %1099
        %1101 = vrot.lane.b32.xlu0 %v921, 124
        %v1102 = vpop.permute.xlu0 %1101
        %1103 = vrot.lane.b32.xlu0 %v922, 124
        %v1104 = vpop.permute.xlu0 %1103
        %1105 = vrot.lane.b32.xlu0 %v923, 124
        %v1106 = vpop.permute.xlu0 %1105
        %1107 = vrot.lane.b32.xlu0 %v924, 124
        %v1108 = vpop.permute.xlu0 %1107
        %1109 = vrot.lane.b32.xlu0 %v925, 124
        %v1110 = vpop.permute.xlu0 %1109
        %1111 = vrot.lane.b32.xlu0 %v926, 124
        %v1112 = vpop.permute.xlu0 %1111
        %1113 = vrot.lane.b32.xlu0 %v927, 124
        %v1114 = vpop.permute.xlu0 %1113
        %1115 = vrot.lane.b32.xlu0 %v928, 124
        %v1116 = vpop.permute.xlu0 %1115
        %1117 = vrot.lane.b32.xlu0 %v929, 124
        %v1118 = vpop.permute.xlu0 %1117
        %1119 = vrot.lane.b32.xlu0 %v930, 124
        %v1120 = vpop.permute.xlu0 %1119
        %1121 = vrot.lane.b32.xlu0 %v931, 124
        %v1122 = vpop.permute.xlu0 %1121
        %vm1123 = vcmask 1014784
        %v1124 = vsel %vm1123, %v1060, %v1062
        %v1125 = vsel %vm1123, %v1062, %v1064
        %v1126 = vsel %vm1123, %v1064, %v1066
        %v1127 = vsel %vm1123, %v1066, %v1068
        %v1128 = vsel %vm1123, %v1068, %v1070
        %v1129 = vsel %vm1123, %v1070, %v1072
        %v1130 = vsel %vm1123, %v1072, %v1074
        %v1131 = vsel %vm1123, %v1076, %v1078
        %v1132 = vsel %vm1123, %v1078, %v1080
        %v1133 = vsel %vm1123, %v1080, %v1082
        %v1134 = vsel %vm1123, %v1082, %v1084
        %v1135 = vsel %vm1123, %v1084, %v1086
        %v1136 = vsel %vm1123, %v1086, %v1088
        %v1137 = vsel %vm1123, %v1088, %v1090
        %v1138 = vsel %vm1123, %v1092, %v1094
        %v1139 = vsel %vm1123, %v1094, %v1096
        %v1140 = vsel %vm1123, %v1096, %v1098
        %v1141 = vsel %vm1123, %v1098, %v1100
        %v1142 = vsel %vm1123, %v1100, %v1102
        %v1143 = vsel %vm1123, %v1102, %v1104
        %v1144 = vsel %vm1123, %v1104, %v1106
        %v1145 = vsel %vm1123, %v1108, %v1110
        %v1146 = vsel %vm1123, %v1110, %v1112
        %v1147 = vsel %vm1123, %v1112, %v1114
        %v1148 = vsel %vm1123, %v1114, %v1116
        %v1149 = vsel %vm1123, %v1116, %v1118
        %v1150 = vsel %vm1123, %v1118, %v1120
        %v1151 = vsel %vm1123, %v1120, %v1122
        %1156 = vrot.lane.b32.xlu0 %v900, 120
        %v1157 = vpop.permute.xlu0 %1156
        %1158 = vrot.lane.b32.xlu0 %v901, 120
        %v1159 = vpop.permute.xlu0 %1158
        %1160 = vrot.lane.b32.xlu0 %v902, 120
        %v1161 = vpop.permute.xlu0 %1160
        %1162 = vrot.lane.b32.xlu0 %v903, 120
        %v1163 = vpop.permute.xlu0 %1162
        %1164 = vrot.lane.b32.xlu0 %v904, 120
        %v1165 = vpop.permute.xlu0 %1164
        %1166 = vrot.lane.b32.xlu0 %v905, 120
        %v1167 = vpop.permute.xlu0 %1166
        %1168 = vrot.lane.b32.xlu0 %v906, 120
        %v1169 = vpop.permute.xlu0 %1168
        %1170 = vrot.lane.b32.xlu0 %v907, 120
        %v1171 = vpop.permute.xlu0 %1170
        %1172 = vrot.lane.b32.xlu0 %v1012, 120
        %v1173 = vpop.permute.xlu0 %1172
        %1174 = vrot.lane.b32.xlu0 %v908, 120
        %v1175 = vpop.permute.xlu0 %1174
        %1176 = vrot.lane.b32.xlu0 %v909, 120
        %v1177 = vpop.permute.xlu0 %1176
        %1178 = vrot.lane.b32.xlu0 %v910, 120
        %v1179 = vpop.permute.xlu0 %1178
        %1180 = vrot.lane.b32.xlu0 %v911, 120
        %v1181 = vpop.permute.xlu0 %1180
        %1182 = vrot.lane.b32.xlu0 %v912, 120
        %v1183 = vpop.permute.xlu0 %1182
        %1184 = vrot.lane.b32.xlu0 %v913, 120
        %v1185 = vpop.permute.xlu0 %1184
        %1186 = vrot.lane.b32.xlu0 %v914, 120
        %v1187 = vpop.permute.xlu0 %1186
        %1188 = vrot.lane.b32.xlu0 %v915, 120
        %v1189 = vpop.permute.xlu0 %1188
        %1190 = vrot.lane.b32.xlu0 %v1014, 120
        %v1191 = vpop.permute.xlu0 %1190
        %1192 = vrot.lane.b32.xlu0 %v916, 120
        %v1193 = vpop.permute.xlu0 %1192
        %1194 = vrot.lane.b32.xlu0 %v917, 120
        %v1195 = vpop.permute.xlu0 %1194
        %1196 = vrot.lane.b32.xlu0 %v918, 120
        %v1197 = vpop.permute.xlu0 %1196
        %1198 = vrot.lane.b32.xlu0 %v919, 120
        %v1199 = vpop.permute.xlu0 %1198
        %1200 = vrot.lane.b32.xlu0 %v920, 120
        %v1201 = vpop.permute.xlu0 %1200
        %1202 = vrot.lane.b32.xlu0 %v921, 120
        %v1203 = vpop.permute.xlu0 %1202
        %1204 = vrot.lane.b32.xlu0 %v922, 120
        %v1205 = vpop.permute.xlu0 %1204
        %1206 = vrot.lane.b32.xlu0 %v923, 120
        %v1207 = vpop.permute.xlu0 %1206
        %1208 = vrot.lane.b32.xlu0 %v1016, 120
        %v1209 = vpop.permute.xlu0 %1208
        %1210 = vrot.lane.b32.xlu0 %v924, 120
        %v1211 = vpop.permute.xlu0 %1210
        %1212 = vrot.lane.b32.xlu0 %v925, 120
        %v1213 = vpop.permute.xlu0 %1212
        %1214 = vrot.lane.b32.xlu0 %v926, 120
        %v1215 = vpop.permute.xlu0 %1214
        %1216 = vrot.lane.b32.xlu0 %v927, 120
        %v1217 = vpop.permute.xlu0 %1216
        %1218 = vrot.lane.b32.xlu0 %v928, 120
        %v1219 = vpop.permute.xlu0 %1218
        %1220 = vrot.lane.b32.xlu0 %v929, 120
        %v1221 = vpop.permute.xlu0 %1220
        %1222 = vrot.lane.b32.xlu0 %v930, 120
        %v1223 = vpop.permute.xlu0 %1222
        %1224 = vrot.lane.b32.xlu0 %v931, 120
        %v1225 = vpop.permute.xlu0 %1224
        %1226 = vrot.lane.b32.xlu0 %v1018, 120
        %v1227 = vpop.permute.xlu0 %1226
        %vm1228 = vcmask 982016
        %v1229 = vsel %vm1228, %v1157, %v1159
        %v1230 = vsel %vm1228, %v1159, %v1161
        %v1231 = vsel %vm1228, %v1161, %v1163
        %v1232 = vsel %vm1228, %v1163, %v1165
        %v1233 = vsel %vm1228, %v1165, %v1167
        %v1234 = vsel %vm1228, %v1167, %v1169
        %v1235 = vsel %vm1228, %v1169, %v1171
        %v1236 = vsel %vm1228, %v1171, %v1173
        %v1237 = vsel %vm1228, %v1175, %v1177
        %v1238 = vsel %vm1228, %v1177, %v1179
        %v1239 = vsel %vm1228, %v1179, %v1181
        %v1240 = vsel %vm1228, %v1181, %v1183
        %v1241 = vsel %vm1228, %v1183, %v1185
        %v1242 = vsel %vm1228, %v1185, %v1187
        %v1243 = vsel %vm1228, %v1187, %v1189
        %v1244 = vsel %vm1228, %v1189, %v1191
        %v1245 = vsel %vm1228, %v1193, %v1195
        %v1246 = vsel %vm1228, %v1195, %v1197
        %v1247 = vsel %vm1228, %v1197, %v1199
        %v1248 = vsel %vm1228, %v1199, %v1201
        %v1249 = vsel %vm1228, %v1201, %v1203
        %v1250 = vsel %vm1228, %v1203, %v1205
        %v1251 = vsel %vm1228, %v1205, %v1207
        %v1252 = vsel %vm1228, %v1207, %v1209
        %v1253 = vsel %vm1228, %v1211, %v1213
        %v1254 = vsel %vm1228, %v1213, %v1215
        %v1255 = vsel %vm1228, %v1215, %v1217
        %v1256 = vsel %vm1228, %v1217, %v1219
        %v1257 = vsel %vm1228, %v1219, %v1221
        %v1258 = vsel %vm1228, %v1221, %v1223
        %v1259 = vsel %vm1228, %v1223, %v1225
        %v1260 = vsel %vm1228, %v1225, %v1227
        %v1269 = vunpack.c.l.b16 %v1019
        %v1270 = vunpack.c.h.b16 %v1019
        %v1271 = vunpack.c.l.b16 %v1020
        %v1272 = vunpack.c.h.b16 %v1020
        %v1273 = vunpack.c.l.b16 %v1021
        %v1274 = vunpack.c.h.b16 %v1021
        %v1275 = vunpack.c.l.b16 %v1022
        %v1276 = vunpack.c.h.b16 %v1022
        %v1277 = vunpack.c.l.b16 %v1023
        %v1278 = vunpack.c.h.b16 %v1023
        %v1279 = vunpack.c.l.b16 %v1024
        %v1280 = vunpack.c.h.b16 %v1024
        %v1281 = vunpack.c.l.b16 %v1025
        %v1282 = vunpack.c.h.b16 %v1025
        %v1283 = vunpack.c.l.b16 %v1026
        %v1284 = vunpack.c.h.b16 %v1026
        %v1285 = vpack.c.b16 %v1277, %v1269
        %v1286 = vpack.c.b16 %v1278, %v1270
        %v1287 = vpack.c.b16 %v1279, %v1271
        %v1288 = vpack.c.b16 %v1280, %v1272
        %v1289 = vpack.c.b16 %v1281, %v1273
        %v1290 = vpack.c.b16 %v1282, %v1274
        %v1291 = vpack.c.b16 %v1283, %v1275
        %v1292 = vpack.c.b16 %v1284, %v1276
        %1293 = vrot.lane.b32.xlu0 %v1285, 124
        %v1294 = vpop.permute.xlu0 %1293
        %1295 = vrot.lane.b32.xlu0 %v1286, 124
        %v1296 = vpop.permute.xlu0 %1295
        %1297 = vrot.lane.b32.xlu0 %v1287, 124
        %v1298 = vpop.permute.xlu0 %1297
        %1299 = vrot.lane.b32.xlu0 %v1288, 124
        %v1300 = vpop.permute.xlu0 %1299
        %1301 = vrot.lane.b32.xlu0 %v1289, 124
        %v1302 = vpop.permute.xlu0 %1301
        %1303 = vrot.lane.b32.xlu0 %v1290, 124
        %v1304 = vpop.permute.xlu0 %1303
        %1305 = vrot.lane.b32.xlu0 %v1291, 124
        %v1306 = vpop.permute.xlu0 %1305
        %1307 = vrot.lane.b32.xlu0 %v1292, 124
        %v1308 = vpop.permute.xlu0 %1307
        %v1309 = vsel %vm1123, %v1294, %v1296
        %v1310 = vsel %vm1123, %v1296, %v1298
        %v1311 = vsel %vm1123, %v1298, %v1300
        %v1312 = vsel %vm1123, %v1300, %v1302
        %v1313 = vsel %vm1123, %v1302, %v1304
        %v1314 = vsel %vm1123, %v1304, %v1306
        %v1315 = vsel %vm1123, %v1306, %v1308
        %v1316 = vld [vmem:[%s4] sm:$0xff]
        %v1317 = vld [vmem:[%s4 + $0x8] sm:$0xff]
        %v1318 = vld [vmem:[%s4 + $0x10] sm:$0xff]
        %v1319 = vld [vmem:[%s4 + $0x18] sm:$0xff]
        %v1320 = vld [vmem:[%s4 + $0x20] sm:$0xff]
        %v1321 = vld [vmem:[%s4 + $0x28] sm:$0xff]
        %v1322 = vld [vmem:[%s4 + $0x30] sm:$0xff]
        %v1323 = vld [vmem:[%s4 + $0x38] sm:$0xff]
        %v1324 = vld [vmem:[%s4 + $0x40] sm:$0xff]
        %v1325 = vld [vmem:[%s4 + $0x48] sm:$0xff]
        %v1326 = vld [vmem:[%s4 + $0x50] sm:$0xff]
        %v1327 = vld [vmem:[%s4 + $0x58] sm:$0xff]
        %v1328 = vld [vmem:[%s4 + $0x60] sm:$0xff]
        %v1329 = vld [vmem:[%s4 + $0x68] sm:$0xff]
        %v1330 = vld [vmem:[%s4 + $0x70] sm:$0xff]
        %v1331 = vld [vmem:[%s4 + $0x78] sm:$0xff]
        %v1332 = vld [vmem:[%s5] sm:$0xff]
        %v1333 = vld [vmem:[%s5 + $0x8] sm:$0xff]
        %v1334 = vld [vmem:[%s5 + $0x10] sm:$0xff]
        %v1335 = vld [vmem:[%s5 + $0x18] sm:$0xff]
        %v1336 = vld [vmem:[%s5 + $0x20] sm:$0xff]
        %v1337 = vld [vmem:[%s5 + $0x28] sm:$0xff]
        %v1338 = vld [vmem:[%s5 + $0x30] sm:$0xff]
        %v1339 = vld [vmem:[%s5 + $0x38] sm:$0xff]
        %v1340 = vld [vmem:[%s5 + $0x40] sm:$0xff]
        %v1341 = vld [vmem:[%s5 + $0x48] sm:$0xff]
        %v1342 = vld [vmem:[%s5 + $0x50] sm:$0xff]
        %v1343 = vld [vmem:[%s5 + $0x58] sm:$0xff]
        %v1344 = vld [vmem:[%s5 + $0x60] sm:$0xff]
        %v1345 = vld [vmem:[%s5 + $0x68] sm:$0xff]
        %v1346 = vld [vmem:[%s5 + $0x70] sm:$0xff]
        %v1347 = vld [vmem:[%s5 + $0x78] sm:$0xff]
        %1349 = vset.pattern.permute.xlu0 0
        %1350 = vperm.xlu0 %1349, %v1332
        %v1351 = vpop.permute.xlu0 %1350
        %1354 = vset.pattern.permute.xlu0 0
        %1355 = vperm.xlu0 %1354, %v1333
        %v1356 = vpop.permute.xlu0 %1355
        %1359 = vset.pattern.permute.xlu0 0
        %1360 = vperm.xlu0 %1359, %v1334
        %v1361 = vpop.permute.xlu0 %1360
        %1364 = vset.pattern.permute.xlu0 0
        %1365 = vperm.xlu0 %1364, %v1335
        %v1366 = vpop.permute.xlu0 %1365
        %1369 = vset.pattern.permute.xlu0 0
        %1370 = vperm.xlu0 %1369, %v1336
        %v1371 = vpop.permute.xlu0 %1370
        %1374 = vset.pattern.permute.xlu0 0
        %1375 = vperm.xlu0 %1374, %v1337
        %v1376 = vpop.permute.xlu0 %1375
        %1379 = vset.pattern.permute.xlu0 0
        %1380 = vperm.xlu0 %1379, %v1338
        %v1381 = vpop.permute.xlu0 %1380
        %1384 = vset.pattern.permute.xlu0 0
        %1385 = vperm.xlu0 %1384, %v1339
        %v1386 = vpop.permute.xlu0 %1385
        %1389 = vset.pattern.permute.xlu0 0
        %1390 = vperm.xlu0 %1389, %v1340
        %v1391 = vpop.permute.xlu0 %1390
        %1394 = vset.pattern.permute.xlu0 0
        %1395 = vperm.xlu0 %1394, %v1341
        %v1396 = vpop.permute.xlu0 %1395
        %1399 = vset.pattern.permute.xlu0 0
        %1400 = vperm.xlu0 %1399, %v1342
        %v1401 = vpop.permute.xlu0 %1400
        %1404 = vset.pattern.permute.xlu0 0
        %1405 = vperm.xlu0 %1404, %v1343
        %v1406 = vpop.permute.xlu0 %1405
        %1409 = vset.pattern.permute.xlu0 0
        %1410 = vperm.xlu0 %1409, %v1344
        %v1411 = vpop.permute.xlu0 %1410
        %1414 = vset.pattern.permute.xlu0 0
        %1415 = vperm.xlu0 %1414, %v1345
        %v1416 = vpop.permute.xlu0 %1415
        %1419 = vset.pattern.permute.xlu0 0
        %1420 = vperm.xlu0 %1419, %v1346
        %v1421 = vpop.permute.xlu0 %1420
        %1424 = vset.pattern.permute.xlu0 0
        %1425 = vperm.xlu0 %1424, %v1347
        %v1426 = vpop.permute.xlu0 %1425
        %v1444 = vunpack.c.l.b16 %v1316
        %v1445 = vunpack.c.h.b16 %v1316
        %v1446 = vunpack.c.l.b16 %v1317
        %v1447 = vunpack.c.h.b16 %v1317
        %v1448 = vunpack.c.l.b16 %v1318
        %v1449 = vunpack.c.h.b16 %v1318
        %v1450 = vunpack.c.l.b16 %v1319
        %v1451 = vunpack.c.h.b16 %v1319
        %v1452 = vunpack.c.l.b16 %v1320
        %v1453 = vunpack.c.h.b16 %v1320
        %v1454 = vunpack.c.l.b16 %v1321
        %v1455 = vunpack.c.h.b16 %v1321
        %v1456 = vunpack.c.l.b16 %v1322
        %v1457 = vunpack.c.h.b16 %v1322
        %v1458 = vunpack.c.l.b16 %v1323
        %v1459 = vunpack.c.h.b16 %v1323
        %v1460 = vunpack.c.l.b16 %v1324
        %v1461 = vunpack.c.h.b16 %v1324
        %v1462 = vunpack.c.l.b16 %v1325
        %v1463 = vunpack.c.h.b16 %v1325
        %v1464 = vunpack.c.l.b16 %v1326
        %v1465 = vunpack.c.h.b16 %v1326
        %v1466 = vunpack.c.l.b16 %v1327
        %v1467 = vunpack.c.h.b16 %v1327
        %v1468 = vunpack.c.l.b16 %v1328
        %v1469 = vunpack.c.h.b16 %v1328
        %v1470 = vunpack.c.l.b16 %v1329
        %v1471 = vunpack.c.h.b16 %v1329
        %v1472 = vunpack.c.l.b16 %v1330
        %v1473 = vunpack.c.h.b16 %v1330
        %v1474 = vunpack.c.l.b16 %v1331
        %v1475 = vunpack.c.h.b16 %v1331
        %v1476 = vpack.c.b16 %v1446, %v1444
        %v1477 = vpack.c.b16 %v1447, %v1445
        %v1478 = vpack.c.b16 %v1450, %v1448
        %v1479 = vpack.c.b16 %v1451, %v1449
        %v1480 = vpack.c.b16 %v1454, %v1452
        %v1481 = vpack.c.b16 %v1455, %v1453
        %v1482 = vpack.c.b16 %v1458, %v1456
        %v1483 = vpack.c.b16 %v1459, %v1457
        %v1484 = vpack.c.b16 %v1462, %v1460
        %v1485 = vpack.c.b16 %v1463, %v1461
        %v1486 = vpack.c.b16 %v1466, %v1464
        %v1487 = vpack.c.b16 %v1467, %v1465
        %v1488 = vpack.c.b16 %v1470, %v1468
        %v1489 = vpack.c.b16 %v1471, %v1469
        %v1490 = vpack.c.b16 %v1474, %v1472
        %v1491 = vpack.c.b16 %v1475, %v1473
        %1504 = vrot.lane.b32.xlu0 %v1011, 4
        %v1505 = vpop.permute.xlu0 %1504
        %1506 = vrot.lane.b32.xlu0 %v900, 4
        %v1507 = vpop.permute.xlu0 %1506
        %1508 = vrot.lane.b32.xlu0 %v901, 4
        %v1509 = vpop.permute.xlu0 %1508
        %1510 = vrot.lane.b32.xlu0 %v902, 4
        %v1511 = vpop.permute.xlu0 %1510
        %1512 = vrot.lane.b32.xlu0 %v903, 4
        %v1513 = vpop.permute.xlu0 %1512
        %1514 = vrot.lane.b32.xlu0 %v904, 4
        %v1515 = vpop.permute.xlu0 %1514
        %1516 = vrot.lane.b32.xlu0 %v905, 4
        %v1517 = vpop.permute.xlu0 %1516
        %1518 = vrot.lane.b32.xlu0 %v906, 4
        %v1519 = vpop.permute.xlu0 %1518
        %1520 = vrot.lane.b32.xlu0 %v907, 4
        %v1521 = vpop.permute.xlu0 %1520
        %1522 = vrot.lane.b32.xlu0 %v1013, 4
        %v1523 = vpop.permute.xlu0 %1522
        %1524 = vrot.lane.b32.xlu0 %v908, 4
        %v1525 = vpop.permute.xlu0 %1524
        %1526 = vrot.lane.b32.xlu0 %v909, 4
        %v1527 = vpop.permute.xlu0 %1526
        %1528 = vrot.lane.b32.xlu0 %v910, 4
        %v1529 = vpop.permute.xlu0 %1528
        %1530 = vrot.lane.b32.xlu0 %v911, 4
        %v1531 = vpop.permute.xlu0 %1530
        %1532 = vrot.lane.b32.xlu0 %v912, 4
        %v1533 = vpop.permute.xlu0 %1532
        %1534 = vrot.lane.b32.xlu0 %v913, 4
        %v1535 = vpop.permute.xlu0 %1534
        %1536 = vrot.lane.b32.xlu0 %v914, 4
        %v1537 = vpop.permute.xlu0 %1536
        %1538 = vrot.lane.b32.xlu0 %v915, 4
        %v1539 = vpop.permute.xlu0 %1538
        %1540 = vrot.lane.b32.xlu0 %v1015, 4
        %v1541 = vpop.permute.xlu0 %1540
        %1542 = vrot.lane.b32.xlu0 %v916, 4
        %v1543 = vpop.permute.xlu0 %1542
        %1544 = vrot.lane.b32.xlu0 %v917, 4
        %v1545 = vpop.permute.xlu0 %1544
        %1546 = vrot.lane.b32.xlu0 %v918, 4
        %v1547 = vpop.permute.xlu0 %1546
        %1548 = vrot.lane.b32.xlu0 %v919, 4
        %v1549 = vpop.permute.xlu0 %1548
        %1550 = vrot.lane.b32.xlu0 %v920, 4
        %v1551 = vpop.permute.xlu0 %1550
        %1552 = vrot.lane.b32.xlu0 %v921, 4
        %v1553 = vpop.permute.xlu0 %1552
        %1554 = vrot.lane.b32.xlu0 %v922, 4
        %v1555 = vpop.permute.xlu0 %1554
        %1556 = vrot.lane.b32.xlu0 %v923, 4
        %v1557 = vpop.permute.xlu0 %1556
        %1558 = vrot.lane.b32.xlu0 %v1017, 4
        %v1559 = vpop.permute.xlu0 %1558
        %1560 = vrot.lane.b32.xlu0 %v924, 4
        %v1561 = vpop.permute.xlu0 %1560
        %1562 = vrot.lane.b32.xlu0 %v925, 4
        %v1563 = vpop.permute.xlu0 %1562
        %1564 = vrot.lane.b32.xlu0 %v926, 4
        %v1565 = vpop.permute.xlu0 %1564
        %1566 = vrot.lane.b32.xlu0 %v927, 4
        %v1567 = vpop.permute.xlu0 %1566
        %1568 = vrot.lane.b32.xlu0 %v928, 4
        %v1569 = vpop.permute.xlu0 %1568
        %1570 = vrot.lane.b32.xlu0 %v929, 4
        %v1571 = vpop.permute.xlu0 %1570
        %1572 = vrot.lane.b32.xlu0 %v930, 4
        %v1573 = vpop.permute.xlu0 %1572
        %1574 = vrot.lane.b32.xlu0 %v931, 4
        %v1575 = vpop.permute.xlu0 %1574
        %1576 = vrot.lane.b32.xlu0 %v1060, 4
        %v1577 = vpop.permute.xlu0 %1576
        %1578 = vrot.lane.b32.xlu0 %v1124, 4
        %v1579 = vpop.permute.xlu0 %1578
        %1580 = vrot.lane.b32.xlu0 %v1125, 4
        %v1581 = vpop.permute.xlu0 %1580
        %1582 = vrot.lane.b32.xlu0 %v1126, 4
        %v1583 = vpop.permute.xlu0 %1582
        %1584 = vrot.lane.b32.xlu0 %v1127, 4
        %v1585 = vpop.permute.xlu0 %1584
        %1586 = vrot.lane.b32.xlu0 %v1128, 4
        %v1587 = vpop.permute.xlu0 %1586
        %1588 = vrot.lane.b32.xlu0 %v1129, 4
        %v1589 = vpop.permute.xlu0 %1588
        %1590 = vrot.lane.b32.xlu0 %v1130, 4
        %v1591 = vpop.permute.xlu0 %1590
        %1592 = vrot.lane.b32.xlu0 %v1074, 4
        %v1593 = vpop.permute.xlu0 %1592
        %1594 = vrot.lane.b32.xlu0 %v1076, 4
        %v1595 = vpop.permute.xlu0 %1594
        %1596 = vrot.lane.b32.xlu0 %v1131, 4
        %v1597 = vpop.permute.xlu0 %1596
        %1598 = vrot.lane.b32.xlu0 %v1132, 4
        %v1599 = vpop.permute.xlu0 %1598
        %1600 = vrot.lane.b32.xlu0 %v1133, 4
        %v1601 = vpop.permute.xlu0 %1600
        %1602 = vrot.lane.b32.xlu0 %v1134, 4
        %v1603 = vpop.permute.xlu0 %1602
        %1604 = vrot.lane.b32.xlu0 %v1135, 4
        %v1605 = vpop.permute.xlu0 %1604
        %1606 = vrot.lane.b32.xlu0 %v1136, 4
        %v1607 = vpop.permute.xlu0 %1606
        %1608 = vrot.lane.b32.xlu0 %v1137, 4
        %v1609 = vpop.permute.xlu0 %1608
        %1610 = vrot.lane.b32.xlu0 %v1090, 4
        %v1611 = vpop.permute.xlu0 %1610
        %1612 = vrot.lane.b32.xlu0 %v1092, 4
        %v1613 = vpop.permute.xlu0 %1612
        %1614 = vrot.lane.b32.xlu0 %v1138, 4
        %v1615 = vpop.permute.xlu0 %1614
        %1616 = vrot.lane.b32.xlu0 %v1139, 4
        %v1617 = vpop.permute.xlu0 %1616
        %1618 = vrot.lane.b32.xlu0 %v1140, 4
        %v1619 = vpop.permute.xlu0 %1618
        %1620 = vrot.lane.b32.xlu0 %v1141, 4
        %v1621 = vpop.permute.xlu0 %1620
        %1622 = vrot.lane.b32.xlu0 %v1142, 4
        %v1623 = vpop.permute.xlu0 %1622
        %1624 = vrot.lane.b32.xlu0 %v1143, 4
        %v1625 = vpop.permute.xlu0 %1624
        %1626 = vrot.lane.b32.xlu0 %v1144, 4
        %v1627 = vpop.permute.xlu0 %1626
        %1628 = vrot.lane.b32.xlu0 %v1106, 4
        %v1629 = vpop.permute.xlu0 %1628
        %1630 = vrot.lane.b32.xlu0 %v1108, 4
        %v1631 = vpop.permute.xlu0 %1630
        %1632 = vrot.lane.b32.xlu0 %v1145, 4
        %v1633 = vpop.permute.xlu0 %1632
        %1634 = vrot.lane.b32.xlu0 %v1146, 4
        %v1635 = vpop.permute.xlu0 %1634
        %1636 = vrot.lane.b32.xlu0 %v1147, 4
        %v1637 = vpop.permute.xlu0 %1636
        %1638 = vrot.lane.b32.xlu0 %v1148, 4
        %v1639 = vpop.permute.xlu0 %1638
        %1640 = vrot.lane.b32.xlu0 %v1149, 4
        %v1641 = vpop.permute.xlu0 %1640
        %1642 = vrot.lane.b32.xlu0 %v1150, 4
        %v1643 = vpop.permute.xlu0 %1642
        %1644 = vrot.lane.b32.xlu0 %v1151, 4
        %v1645 = vpop.permute.xlu0 %1644
        %1646 = vrot.lane.b32.xlu0 %v1122, 4
        %v1647 = vpop.permute.xlu0 %1646
        %1648 = vrot.lane.b32.xlu0 %v1157, 4
        %v1649 = vpop.permute.xlu0 %1648
        %1650 = vrot.lane.b32.xlu0 %v1229, 4
        %v1651 = vpop.permute.xlu0 %1650
        %1652 = vrot.lane.b32.xlu0 %v1230, 4
        %v1653 = vpop.permute.xlu0 %1652
        %1654 = vrot.lane.b32.xlu0 %v1231, 4
        %v1655 = vpop.permute.xlu0 %1654
        %1656 = vrot.lane.b32.xlu0 %v1232, 4
        %v1657 = vpop.permute.xlu0 %1656
        %1658 = vrot.lane.b32.xlu0 %v1233, 4
        %v1659 = vpop.permute.xlu0 %1658
        %1660 = vrot.lane.b32.xlu0 %v1234, 4
        %v1661 = vpop.permute.xlu0 %1660
        %1662 = vrot.lane.b32.xlu0 %v1235, 4
        %v1663 = vpop.permute.xlu0 %1662
        %1664 = vrot.lane.b32.xlu0 %v1236, 4
        %v1665 = vpop.permute.xlu0 %1664
        %1666 = vrot.lane.b32.xlu0 %v1175, 4
        %v1667 = vpop.permute.xlu0 %1666
        %1668 = vrot.lane.b32.xlu0 %v1237, 4
        %v1669 = vpop.permute.xlu0 %1668
        %1670 = vrot.lane.b32.xlu0 %v1238, 4
        %v1671 = vpop.permute.xlu0 %1670
        %1672 = vrot.lane.b32.xlu0 %v1239, 4
        %v1673 = vpop.permute.xlu0 %1672
        %1674 = vrot.lane.b32.xlu0 %v1240, 4
        %v1675 = vpop.permute.xlu0 %1674
        %1676 = vrot.lane.b32.xlu0 %v1241, 4
        %v1677 = vpop.permute.xlu0 %1676
        %1678 = vrot.lane.b32.xlu0 %v1242, 4
        %v1679 = vpop.permute.xlu0 %1678
        %1680 = vrot.lane.b32.xlu0 %v1243, 4
        %v1681 = vpop.permute.xlu0 %1680
        %1682 = vrot.lane.b32.xlu0 %v1244, 4
        %v1683 = vpop.permute.xlu0 %1682
        %1684 = vrot.lane.b32.xlu0 %v1193, 4
        %v1685 = vpop.permute.xlu0 %1684
        %1686 = vrot.lane.b32.xlu0 %v1245, 4
        %v1687 = vpop.permute.xlu0 %1686
        %1688 = vrot.lane.b32.xlu0 %v1246, 4
        %v1689 = vpop.permute.xlu0 %1688
        %1690 = vrot.lane.b32.xlu0 %v1247, 4
        %v1691 = vpop.permute.xlu0 %1690
        %1692 = vrot.lane.b32.xlu0 %v1248, 4
        %v1693 = vpop.permute.xlu0 %1692
        %1694 = vrot.lane.b32.xlu0 %v1249, 4
        %v1695 = vpop.permute.xlu0 %1694
        %1696 = vrot.lane.b32.xlu0 %v1250, 4
        %v1697 = vpop.permute.xlu0 %1696
        %1698 = vrot.lane.b32.xlu0 %v1251, 4
        %v1699 = vpop.permute.xlu0 %1698
        %1700 = vrot.lane.b32.xlu0 %v1252, 4
        %v1701 = vpop.permute.xlu0 %1700
        %1702 = vrot.lane.b32.xlu0 %v1211, 4
        %v1703 = vpop.permute.xlu0 %1702
        %1704 = vrot.lane.b32.xlu0 %v1253, 4
        %v1705 = vpop.permute.xlu0 %1704
        %1706 = vrot.lane.b32.xlu0 %v1254, 4
        %v1707 = vpop.permute.xlu0 %1706
        %1708 = vrot.lane.b32.xlu0 %v1255, 4
        %v1709 = vpop.permute.xlu0 %1708
        %1710 = vrot.lane.b32.xlu0 %v1256, 4
        %v1711 = vpop.permute.xlu0 %1710
        %1712 = vrot.lane.b32.xlu0 %v1257, 4
        %v1713 = vpop.permute.xlu0 %1712
        %1714 = vrot.lane.b32.xlu0 %v1258, 4
        %v1715 = vpop.permute.xlu0 %1714
        %1716 = vrot.lane.b32.xlu0 %v1259, 4
        %v1717 = vpop.permute.xlu0 %1716
        %1718 = vrot.lane.b32.xlu0 %v1260, 4
        %v1719 = vpop.permute.xlu0 %1718
        %1720 = vrot.lane.b32.xlu0 %v1294, 4
        %v1721 = vpop.permute.xlu0 %1720
        %1722 = vrot.lane.b32.xlu0 %v1309, 4
        %v1723 = vpop.permute.xlu0 %1722
        %1724 = vrot.lane.b32.xlu0 %v1310, 4
        %v1725 = vpop.permute.xlu0 %1724
        %1726 = vrot.lane.b32.xlu0 %v1311, 4
        %v1727 = vpop.permute.xlu0 %1726
        %1728 = vrot.lane.b32.xlu0 %v1312, 4
        %v1729 = vpop.permute.xlu0 %1728
        %1730 = vrot.lane.b32.xlu0 %v1313, 4
        %v1731 = vpop.permute.xlu0 %1730
        %1732 = vrot.lane.b32.xlu0 %v1314, 4
        %v1733 = vpop.permute.xlu0 %1732
        %1734 = vrot.lane.b32.xlu0 %v1315, 4
        %v1735 = vpop.permute.xlu0 %1734
        %1736 = vrot.lane.b32.xlu0 %v1308, 4
        %v1737 = vpop.permute.xlu0 %1736
        %vm1738 = vcmask 31744
        %v1739 = vsel %vm1738, %v1505, %v1507
        %v1740 = vsel %vm1738, %v1507, %v1509
        %v1741 = vsel %vm1738, %v1509, %v1511
        %v1742 = vsel %vm1738, %v1511, %v1513
        %v1743 = vsel %vm1738, %v1513, %v1515
        %v1744 = vsel %vm1738, %v1515, %v1517
        %v1745 = vsel %vm1738, %v1517, %v1519
        %v1746 = vsel %vm1738, %v1519, %v1521
        %v1747 = vsel %vm1738, %v1523, %v1525
        %v1748 = vsel %vm1738, %v1525, %v1527
        %v1749 = vsel %vm1738, %v1527, %v1529
        %v1750 = vsel %vm1738, %v1529, %v1531
        %v1751 = vsel %vm1738, %v1531, %v1533
        %v1752 = vsel %vm1738, %v1533, %v1535
        %v1753 = vsel %vm1738, %v1535, %v1537
        %v1754 = vsel %vm1738, %v1537, %v1539
        %v1755 = vsel %vm1738, %v1541, %v1543
        %v1756 = vsel %vm1738, %v1543, %v1545
        %v1757 = vsel %vm1738, %v1545, %v1547
        %v1758 = vsel %vm1738, %v1547, %v1549
        %v1759 = vsel %vm1738, %v1549, %v1551
        %v1760 = vsel %vm1738, %v1551, %v1553
        %v1761 = vsel %vm1738, %v1553, %v1555
        %v1762 = vsel %vm1738, %v1555, %v1557
        %v1763 = vsel %vm1738, %v1559, %v1561
        %v1764 = vsel %vm1738, %v1561, %v1563
        %v1765 = vsel %vm1738, %v1563, %v1565
        %v1766 = vsel %vm1738, %v1565, %v1567
        %v1767 = vsel %vm1738, %v1567, %v1569
        %v1768 = vsel %vm1738, %v1569, %v1571
        %v1769 = vsel %vm1738, %v1571, %v1573
        %v1770 = vsel %vm1738, %v1573, %v1575
        %v1771 = vsel %vm1738, %v1577, %v1579
        %v1772 = vsel %vm1738, %v1579, %v1581
        %v1773 = vsel %vm1738, %v1581, %v1583
        %v1774 = vsel %vm1738, %v1583, %v1585
        %v1775 = vsel %vm1738, %v1585, %v1587
        %v1776 = vsel %vm1738, %v1587, %v1589
        %v1777 = vsel %vm1738, %v1589, %v1591
        %v1778 = vsel %vm1738, %v1591, %v1593
        %v1779 = vsel %vm1738, %v1595, %v1597
        %v1780 = vsel %vm1738, %v1597, %v1599
        %v1781 = vsel %vm1738, %v1599, %v1601
        %v1782 = vsel %vm1738, %v1601, %v1603
        %v1783 = vsel %vm1738, %v1603, %v1605
        %v1784 = vsel %vm1738, %v1605, %v1607
        %v1785 = vsel %vm1738, %v1607, %v1609
        %v1786 = vsel %vm1738, %v1609, %v1611
        %v1787 = vsel %vm1738, %v1613, %v1615
        %v1788 = vsel %vm1738, %v1615, %v1617
        %v1789 = vsel %vm1738, %v1617, %v1619
        %v1790 = vsel %vm1738, %v1619, %v1621
        %v1791 = vsel %vm1738, %v1621, %v1623
        %v1792 = vsel %vm1738, %v1623, %v1625
        %v1793 = vsel %vm1738, %v1625, %v1627
        %v1794 = vsel %vm1738, %v1627, %v1629
        %v1795 = vsel %vm1738, %v1631, %v1633
        %v1796 = vsel %vm1738, %v1633, %v1635
        %v1797 = vsel %vm1738, %v1635, %v1637
        %v1798 = vsel %vm1738, %v1637, %v1639
        %v1799 = vsel %vm1738, %v1639, %v1641
        %v1800 = vsel %vm1738, %v1641, %v1643
        %v1801 = vsel %vm1738, %v1643, %v1645
        %v1802 = vsel %vm1738, %v1645, %v1647
        %v1803 = vsel %vm1738, %v1649, %v1651
        %v1804 = vsel %vm1738, %v1651, %v1653
        %v1805 = vsel %vm1738, %v1653, %v1655
        %v1806 = vsel %vm1738, %v1655, %v1657
        %v1807 = vsel %vm1738, %v1657, %v1659
        %v1808 = vsel %vm1738, %v1659, %v1661
        %v1809 = vsel %vm1738, %v1661, %v1663
        %v1810 = vsel %vm1738, %v1663, %v1665
        %v1811 = vsel %vm1738, %v1667, %v1669
        %v1812 = vsel %vm1738, %v1669, %v1671
        %v1813 = vsel %vm1738, %v1671, %v1673
        %v1814 = vsel %vm1738, %v1673, %v1675
        %v1815 = vsel %vm1738, %v1675, %v1677
        %v1816 = vsel %vm1738, %v1677, %v1679
        %v1817 = vsel %vm1738, %v1679, %v1681
        %v1818 = vsel %vm1738, %v1681, %v1683
        %v1819 = vsel %vm1738, %v1685, %v1687
        %v1820 = vsel %vm1738, %v1687, %v1689
        %v1821 = vsel %vm1738, %v1689, %v1691
        %v1822 = vsel %vm1738, %v1691, %v1693
        %v1823 = vsel %vm1738, %v1693, %v1695
        %v1824 = vsel %vm1738, %v1695, %v1697
        %v1825 = vsel %vm1738, %v1697, %v1699
        %v1826 = vsel %vm1738, %v1699, %v1701
        %v1827 = vsel %vm1738, %v1703, %v1705
        %v1828 = vsel %vm1738, %v1705, %v1707
        %v1829 = vsel %vm1738, %v1707, %v1709
        %v1830 = vsel %vm1738, %v1709, %v1711
        %v1831 = vsel %vm1738, %v1711, %v1713
        %v1832 = vsel %vm1738, %v1713, %v1715
        %v1833 = vsel %vm1738, %v1715, %v1717
        %v1834 = vsel %vm1738, %v1717, %v1719
        %v1835 = vsel %vm1738, %v1721, %v1723
        %v1836 = vsel %vm1738, %v1723, %v1725
        %v1837 = vsel %vm1738, %v1725, %v1727
        %v1838 = vsel %vm1738, %v1727, %v1729
        %v1839 = vsel %vm1738, %v1729, %v1731
        %v1840 = vsel %vm1738, %v1731, %v1733
        %v1841 = vsel %vm1738, %v1733, %v1735
        %v1842 = vsel %vm1738, %v1735, %v1737
        %vm1947 = vcmask 654336
        %v1949 = vsel %vm1947, %v1477, 0
        %v1952 = vsel %vm1947, %v1479, 0
        %v1955 = vsel %vm1947, %v1481, 0
        %v1958 = vsel %vm1947, %v1483, 0
        %v1961 = vsel %vm1947, %v1485, 0
        %v1964 = vsel %vm1947, %v1487, 0
        %v1967 = vsel %vm1947, %v1489, 0
        %v1970 = vsel %vm1947, %v1491, 0
        %1972 = vmatprep.subr.bf16.mxu0 %v1740
        %1973 = vmatpush1.bf16.msra.mxu0 %v1739
        %1974 = vmatprep.subr.bf16.mxu0 %v1748
        %1975 = vmatpush1.bf16.msra.mxu0 %v1747
        %1976 = vmatprep.subr.bf16.mxu0 %v1756
        %1977 = vmatpush1.bf16.msra.mxu0 %v1755
        %1978 = vmatprep.subr.bf16.mxu0 %v1764
        %1979 = vmatpush1.bf16.msra.mxu0 %v1763
        %1980 = vmatprep.subr.bf16.mxu0 %v1772
        %1981 = vmatpush1.bf16.msra.mxu0 %v1771
        %1982 = vmatprep.subr.bf16.mxu0 %v1780
        %1983 = vmatpush1.bf16.msra.mxu0 %v1779
        %1984 = vmatprep.subr.bf16.mxu0 %v1788
        %1985 = vmatpush1.bf16.msra.mxu0 %v1787
        %1986 = vmatprep.subr.bf16.mxu0 %v1796
        %1987 = vmatpush1.bf16.msra.mxu0 %v1795
        %1988 = vmatprep.subr.bf16.mxu0 %v1804
        %1989 = vmatpush1.bf16.msra.mxu0 %v1803
        %1990 = vmatprep.subr.bf16.mxu0 %v1812
        %1991 = vmatpush1.bf16.msra.mxu0 %v1811
        %1992 = vmatprep.subr.bf16.mxu0 %v1820
        %1993 = vmatpush1.bf16.msra.mxu0 %v1819
        %1994 = vmatprep.subr.bf16.mxu0 %v1828
        %1995 = vmatpush1.bf16.msra.mxu0 %v1827
        %1996 = vmatprep.subr.bf16.mxu0 %v1836
        %1997 = vmatpush1.bf16.msra.mxu0 %v1835
        %1998 = vmatprep.subr.bf16.mxu0 0
        %1999 = vmatpush1.bf16.msra.mxu0 0
        %2000 = vmatprep.subr.bf16.mxu0 0
        %2001 = vmatpush1.bf16.msra.mxu0 0
        %2002 = vmatprep.subr.bf16.mxu0 0
        %2003 = vmatpush1.bf16.msra.mxu0 0
        %2004 = vmatprep.mubr.bf16.mxu0 %v1949
        %2005 = vmatmul.mubr.bf16.gmra.mrb[0].mxu0 %v1476
        %v2006 = vpop.f32.mrb[0].mxu0
        %v2007 = vadd.f32 %v1351, %v2006
        %v2008 = vpop.f32.mrb[0].mxu0
        %v2009 = vadd.f32 %v1351, %v2008
        %v2010 = vpop.f32.mrb[0].mxu0
        %v2011 = vadd.f32 %v1356, %v2010
        %v2012 = vpop.f32.mrb[0].mxu0
        %v2013 = vadd.f32 %v1356, %v2012
        %2014 = vmatprep.mubr.bf16.mxu0 %v1952
        %2015 = vmatmul.mubr.bf16.gmra.mrb[0].mxu0 %v1478
        %v2016 = vpop.f32.mrb[0].mxu0
        %v2017 = vadd.f32 %v1361, %v2016
        %v2018 = vpop.f32.mrb[0].mxu0
        %v2019 = vadd.f32 %v1361, %v2018
        %v2020 = vpop.f32.mrb[0].mxu0
        %v2021 = vadd.f32 %v1366, %v2020
        %v2022 = vpop.f32.mrb[0].mxu0
        %v2023 = vadd.f32 %v1366, %v2022
        %2024 = vmatprep.mubr.bf16.mxu0 %v1955
        %2025 = vmatmul.mubr.bf16.gmra.mrb[0].mxu0 %v1480
        %v2026 = vpop.f32.mrb[0].mxu0
        %v2027 = vadd.f32 %v1371, %v2026
        %v2028 = vpop.f32.mrb[0].mxu0
        %v2029 = vadd.f32 %v1371, %v2028
        %v2030 = vpop.f32.mrb[0].mxu0
        %v2031 = vadd.f32 %v1376, %v2030
        %v2032 = vpop.f32.mrb[0].mxu0
        %v2033 = vadd.f32 %v1376, %v2032
        %2034 = vmatprep.mubr.bf16.mxu0 %v1958
        %2035 = vmatmul.mubr.bf16.gmra.mrb[0].mxu0 %v1482
        %v2036 = vpop.f32.mrb[0].mxu0
        %v2037 = vadd.f32 %v1381, %v2036
        %v2038 = vpop.f32.mrb[0].mxu0
        %v2039 = vadd.f32 %v1381, %v2038
        %v2040 = vpop.f32.mrb[0].mxu0
        %v2041 = vadd.f32 %v1386, %v2040
        %v2042 = vpop.f32.mrb[0].mxu0
        %v2043 = vadd.f32 %v1386, %v2042
        %2044 = vmatprep.mubr.bf16.mxu0 %v1961
        %2045 = vmatmul.mubr.bf16.gmra.mrb[0].mxu0 %v1484
        %v2046 = vpop.f32.mrb[0].mxu0
        %v2047 = vadd.f32 %v1391, %v2046
        %v2048 = vpop.f32.mrb[0].mxu0
        %v2049 = vadd.f32 %v1391, %v2048
        %v2050 = vpop.f32.mrb[0].mxu0
        %v2051 = vadd.f32 %v1396, %v2050
        %v2052 = vpop.f32.mrb[0].mxu0
        %v2053 = vadd.f32 %v1396, %v2052
        %2054 = vmatprep.mubr.bf16.mxu0 %v1964
        %2055 = vmatmul.mubr.bf16.gmra.mrb[0].mxu0 %v1486
        %v2056 = vpop.f32.mrb[0].mxu0
        %v2057 = vadd.f32 %v1401, %v2056
        %v2058 = vpop.f32.mrb[0].mxu0
        %v2059 = vadd.f32 %v1401, %v2058
        %v2060 = vpop.f32.mrb[0].mxu0
        %v2061 = vadd.f32 %v1406, %v2060
        %v2062 = vpop.f32.mrb[0].mxu0
        %v2063 = vadd.f32 %v1406, %v2062
        %2064 = vmatprep.mubr.bf16.mxu0 %v1967
        %2065 = vmatmul.mubr.bf16.gmra.mrb[0].mxu0 %v1488
        %v2066 = vpop.f32.mrb[0].mxu0
        %v2067 = vadd.f32 %v1411, %v2066
        %v2068 = vpop.f32.mrb[0].mxu0
        %v2069 = vadd.f32 %v1411, %v2068
        %v2070 = vpop.f32.mrb[0].mxu0
        %v2071 = vadd.f32 %v1416, %v2070
        %v2072 = vpop.f32.mrb[0].mxu0
        %v2073 = vadd.f32 %v1416, %v2072
        %2074 = vmatprep.mubr.bf16.mxu0 %v1970
        %2075 = vmatmul.mubr.bf16.gmra.mrb[0].mxu0 %v1490
        %v2076 = vpop.f32.mrb[0].mxu0
        %v2077 = vadd.f32 %v1421, %v2076
        %v2078 = vpop.f32.mrb[0].mxu0
        %v2079 = vadd.f32 %v1421, %v2078
        %v2080 = vpop.f32.mrb[0].mxu0
        %v2081 = vadd.f32 %v1426, %v2080
        %v2082 = vpop.f32.mrb[0].mxu0
        %v2083 = vadd.f32 %v1426, %v2082
        %2084 = vdwg.mxu0
        %2085 = vmatprep.subr.bf16.mxu0 %v1742
        %2086 = vmatpush1.bf16.msra.mxu0 %v1741
        %2087 = vmatprep.subr.bf16.mxu0 %v1750
        %2088 = vmatpush1.bf16.msra.mxu0 %v1749
        %2089 = vmatprep.subr.bf16.mxu0 %v1758
        %2090 = vmatpush1.bf16.msra.mxu0 %v1757
        %2091 = vmatprep.subr.bf16.mxu0 %v1766
        %2092 = vmatpush1.bf16.msra.mxu0 %v1765
        %2093 = vmatprep.subr.bf16.mxu0 %v1774
        %2094 = vmatpush1.bf16.msra.mxu0 %v1773
        %2095 = vmatprep.subr.bf16.mxu0 %v1782
        %2096 = vmatpush1.bf16.msra.mxu0 %v1781
        %2097 = vmatprep.subr.bf16.mxu0 %v1790
        %2098 = vmatpush1.bf16.msra.mxu0 %v1789
        %2099 = vmatprep.subr.bf16.mxu0 %v1798
        %2100 = vmatpush1.bf16.msra.mxu0 %v1797
        %2101 = vmatprep.subr.bf16.mxu0 %v1806
        %2102 = vmatpush1.bf16.msra.mxu0 %v1805
        %2103 = vmatprep.subr.bf16.mxu0 %v1814
        %2104 = vmatpush1.bf16.msra.mxu0 %v1813
        %2105 = vmatprep.subr.bf16.mxu0 %v1822
        %2106 = vmatpush1.bf16.msra.mxu0 %v1821
        %2107 = vmatprep.subr.bf16.mxu0 %v1830
        %2108 = vmatpush1.bf16.msra.mxu0 %v1829
        %2109 = vmatprep.subr.bf16.mxu0 %v1838
        %2110 = vmatpush1.bf16.msra.mxu0 %v1837
        %2111 = vmatprep.subr.bf16.mxu0 0
        %2112 = vmatpush1.bf16.msra.mxu0 0
        %2113 = vmatprep.subr.bf16.mxu0 0
        %2114 = vmatpush1.bf16.msra.mxu0 0
        %2115 = vmatprep.subr.bf16.mxu0 0
        %2116 = vmatpush1.bf16.msra.mxu0 0
        %2117 = vmatprep.mubr.bf16.mxu0 %v1949
        %2118 = vmatmul.mubr.bf16.gmra.mrb[0].mxu0 %v1476
        %v2119 = vpop.f32.mrb[0].mxu0
        %v2120 = vadd.f32 %v1351, %v2119
        %v2121 = vpop.f32.mrb[0].mxu0
        %v2122 = vadd.f32 %v1351, %v2121
        %v2123 = vpop.f32.mrb[0].mxu0
        %v2124 = vadd.f32 %v1356, %v2123
        %v2125 = vpop.f32.mrb[0].mxu0
        %v2126 = vadd.f32 %v1356, %v2125
        %2127 = vmatprep.mubr.bf16.mxu0 %v1952
        %2128 = vmatmul.mubr.bf16.gmra.mrb[0].mxu0 %v1478
        %v2129 = vpop.f32.mrb[0].mxu0
        %v2130 = vadd.f32 %v1361, %v2129
        %v2131 = vpop.f32.mrb[0].mxu0
        %v2132 = vadd.f32 %v1361, %v2131
        %v2133 = vpop.f32.mrb[0].mxu0
        %v2134 = vadd.f32 %v1366, %v2133
        %v2135 = vpop.f32.mrb[0].mxu0
        %v2136 = vadd.f32 %v1366, %v2135
        %2137 = vmatprep.mubr.bf16.mxu0 %v1955
        %2138 = vmatmul.mubr.bf16.gmra.mrb[0].mxu0 %v1480
        %v2139 = vpop.f32.mrb[0].mxu0
        %v2140 = vadd.f32 %v1371, %v2139
        %v2141 = vpop.f32.mrb[0].mxu0
        %v2142 = vadd.f32 %v1371, %v2141
        %v2143 = vpop.f32.mrb[0].mxu0
        %v2144 = vadd.f32 %v1376, %v2143
        %v2145 = vpop.f32.mrb[0].mxu0
        %v2146 = vadd.f32 %v1376, %v2145
        %2147 = vmatprep.mubr.bf16.mxu0 %v1958
        %2148 = vmatmul.mubr.bf16.gmra.mrb[0].mxu0 %v1482
        %v2149 = vpop.f32.mrb[0].mxu0
        %v2150 = vadd.f32 %v1381, %v2149
        %v2151 = vpop.f32.mrb[0].mxu0
        %v2152 = vadd.f32 %v1381, %v2151
        %v2153 = vpop.f32.mrb[0].mxu0
        %v2154 = vadd.f32 %v1386, %v2153
        %v2155 = vpop.f32.mrb[0].mxu0
        %v2156 = vadd.f32 %v1386, %v2155
        %2157 = vmatprep.mubr.bf16.mxu0 %v1961
        %2158 = vmatmul.mubr.bf16.gmra.mrb[0].mxu0 %v1484
        %v2159 = vpop.f32.mrb[0].mxu0
        %v2160 = vadd.f32 %v1391, %v2159
        %v2161 = vpop.f32.mrb[0].mxu0
        %v2162 = vadd.f32 %v1391, %v2161
        %v2163 = vpop.f32.mrb[0].mxu0
        %v2164 = vadd.f32 %v1396, %v2163
        %v2165 = vpop.f32.mrb[0].mxu0
        %v2166 = vadd.f32 %v1396, %v2165
        %2167 = vmatprep.mubr.bf16.mxu0 %v1964
        %2168 = vmatmul.mubr.bf16.gmra.mrb[0].mxu0 %v1486
        %v2169 = vpop.f32.mrb[0].mxu0
        %v2170 = vadd.f32 %v1401, %v2169
        %v2171 = vpop.f32.mrb[0].mxu0
        %v2172 = vadd.f32 %v1401, %v2171
        %v2173 = vpop.f32.mrb[0].mxu0
        %v2174 = vadd.f32 %v1406, %v2173
        %v2175 = vpop.f32.mrb[0].mxu0
        %v2176 = vadd.f32 %v1406, %v2175
        %2177 = vmatprep.mubr.bf16.mxu0 %v1967
        %2178 = vmatmul.mubr.bf16.gmra.mrb[0].mxu0 %v1488
        %v2179 = vpop.f32.mrb[0].mxu0
        %v2180 = vadd.f32 %v1411, %v2179
        %v2181 = vpop.f32.mrb[0].mxu0
        %v2182 = vadd.f32 %v1411, %v2181
        %v2183 = vpop.f32.mrb[0].mxu0
        %v2184 = vadd.f32 %v1416, %v2183
        %v2185 = vpop.f32.mrb[0].mxu0
        %v2186 = vadd.f32 %v1416, %v2185
        %2187 = vmatprep.mubr.bf16.mxu0 %v1970
        %2188 = vmatmul.mubr.bf16.gmra.mrb[0].mxu0 %v1490
        %v2189 = vpop.f32.mrb[0].mxu0
        %v2190 = vadd.f32 %v1421, %v2189
        %v2191 = vpop.f32.mrb[0].mxu0
        %v2192 = vadd.f32 %v1421, %v2191
        %v2193 = vpop.f32.mrb[0].mxu0
        %v2194 = vadd.f32 %v1426, %v2193
        %v2195 = vpop.f32.mrb[0].mxu0
        %v2196 = vadd.f32 %v1426, %v2195
        %2197 = vdwg.mxu0
        %2198 = vmatprep.subr.bf16.mxu0 %v1744
        %2199 = vmatpush1.bf16.msra.mxu0 %v1743
        %2200 = vmatprep.subr.bf16.mxu0 %v1752
        %2201 = vmatpush1.bf16.msra.mxu0 %v1751
        %2202 = vmatprep.subr.bf16.mxu0 %v1760
        %2203 = vmatpush1.bf16.msra.mxu0 %v1759
        %2204 = vmatprep.subr.bf16.mxu0 %v1768
        %2205 = vmatpush1.bf16.msra.mxu0 %v1767
        %2206 = vmatprep.subr.bf16.mxu0 %v1776
        %2207 = vmatpush1.bf16.msra.mxu0 %v1775
        %2208 = vmatprep.subr.bf16.mxu0 %v1784
        %2209 = vmatpush1.bf16.msra.mxu0 %v1783
        %2210 = vmatprep.subr.bf16.mxu0 %v1792
        %2211 = vmatpush1.bf16.msra.mxu0 %v1791
        %2212 = vmatprep.subr.bf16.mxu0 %v1800
        %2213 = vmatpush1.bf16.msra.mxu0 %v1799
        %2214 = vmatprep.subr.bf16.mxu0 %v1808
        %2215 = vmatpush1.bf16.msra.mxu0 %v1807
        %2216 = vmatprep.subr.bf16.mxu0 %v1816
        %2217 = vmatpush1.bf16.msra.mxu0 %v1815
        %2218 = vmatprep.subr.bf16.mxu0 %v1824
        %2219 = vmatpush1.bf16.msra.mxu0 %v1823
        %2220 = vmatprep.subr.bf16.mxu0 %v1832
        %2221 = vmatpush1.bf16.msra.mxu0 %v1831
        %2222 = vmatprep.subr.bf16.mxu0 %v1840
        %2223 = vmatpush1.bf16.msra.mxu0 %v1839
        %2224 = vmatprep.subr.bf16.mxu0 0
        %2225 = vmatpush1.bf16.msra.mxu0 0
        %2226 = vmatprep.subr.bf16.mxu0 0
        %2227 = vmatpush1.bf16.msra.mxu0 0
        %2228 = vmatprep.subr.bf16.mxu0 0
        %2229 = vmatpush1.bf16.msra.mxu0 0
        %2230 = vmatprep.mubr.bf16.mxu0 %v1949
        %2231 = vmatmul.mubr.bf16.gmra.mrb[0].mxu0 %v1476
        %v2232 = vpop.f32.mrb[0].mxu0
        %v2233 = vadd.f32 %v1351, %v2232
        %v2234 = vpop.f32.mrb[0].mxu0
        %v2235 = vadd.f32 %v1351, %v2234
        %v2236 = vpop.f32.mrb[0].mxu0
        %v2237 = vadd.f32 %v1356, %v2236
        %v2238 = vpop.f32.mrb[0].mxu0
        %v2239 = vadd.f32 %v1356, %v2238
        %2240 = vmatprep.mubr.bf16.mxu0 %v1952
        %2241 = vmatmul.mubr.bf16.gmra.mrb[0].mxu0 %v1478
        %v2242 = vpop.f32.mrb[0].mxu0
        %v2243 = vadd.f32 %v1361, %v2242
        %v2244 = vpop.f32.mrb[0].mxu0
        %v2245 = vadd.f32 %v1361, %v2244
        %v2246 = vpop.f32.mrb[0].mxu0
        %v2247 = vadd.f32 %v1366, %v2246
        %v2248 = vpop.f32.mrb[0].mxu0
        %v2249 = vadd.f32 %v1366, %v2248
        %2250 = vmatprep.mubr.bf16.mxu0 %v1955
        %2251 = vmatmul.mubr.bf16.gmra.mrb[0].mxu0 %v1480
        %v2252 = vpop.f32.mrb[0].mxu0
        %v2253 = vadd.f32 %v1371, %v2252
        %v2254 = vpop.f32.mrb[0].mxu0
        %v2255 = vadd.f32 %v1371, %v2254
        %v2256 = vpop.f32.mrb[0].mxu0
        %v2257 = vadd.f32 %v1376, %v2256
        %v2258 = vpop.f32.mrb[0].mxu0
        %v2259 = vadd.f32 %v1376, %v2258
        %2260 = vmatprep.mubr.bf16.mxu0 %v1958
        %2261 = vmatmul.mubr.bf16.gmra.mrb[0].mxu0 %v1482
        %v2262 = vpop.f32.mrb[0].mxu0
        %v2263 = vadd.f32 %v1381, %v2262
        %v2264 = vpop.f32.mrb[0].mxu0
        %v2265 = vadd.f32 %v1381, %v2264
        %v2266 = vpop.f32.mrb[0].mxu0
        %v2267 = vadd.f32 %v1386, %v2266
        %v2268 = vpop.f32.mrb[0].mxu0
        %v2269 = vadd.f32 %v1386, %v2268
        %2270 = vmatprep.mubr.bf16.mxu0 %v1961
        %2271 = vmatmul.mubr.bf16.gmra.mrb[0].mxu0 %v1484
        %v2272 = vpop.f32.mrb[0].mxu0
        %v2273 = vadd.f32 %v1391, %v2272
        %v2274 = vpop.f32.mrb[0].mxu0
        %v2275 = vadd.f32 %v1391, %v2274
        %v2276 = vpop.f32.mrb[0].mxu0
        %v2277 = vadd.f32 %v1396, %v2276
        %v2278 = vpop.f32.mrb[0].mxu0
        %v2279 = vadd.f32 %v1396, %v2278
        %2280 = vmatprep.mubr.bf16.mxu0 %v1964
        %2281 = vmatmul.mubr.bf16.gmra.mrb[0].mxu0 %v1486
        %v2282 = vpop.f32.mrb[0].mxu0
        %v2283 = vadd.f32 %v1401, %v2282
        %v2284 = vpop.f32.mrb[0].mxu0
        %v2285 = vadd.f32 %v1401, %v2284
        %v2286 = vpop.f32.mrb[0].mxu0
        %v2287 = vadd.f32 %v1406, %v2286
        %v2288 = vpop.f32.mrb[0].mxu0
        %v2289 = vadd.f32 %v1406, %v2288
        %2290 = vmatprep.mubr.bf16.mxu0 %v1967
        %2291 = vmatmul.mubr.bf16.gmra.mrb[0].mxu0 %v1488
        %v2292 = vpop.f32.mrb[0].mxu0
        %v2293 = vadd.f32 %v1411, %v2292
        %v2294 = vpop.f32.mrb[0].mxu0
        %v2295 = vadd.f32 %v1411, %v2294
        %v2296 = vpop.f32.mrb[0].mxu0
        %v2297 = vadd.f32 %v1416, %v2296
        %v2298 = vpop.f32.mrb[0].mxu0
        %v2299 = vadd.f32 %v1416, %v2298
        %2300 = vmatprep.mubr.bf16.mxu0 %v1970
        %2301 = vmatmul.mubr.bf16.gmra.mrb[0].mxu0 %v1490
        %v2302 = vpop.f32.mrb[0].mxu0
        %v2303 = vadd.f32 %v1421, %v2302
        %v2304 = vpop.f32.mrb[0].mxu0
        %v2305 = vadd.f32 %v1421, %v2304
        %v2306 = vpop.f32.mrb[0].mxu0
        %v2307 = vadd.f32 %v1426, %v2306
        %v2308 = vpop.f32.mrb[0].mxu0
        %v2309 = vadd.f32 %v1426, %v2308
        %2310 = vdwg.mxu0
        %2311 = vmatprep.subr.bf16.mxu0 %v1746
        %2312 = vmatpush1.bf16.msra.mxu0 %v1745
        %2313 = vmatprep.subr.bf16.mxu0 %v1754
        %2314 = vmatpush1.bf16.msra.mxu0 %v1753
        %2315 = vmatprep.subr.bf16.mxu0 %v1762
        %2316 = vmatpush1.bf16.msra.mxu0 %v1761
        %2317 = vmatprep.subr.bf16.mxu0 %v1770
        %2318 = vmatpush1.bf16.msra.mxu0 %v1769
        %2319 = vmatprep.subr.bf16.mxu0 %v1778
        %2320 = vmatpush1.bf16.msra.mxu0 %v1777
        %2321 = vmatprep.subr.bf16.mxu0 %v1786
        %2322 = vmatpush1.bf16.msra.mxu0 %v1785
        %2323 = vmatprep.subr.bf16.mxu0 %v1794
        %2324 = vmatpush1.bf16.msra.mxu0 %v1793
        %2325 = vmatprep.subr.bf16.mxu0 %v1802
        %2326 = vmatpush1.bf16.msra.mxu0 %v1801
        %2327 = vmatprep.subr.bf16.mxu0 %v1810
        %2328 = vmatpush1.bf16.msra.mxu0 %v1809
        %2329 = vmatprep.subr.bf16.mxu0 %v1818
        %2330 = vmatpush1.bf16.msra.mxu0 %v1817
        %2331 = vmatprep.subr.bf16.mxu0 %v1826
        %2332 = vmatpush1.bf16.msra.mxu0 %v1825
        %2333 = vmatprep.subr.bf16.mxu0 %v1834
        %2334 = vmatpush1.bf16.msra.mxu0 %v1833
        %2335 = vmatprep.subr.bf16.mxu0 %v1842
        %2336 = vmatpush1.bf16.msra.mxu0 %v1841
        %2337 = vmatprep.subr.bf16.mxu0 0
        %2338 = vmatpush1.bf16.msra.mxu0 0
        %2339 = vmatprep.subr.bf16.mxu0 0
        %2340 = vmatpush1.bf16.msra.mxu0 0
        %2341 = vmatprep.subr.bf16.mxu0 0
        %2342 = vmatpush1.bf16.msra.mxu0 0
        %2343 = vmatprep.mubr.bf16.mxu0 %v1949
        %2344 = vmatmul.mubr.bf16.gmra.mrb[0].mxu0 %v1476
        %v2345 = vpop.f32.mrb[0].mxu0
        %v2346 = vadd.f32 %v1351, %v2345
        %v2347 = vpop.f32.mrb[0].mxu0
        %v2348 = vadd.f32 %v1351, %v2347
        %v2349 = vpop.f32.mrb[0].mxu0
        %v2350 = vadd.f32 %v1356, %v2349
        %v2351 = vpop.f32.mrb[0].mxu0
        %v2352 = vadd.f32 %v1356, %v2351
        %2353 = vmatprep.mubr.bf16.mxu0 %v1952
        %2354 = vmatmul.mubr.bf16.gmra.mrb[0].mxu0 %v1478
        %v2355 = vpop.f32.mrb[0].mxu0
        %v2356 = vadd.f32 %v1361, %v2355
        %v2357 = vpop.f32.mrb[0].mxu0
        %v2358 = vadd.f32 %v1361, %v2357
        %v2359 = vpop.f32.mrb[0].mxu0
        %v2360 = vadd.f32 %v1366, %v2359
        %v2361 = vpop.f32.mrb[0].mxu0
        %v2362 = vadd.f32 %v1366, %v2361
        %2363 = vmatprep.mubr.bf16.mxu0 %v1955
        %2364 = vmatmul.mubr.bf16.gmra.mrb[0].mxu0 %v1480
        %v2365 = vpop.f32.mrb[0].mxu0
        %v2366 = vadd.f32 %v1371, %v2365
        %v2367 = vpop.f32.mrb[0].mxu0
        %v2368 = vadd.f32 %v1371, %v2367
        %v2369 = vpop.f32.mrb[0].mxu0
        %v2370 = vadd.f32 %v1376, %v2369
        %v2371 = vpop.f32.mrb[0].mxu0
        %v2372 = vadd.f32 %v1376, %v2371
        %2373 = vmatprep.mubr.bf16.mxu0 %v1958
        %2374 = vmatmul.mubr.bf16.gmra.mrb[0].mxu0 %v1482
        %v2375 = vpop.f32.mrb[0].mxu0
        %v2376 = vadd.f32 %v1381, %v2375
        %v2377 = vpop.f32.mrb[0].mxu0
        %v2378 = vadd.f32 %v1381, %v2377
        %v2379 = vpop.f32.mrb[0].mxu0
        %v2380 = vadd.f32 %v1386, %v2379
        %v2381 = vpop.f32.mrb[0].mxu0
        %v2382 = vadd.f32 %v1386, %v2381
        %2383 = vmatprep.mubr.bf16.mxu0 %v1961
        %2384 = vmatmul.mubr.bf16.gmra.mrb[0].mxu0 %v1484
        %v2385 = vpop.f32.mrb[0].mxu0
        %v2386 = vadd.f32 %v1391, %v2385
        %v2387 = vpop.f32.mrb[0].mxu0
        %v2388 = vadd.f32 %v1391, %v2387
        %v2389 = vpop.f32.mrb[0].mxu0
        %v2390 = vadd.f32 %v1396, %v2389
        %v2391 = vpop.f32.mrb[0].mxu0
        %v2392 = vadd.f32 %v1396, %v2391
        %2393 = vmatprep.mubr.bf16.mxu0 %v1964
        %2394 = vmatmul.mubr.bf16.gmra.mrb[0].mxu0 %v1486
        %v2395 = vpop.f32.mrb[0].mxu0
        %v2396 = vadd.f32 %v1401, %v2395
        %v2397 = vpop.f32.mrb[0].mxu0
        %v2398 = vadd.f32 %v1401, %v2397
        %v2399 = vpop.f32.mrb[0].mxu0
        %v2400 = vadd.f32 %v1406, %v2399
        %v2401 = vpop.f32.mrb[0].mxu0
        %v2402 = vadd.f32 %v1406, %v2401
        %2403 = vmatprep.mubr.bf16.mxu0 %v1967
        %2404 = vmatmul.mubr.bf16.gmra.mrb[0].mxu0 %v1488
        %v2405 = vpop.f32.mrb[0].mxu0
        %v2406 = vadd.f32 %v1411, %v2405
        %v2407 = vpop.f32.mrb[0].mxu0
        %v2408 = vadd.f32 %v1411, %v2407
        %v2409 = vpop.f32.mrb[0].mxu0
        %v2410 = vadd.f32 %v1416, %v2409
        %v2411 = vpop.f32.mrb[0].mxu0
        %v2412 = vadd.f32 %v1416, %v2411
        %2413 = vmatprep.mubr.bf16.mxu0 %v1970
        %2414 = vmatmul.mubr.bf16.gmra.mrb[0].mxu0 %v1490
        %v2415 = vpop.f32.mrb[0].mxu0
        %v2416 = vadd.f32 %v1421, %v2415
        %v2417 = vpop.f32.mrb[0].mxu0
        %v2418 = vadd.f32 %v1421, %v2417
        %v2419 = vpop.f32.mrb[0].mxu0
        %v2420 = vadd.f32 %v1426, %v2419
        %v2421 = vpop.f32.mrb[0].mxu0
        %v2422 = vadd.f32 %v1426, %v2421
        %2423 = vdwg.mxu0
        %v2424 = vtanh.pop %v2007
        %v2425 = vtanh.pop %v2009
        %v2426 = vtanh.pop %v2120
        %v2427 = vtanh.pop %v2122
        %v2428 = vtanh.pop %v2233
        %v2429 = vtanh.pop %v2235
        %v2430 = vtanh.pop %v2346
        %v2431 = vtanh.pop %v2348
        %v2432 = vtanh.pop %v2011
        %v2433 = vtanh.pop %v2013
        %v2434 = vtanh.pop %v2124
        %v2435 = vtanh.pop %v2126
        %v2436 = vtanh.pop %v2237
        %v2437 = vtanh.pop %v2239
        %v2438 = vtanh.pop %v2350
        %v2439 = vtanh.pop %v2352
        %v2440 = vtanh.pop %v2017
        %v2441 = vtanh.pop %v2019
        %v2442 = vtanh.pop %v2130
        %v2443 = vtanh.pop %v2132
        %v2444 = vtanh.pop %v2243
        %v2445 = vtanh.pop %v2245
        %v2446 = vtanh.pop %v2356
        %v2447 = vtanh.pop %v2358
        %v2448 = vtanh.pop %v2021
        %v2449 = vtanh.pop %v2023
        %v2450 = vtanh.pop %v2134
        %v2451 = vtanh.pop %v2136
        %v2452 = vtanh.pop %v2247
        %v2453 = vtanh.pop %v2249
        %v2454 = vtanh.pop %v2360
        %v2455 = vtanh.pop %v2362
        %v2456 = vtanh.pop %v2027
        %v2457 = vtanh.pop %v2029
        %v2458 = vtanh.pop %v2140
        %v2459 = vtanh.pop %v2142
        %v2460 = vtanh.pop %v2253
        %v2461 = vtanh.pop %v2255
        %v2462 = vtanh.pop %v2366
        %v2463 = vtanh.pop %v2368
        %v2464 = vtanh.pop %v2031
        %v2465 = vtanh.pop %v2033
        %v2466 = vtanh.pop %v2144
        %v2467 = vtanh.pop %v2146
        %v2468 = vtanh.pop %v2257
        %v2469 = vtanh.pop %v2259
        %v2470 = vtanh.pop %v2370
        %v2471 = vtanh.pop %v2372
        %v2472 = vtanh.pop %v2037
        %v2473 = vtanh.pop %v2039
        %v2474 = vtanh.pop %v2150
        %v2475 = vtanh.pop %v2152
        %v2476 = vtanh.pop %v2263
        %v2477 = vtanh.pop %v2265
        %v2478 = vtanh.pop %v2376
        %v2479 = vtanh.pop %v2378
        %v2480 = vtanh.pop %v2041
        %v2481 = vtanh.pop %v2043
        %v2482 = vtanh.pop %v2154
        %v2483 = vtanh.pop %v2156
        %v2484 = vtanh.pop %v2267
        %v2485 = vtanh.pop %v2269
        %v2486 = vtanh.pop %v2380
        %v2487 = vtanh.pop %v2382
        %v2488 = vxor.u32 %v2047, 2147483648
        %v2489 = vxor.u32 %v2049, 2147483648
        %v2490 = vxor.u32 %v2160, 2147483648
        %v2491 = vxor.u32 %v2162, 2147483648
        %v2492 = vxor.u32 %v2273, 2147483648
        %v2493 = vxor.u32 %v2275, 2147483648
        %v2494 = vxor.u32 %v2386, 2147483648
        %v2495 = vxor.u32 %v2388, 2147483648
        %v2496 = vxor.u32 %v2051, 2147483648
        %v2497 = vxor.u32 %v2053, 2147483648
        %v2498 = vxor.u32 %v2164, 2147483648
        %v2499 = vxor.u32 %v2166, 2147483648
        %v2500 = vxor.u32 %v2277, 2147483648
        %v2501 = vxor.u32 %v2279, 2147483648
        %v2502 = vxor.u32 %v2390, 2147483648
        %v2503 = vxor.u32 %v2392, 2147483648
        %v2504 = vxor.u32 %v2057, 2147483648
        %v2505 = vxor.u32 %v2059, 2147483648
        %v2506 = vxor.u32 %v2170, 2147483648
        %v2507 = vxor.u32 %v2172, 2147483648
        %v2508 = vxor.u32 %v2283, 2147483648
        %v2509 = vxor.u32 %v2285, 2147483648
        %v2510 = vxor.u32 %v2396, 2147483648
        %v2511 = vxor.u32 %v2398, 2147483648
        %v2512 = vxor.u32 %v2061, 2147483648
        %v2513 = vxor.u32 %v2063, 2147483648
        %v2514 = vxor.u32 %v2174, 2147483648
        %v2515 = vxor.u32 %v2176, 2147483648
        %v2516 = vxor.u32 %v2287, 2147483648
        %v2517 = vxor.u32 %v2289, 2147483648
        %v2518 = vxor.u32 %v2400, 2147483648
        %v2519 = vxor.u32 %v2402, 2147483648
        %v2520 = vxor.u32 %v2067, 2147483648
        %v2521 = vxor.u32 %v2069, 2147483648
        %v2522 = vxor.u32 %v2180, 2147483648
        %v2523 = vxor.u32 %v2182, 2147483648
        %v2524 = vxor.u32 %v2293, 2147483648
        %v2525 = vxor.u32 %v2295, 2147483648
        %v2526 = vxor.u32 %v2406, 2147483648
        %v2527 = vxor.u32 %v2408, 2147483648
        %v2528 = vxor.u32 %v2071, 2147483648
        %v2529 = vxor.u32 %v2073, 2147483648
        %v2530 = vxor.u32 %v2184, 2147483648
        %v2531 = vxor.u32 %v2186, 2147483648
        %v2532 = vxor.u32 %v2297, 2147483648
        %v2533 = vxor.u32 %v2299, 2147483648
        %v2534 = vxor.u32 %v2410, 2147483648
        %v2535 = vxor.u32 %v2412, 2147483648
        %v2536 = vxor.u32 %v2077, 2147483648
        %v2537 = vxor.u32 %v2079, 2147483648
        %v2538 = vxor.u32 %v2190, 2147483648
        %v2539 = vxor.u32 %v2192, 2147483648
        %v2540 = vxor.u32 %v2303, 2147483648
        %v2541 = vxor.u32 %v2305, 2147483648
        %v2542 = vxor.u32 %v2416, 2147483648
        %v2543 = vxor.u32 %v2418, 2147483648
        %v2544 = vxor.u32 %v2081, 2147483648
        %v2545 = vxor.u32 %v2083, 2147483648
        %v2546 = vxor.u32 %v2194, 2147483648
        %v2547 = vxor.u32 %v2196, 2147483648
        %v2548 = vxor.u32 %v2307, 2147483648
        %v2549 = vxor.u32 %v2309, 2147483648
        %v2550 = vxor.u32 %v2420, 2147483648
        %v2551 = vxor.u32 %v2422, 2147483648
        %v2552 = vmul.f32 %v2488, 1.442695
        %v2553 = vpow.pop %v2552
        %v2554 = vmul.f32 %v2489, 1.442695
        %v2555 = vpow.pop %v2554
        %v2556 = vmul.f32 %v2490, 1.442695
        %v2557 = vpow.pop %v2556
        %v2558 = vmul.f32 %v2491, 1.442695
        %v2559 = vpow.pop %v2558
        %v2560 = vmul.f32 %v2492, 1.442695
        %v2561 = vpow.pop %v2560
        %v2562 = vmul.f32 %v2493, 1.442695
        %v2563 = vpow.pop %v2562
        %v2564 = vmul.f32 %v2494, 1.442695
        %v2565 = vpow.pop %v2564
        %v2566 = vmul.f32 %v2495, 1.442695
        %v2567 = vpow.pop %v2566
        %v2568 = vmul.f32 %v2496, 1.442695
        %v2569 = vpow.pop %v2568
        %v2570 = vmul.f32 %v2497, 1.442695
        %v2571 = vpow.pop %v2570
        %v2572 = vmul.f32 %v2498, 1.442695
        %v2573 = vpow.pop %v2572
        %v2574 = vmul.f32 %v2499, 1.442695
        %v2575 = vpow.pop %v2574
        %v2576 = vmul.f32 %v2500, 1.442695
        %v2577 = vpow.pop %v2576
        %v2578 = vmul.f32 %v2501, 1.442695
        %v2579 = vpow.pop %v2578
        %v2580 = vmul.f32 %v2502, 1.442695
        %v2581 = vpow.pop %v2580
        %v2582 = vmul.f32 %v2503, 1.442695
        %v2583 = vpow.pop %v2582
        %v2584 = vmul.f32 %v2504, 1.442695
        %v2585 = vpow.pop %v2584
        %v2586 = vmul.f32 %v2505, 1.442695
        %v2587 = vpow.pop %v2586
        %v2588 = vmul.f32 %v2506, 1.442695
        %v2589 = vpow.pop %v2588
        %v2590 = vmul.f32 %v2507, 1.442695
        %v2591 = vpow.pop %v2590
        %v2592 = vmul.f32 %v2508, 1.442695
        %v2593 = vpow.pop %v2592
        %v2594 = vmul.f32 %v2509, 1.442695
        %v2595 = vpow.pop %v2594
        %v2596 = vmul.f32 %v2510, 1.442695
        %v2597 = vpow.pop %v2596
        %v2598 = vmul.f32 %v2511, 1.442695
        %v2599 = vpow.pop %v2598
        %v2600 = vmul.f32 %v2512, 1.442695
        %v2601 = vpow.pop %v2600
        %v2602 = vmul.f32 %v2513, 1.442695
        %v2603 = vpow.pop %v2602
        %v2604 = vmul.f32 %v2514, 1.442695
        %v2605 = vpow.pop %v2604
        %v2606 = vmul.f32 %v2515, 1.442695
        %v2607 = vpow.pop %v2606
        %v2608 = vmul.f32 %v2516, 1.442695
        %v2609 = vpow.pop %v2608
        %v2610 = vmul.f32 %v2517, 1.442695
        %v2611 = vpow.pop %v2610
        %v2612 = vmul.f32 %v2518, 1.442695
        %v2613 = vpow.pop %v2612
        %v2614 = vmul.f32 %v2519, 1.442695
        %v2615 = vpow.pop %v2614
        %v2616 = vmul.f32 %v2520, 1.442695
        %v2617 = vpow.pop %v2616
        %v2618 = vmul.f32 %v2521, 1.442695
        %v2619 = vpow.pop %v2618
        %v2620 = vmul.f32 %v2522, 1.442695
        %v2621 = vpow.pop %v2620
        %v2622 = vmul.f32 %v2523, 1.442695
        %v2623 = vpow.pop %v2622
        %v2624 = vmul.f32 %v2524, 1.442695
        %v2625 = vpow.pop %v2624
        %v2626 = vmul.f32 %v2525, 1.442695
        %v2627 = vpow.pop %v2626
        %v2628 = vmul.f32 %v2526, 1.442695
        %v2629 = vpow.pop %v2628
        %v2630 = vmul.f32 %v2527, 1.442695
        %v2631 = vpow.pop %v2630
        %v2632 = vmul.f32 %v2528, 1.442695
        %v2633 = vpow.pop %v2632
        %v2634 = vmul.f32 %v2529, 1.442695
        %v2635 = vpow.pop %v2634
        %v2636 = vmul.f32 %v2530, 1.442695
        %v2637 = vpow.pop %v2636
        %v2638 = vmul.f32 %v2531, 1.442695
        %v2639 = vpow.pop %v2638
        %v2640 = vmul.f32 %v2532, 1.442695
        %v2641 = vpow.pop %v2640
        %v2642 = vmul.f32 %v2533, 1.442695
        %v2643 = vpow.pop %v2642
        %v2644 = vmul.f32 %v2534, 1.442695
        %v2645 = vpow.pop %v2644
        %v2646 = vmul.f32 %v2535, 1.442695
        %v2647 = vpow.pop %v2646
        %v2648 = vmul.f32 %v2536, 1.442695
        %v2649 = vpow.pop %v2648
        %v2650 = vmul.f32 %v2537, 1.442695
        %v2651 = vpow.pop %v2650
        %v2652 = vmul.f32 %v2538, 1.442695
        %v2653 = vpow.pop %v2652
        %v2654 = vmul.f32 %v2539, 1.442695
        %v2655 = vpow.pop %v2654
        %v2656 = vmul.f32 %v2540, 1.442695
        %v2657 = vpow.pop %v2656
        %v2658 = vmul.f32 %v2541, 1.442695
        %v2659 = vpow.pop %v2658
        %v2660 = vmul.f32 %v2542, 1.442695
        %v2661 = vpow.pop %v2660
        %v2662 = vmul.f32 %v2543, 1.442695
        %v2663 = vpow.pop %v2662
        %v2664 = vmul.f32 %v2544, 1.442695
        %v2665 = vpow.pop %v2664
        %v2666 = vmul.f32 %v2545, 1.442695
        %v2667 = vpow.pop %v2666
        %v2668 = vmul.f32 %v2546, 1.442695
        %v2669 = vpow.pop %v2668
        %v2670 = vmul.f32 %v2547, 1.442695
        %v2671 = vpow.pop %v2670
        %v2672 = vmul.f32 %v2548, 1.442695
        %v2673 = vpow.pop %v2672
        %v2674 = vmul.f32 %v2549, 1.442695
        %v2675 = vpow.pop %v2674
        %v2676 = vmul.f32 %v2550, 1.442695
        %v2677 = vpow.pop %v2676
        %v2678 = vmul.f32 %v2551, 1.442695
        %v2679 = vpow.pop %v2678
        %v2680 = vadd.f32 %v2553, 1.0
        %v2681 = vadd.f32 %v2555, 1.0
        %v2682 = vadd.f32 %v2557, 1.0
        %v2683 = vadd.f32 %v2559, 1.0
        %v2684 = vadd.f32 %v2561, 1.0
        %v2685 = vadd.f32 %v2563, 1.0
        %v2686 = vadd.f32 %v2565, 1.0
        %v2687 = vadd.f32 %v2567, 1.0
        %v2688 = vadd.f32 %v2569, 1.0
        %v2689 = vadd.f32 %v2571, 1.0
        %v2690 = vadd.f32 %v2573, 1.0
        %v2691 = vadd.f32 %v2575, 1.0
        %v2692 = vadd.f32 %v2577, 1.0
        %v2693 = vadd.f32 %v2579, 1.0
        %v2694 = vadd.f32 %v2581, 1.0
        %v2695 = vadd.f32 %v2583, 1.0
        %v2696 = vadd.f32 %v2585, 1.0
        %v2697 = vadd.f32 %v2587, 1.0
        %v2698 = vadd.f32 %v2589, 1.0
        %v2699 = vadd.f32 %v2591, 1.0
        %v2700 = vadd.f32 %v2593, 1.0
        %v2701 = vadd.f32 %v2595, 1.0
        %v2702 = vadd.f32 %v2597, 1.0
        %v2703 = vadd.f32 %v2599, 1.0
        %v2704 = vadd.f32 %v2601, 1.0
        %v2705 = vadd.f32 %v2603, 1.0
        %v2706 = vadd.f32 %v2605, 1.0
        %v2707 = vadd.f32 %v2607, 1.0
        %v2708 = vadd.f32 %v2609, 1.0
        %v2709 = vadd.f32 %v2611, 1.0
        %v2710 = vadd.f32 %v2613, 1.0
        %v2711 = vadd.f32 %v2615, 1.0
        %v2712 = vadd.f32 %v2617, 1.0
        %v2713 = vadd.f32 %v2619, 1.0
        %v2714 = vadd.f32 %v2621, 1.0
        %v2715 = vadd.f32 %v2623, 1.0
        %v2716 = vadd.f32 %v2625, 1.0
        %v2717 = vadd.f32 %v2627, 1.0
        %v2718 = vadd.f32 %v2629, 1.0
        %v2719 = vadd.f32 %v2631, 1.0
        %v2720 = vadd.f32 %v2633, 1.0
        %v2721 = vadd.f32 %v2635, 1.0
        %v2722 = vadd.f32 %v2637, 1.0
        %v2723 = vadd.f32 %v2639, 1.0
        %v2724 = vadd.f32 %v2641, 1.0
        %v2725 = vadd.f32 %v2643, 1.0
        %v2726 = vadd.f32 %v2645, 1.0
        %v2727 = vadd.f32 %v2647, 1.0
        %v2728 = vadd.f32 %v2649, 1.0
        %v2729 = vadd.f32 %v2651, 1.0
        %v2730 = vadd.f32 %v2653, 1.0
        %v2731 = vadd.f32 %v2655, 1.0
        %v2732 = vadd.f32 %v2657, 1.0
        %v2733 = vadd.f32 %v2659, 1.0
        %v2734 = vadd.f32 %v2661, 1.0
        %v2735 = vadd.f32 %v2663, 1.0
        %v2736 = vadd.f32 %v2665, 1.0
        %v2737 = vadd.f32 %v2667, 1.0
        %v2738 = vadd.f32 %v2669, 1.0
        %v2739 = vadd.f32 %v2671, 1.0
        %v2740 = vadd.f32 %v2673, 1.0
        %v2741 = vadd.f32 %v2675, 1.0
        %v2742 = vadd.f32 %v2677, 1.0
        %v2743 = vadd.f32 %v2679, 1.0
        %v2744 = vrcp.pop %v2680
        %v2745 = vmul.f32 1.0, %v2744
        %v2746 = vrcp.pop %v2681
        %v2747 = vmul.f32 1.0, %v2746
        %v2748 = vrcp.pop %v2682
        %v2749 = vmul.f32 1.0, %v2748
        %v2750 = vrcp.pop %v2683
        %v2751 = vmul.f32 1.0, %v2750
        %v2752 = vrcp.pop %v2684
        %v2753 = vmul.f32 1.0, %v2752
        %v2754 = vrcp.pop %v2685
        %v2755 = vmul.f32 1.0, %v2754
        %v2756 = vrcp.pop %v2686
        %v2757 = vmul.f32 1.0, %v2756
        %v2758 = vrcp.pop %v2687
        %v2759 = vmul.f32 1.0, %v2758
        %v2760 = vrcp.pop %v2688
        %v2761 = vmul.f32 1.0, %v2760
        %v2762 = vrcp.pop %v2689
        %v2763 = vmul.f32 1.0, %v2762
        %v2764 = vrcp.pop %v2690
        %v2765 = vmul.f32 1.0, %v2764
        %v2766 = vrcp.pop %v2691
        %v2767 = vmul.f32 1.0, %v2766
        %v2768 = vrcp.pop %v2692
        %v2769 = vmul.f32 1.0, %v2768
        %v2770 = vrcp.pop %v2693
        %v2771 = vmul.f32 1.0, %v2770
        %v2772 = vrcp.pop %v2694
        %v2773 = vmul.f32 1.0, %v2772
        %v2774 = vrcp.pop %v2695
        %v2775 = vmul.f32 1.0, %v2774
        %v2776 = vrcp.pop %v2696
        %v2777 = vmul.f32 1.0, %v2776
        %v2778 = vrcp.pop %v2697
        %v2779 = vmul.f32 1.0, %v2778
        %v2780 = vrcp.pop %v2698
        %v2781 = vmul.f32 1.0, %v2780
        %v2782 = vrcp.pop %v2699
        %v2783 = vmul.f32 1.0, %v2782
        %v2784 = vrcp.pop %v2700
        %v2785 = vmul.f32 1.0, %v2784
        %v2786 = vrcp.pop %v2701
        %v2787 = vmul.f32 1.0, %v2786
        %v2788 = vrcp.pop %v2702
        %v2789 = vmul.f32 1.0, %v2788
        %v2790 = vrcp.pop %v2703
        %v2791 = vmul.f32 1.0, %v2790
        %v2792 = vrcp.pop %v2704
        %v2793 = vmul.f32 1.0, %v2792
        %v2794 = vrcp.pop %v2705
        %v2795 = vmul.f32 1.0, %v2794
        %v2796 = vrcp.pop %v2706
        %v2797 = vmul.f32 1.0, %v2796
        %v2798 = vrcp.pop %v2707
        %v2799 = vmul.f32 1.0, %v2798
        %v2800 = vrcp.pop %v2708
        %v2801 = vmul.f32 1.0, %v2800
        %v2802 = vrcp.pop %v2709
        %v2803 = vmul.f32 1.0, %v2802
        %v2804 = vrcp.pop %v2710
        %v2805 = vmul.f32 1.0, %v2804
        %v2806 = vrcp.pop %v2711
        %v2807 = vmul.f32 1.0, %v2806
        %v2808 = vrcp.pop %v2712
        %v2809 = vmul.f32 1.0, %v2808
        %v2810 = vrcp.pop %v2713
        %v2811 = vmul.f32 1.0, %v2810
        %v2812 = vrcp.pop %v2714
        %v2813 = vmul.f32 1.0, %v2812
        %v2814 = vrcp.pop %v2715
        %v2815 = vmul.f32 1.0, %v2814
        %v2816 = vrcp.pop %v2716
        %v2817 = vmul.f32 1.0, %v2816
        %v2818 = vrcp.pop %v2717
        %v2819 = vmul.f32 1.0, %v2818
        %v2820 = vrcp.pop %v2718
        %v2821 = vmul.f32 1.0, %v2820
        %v2822 = vrcp.pop %v2719
        %v2823 = vmul.f32 1.0, %v2822
        %v2824 = vrcp.pop %v2720
        %v2825 = vmul.f32 1.0, %v2824
        %v2826 = vrcp.pop %v2721
        %v2827 = vmul.f32 1.0, %v2826
        %v2828 = vrcp.pop %v2722
        %v2829 = vmul.f32 1.0, %v2828
        %v2830 = vrcp.pop %v2723
        %v2831 = vmul.f32 1.0, %v2830
        %v2832 = vrcp.pop %v2724
        %v2833 = vmul.f32 1.0, %v2832
        %v2834 = vrcp.pop %v2725
        %v2835 = vmul.f32 1.0, %v2834
        %v2836 = vrcp.pop %v2726
        %v2837 = vmul.f32 1.0, %v2836
        %v2838 = vrcp.pop %v2727
        %v2839 = vmul.f32 1.0, %v2838
        %v2840 = vrcp.pop %v2728
        %v2841 = vmul.f32 1.0, %v2840
        %v2842 = vrcp.pop %v2729
        %v2843 = vmul.f32 1.0, %v2842
        %v2844 = vrcp.pop %v2730
        %v2845 = vmul.f32 1.0, %v2844
        %v2846 = vrcp.pop %v2731
        %v2847 = vmul.f32 1.0, %v2846
        %v2848 = vrcp.pop %v2732
        %v2849 = vmul.f32 1.0, %v2848
        %v2850 = vrcp.pop %v2733
        %v2851 = vmul.f32 1.0, %v2850
        %v2852 = vrcp.pop %v2734
        %v2853 = vmul.f32 1.0, %v2852
        %v2854 = vrcp.pop %v2735
        %v2855 = vmul.f32 1.0, %v2854
        %v2856 = vrcp.pop %v2736
        %v2857 = vmul.f32 1.0, %v2856
        %v2858 = vrcp.pop %v2737
        %v2859 = vmul.f32 1.0, %v2858
        %v2860 = vrcp.pop %v2738
        %v2861 = vmul.f32 1.0, %v2860
        %v2862 = vrcp.pop %v2739
        %v2863 = vmul.f32 1.0, %v2862
        %v2864 = vrcp.pop %v2740
        %v2865 = vmul.f32 1.0, %v2864
        %v2866 = vrcp.pop %v2741
        %v2867 = vmul.f32 1.0, %v2866
        %v2868 = vrcp.pop %v2742
        %v2869 = vmul.f32 1.0, %v2868
        %v2870 = vrcp.pop %v2743
        %v2871 = vmul.f32 1.0, %v2870
        %v2872 = vmul.f32 %v2424, %v2745
        %v2873 = vmul.f32 %v2425, %v2747
        %v2874 = vmul.f32 %v2426, %v2749
        %v2875 = vmul.f32 %v2427, %v2751
        %v2876 = vmul.f32 %v2428, %v2753
        %v2877 = vmul.f32 %v2429, %v2755
        %v2878 = vmul.f32 %v2430, %v2757
        %v2879 = vmul.f32 %v2431, %v2759
        %v2880 = vmul.f32 %v2432, %v2761
        %v2881 = vmul.f32 %v2433, %v2763
        %v2882 = vmul.f32 %v2434, %v2765
        %v2883 = vmul.f32 %v2435, %v2767
        %v2884 = vmul.f32 %v2436, %v2769
        %v2885 = vmul.f32 %v2437, %v2771
        %v2886 = vmul.f32 %v2438, %v2773
        %v2887 = vmul.f32 %v2439, %v2775
        %v2888 = vmul.f32 %v2440, %v2777
        %v2889 = vmul.f32 %v2441, %v2779
        %v2890 = vmul.f32 %v2442, %v2781
        %v2891 = vmul.f32 %v2443, %v2783
        %v2892 = vmul.f32 %v2444, %v2785
        %v2893 = vmul.f32 %v2445, %v2787
        %v2894 = vmul.f32 %v2446, %v2789
        %v2895 = vmul.f32 %v2447, %v2791
        %v2896 = vmul.f32 %v2448, %v2793
        %v2897 = vmul.f32 %v2449, %v2795
        %v2898 = vmul.f32 %v2450, %v2797
        %v2899 = vmul.f32 %v2451, %v2799
        %v2900 = vmul.f32 %v2452, %v2801
        %v2901 = vmul.f32 %v2453, %v2803
        %v2902 = vmul.f32 %v2454, %v2805
        %v2903 = vmul.f32 %v2455, %v2807
        %v2904 = vmul.f32 %v2456, %v2809
        %v2905 = vmul.f32 %v2457, %v2811
        %v2906 = vmul.f32 %v2458, %v2813
        %v2907 = vmul.f32 %v2459, %v2815
        %v2908 = vmul.f32 %v2460, %v2817
        %v2909 = vmul.f32 %v2461, %v2819
        %v2910 = vmul.f32 %v2462, %v2821
        %v2911 = vmul.f32 %v2463, %v2823
        %v2912 = vmul.f32 %v2464, %v2825
        %v2913 = vmul.f32 %v2465, %v2827
        %v2914 = vmul.f32 %v2466, %v2829
        %v2915 = vmul.f32 %v2467, %v2831
        %v2916 = vmul.f32 %v2468, %v2833
        %v2917 = vmul.f32 %v2469, %v2835
        %v2918 = vmul.f32 %v2470, %v2837
        %v2919 = vmul.f32 %v2471, %v2839
        %v2920 = vmul.f32 %v2472, %v2841
        %v2921 = vmul.f32 %v2473, %v2843
        %v2922 = vmul.f32 %v2474, %v2845
        %v2923 = vmul.f32 %v2475, %v2847
        %v2924 = vmul.f32 %v2476, %v2849
        %v2925 = vmul.f32 %v2477, %v2851
        %v2926 = vmul.f32 %v2478, %v2853
        %v2927 = vmul.f32 %v2479, %v2855
        %v2928 = vmul.f32 %v2480, %v2857
        %v2929 = vmul.f32 %v2481, %v2859
        %v2930 = vmul.f32 %v2482, %v2861
        %v2931 = vmul.f32 %v2483, %v2863
        %v2932 = vmul.f32 %v2484, %v2865
        %v2933 = vmul.f32 %v2485, %v2867
        %v2934 = vmul.f32 %v2486, %v2869
        %v2935 = vmul.f32 %v2487, %v2871
        %v2936 = vld [vmem:[%s6] sm:$0xf]
        %v2937 = vld [vmem:[%s6 + $0x4] sm:$0xf]
        %v2938 = vld [vmem:[%s6 + $0x8] sm:$0xf]
        %v2939 = vld [vmem:[%s6 + $0xc] sm:$0xf]
        %v2940 = vld [vmem:[%s6 + $0x10] sm:$0xf]
        %v2941 = vld [vmem:[%s6 + $0x14] sm:$0xf]
        %v2942 = vld [vmem:[%s6 + $0x18] sm:$0xf]
        %v2943 = vld [vmem:[%s6 + $0x1c] sm:$0xf]
        %v2944 = vld [vmem:[%s6 + $0x20] sm:$0xf]
        %v2945 = vld [vmem:[%s6 + $0x24] sm:$0xf]
        %v2946 = vld [vmem:[%s6 + $0x28] sm:$0xf]
        %v2947 = vld [vmem:[%s6 + $0x2c] sm:$0xf]
        %v2948 = vld [vmem:[%s6 + $0x30] sm:$0xf]
        %v2949 = vld [vmem:[%s6 + $0x34] sm:$0xf]
        %v2950 = vld [vmem:[%s6 + $0x38] sm:$0xf]
        %v2951 = vld [vmem:[%s6 + $0x3c] sm:$0xf]
        %v2952 = vpack.c.bf16 %v2880, %v2872
        %v2953 = vpack.c.bf16 %v2881, %v2873
        %v2954 = vpack.c.bf16 %v2882, %v2874
        %v2955 = vpack.c.bf16 %v2883, %v2875
        %v2956 = vpack.c.bf16 %v2884, %v2876
        %v2957 = vpack.c.bf16 %v2885, %v2877
        %v2958 = vpack.c.bf16 %v2886, %v2878
        %v2959 = vpack.c.bf16 %v2887, %v2879
        %v2960 = vpack.c.bf16 %v2896, %v2888
        %v2961 = vpack.c.bf16 %v2897, %v2889
        %v2962 = vpack.c.bf16 %v2898, %v2890
        %v2963 = vpack.c.bf16 %v2899, %v2891
        %v2964 = vpack.c.bf16 %v2900, %v2892
        %v2965 = vpack.c.bf16 %v2901, %v2893
        %v2966 = vpack.c.bf16 %v2902, %v2894
        %v2967 = vpack.c.bf16 %v2903, %v2895
        %v2968 = vpack.c.bf16 %v2912, %v2904
        %v2969 = vpack.c.bf16 %v2913, %v2905
        %v2970 = vpack.c.bf16 %v2914, %v2906
        %v2971 = vpack.c.bf16 %v2915, %v2907
        %v2972 = vpack.c.bf16 %v2916, %v2908
        %v2973 = vpack.c.bf16 %v2917, %v2909
        %v2974 = vpack.c.bf16 %v2918, %v2910
        %v2975 = vpack.c.bf16 %v2919, %v2911
        %v2976 = vpack.c.bf16 %v2928, %v2920
        %v2977 = vpack.c.bf16 %v2929, %v2921
        %v2978 = vpack.c.bf16 %v2930, %v2922
        %v2979 = vpack.c.bf16 %v2931, %v2923
        %v2980 = vpack.c.bf16 %v2932, %v2924
        %v2981 = vpack.c.bf16 %v2933, %v2925
        %v2982 = vpack.c.bf16 %v2934, %v2926
        %v2983 = vpack.c.bf16 %v2935, %v2927
        %v2984 = vld [vmem:[%s7] sm:$0xff]
        %v2985 = vld [vmem:[%s7 + $0x8] sm:$0xff]
        %v2986 = vld [vmem:[%s7 + $0x10] sm:$0xff]
        %v2987 = vld [vmem:[%s7 + $0x18] sm:$0xff]
        %v2988 = vld [vmem:[%s7 + $0x20] sm:$0xff]
        %v2989 = vld [vmem:[%s7 + $0x28] sm:$0xff]
        %v2990 = vld [vmem:[%s7 + $0x30] sm:$0xff]
        %v2991 = vld [vmem:[%s7 + $0x38] sm:$0xff]
        %v2992 = vld [vmem:[%s7 + $0x40] sm:$0xff]
        %v2993 = vld [vmem:[%s7 + $0x48] sm:$0xff]
        %v2994 = vld [vmem:[%s7 + $0x50] sm:$0xff]
        %v2995 = vld [vmem:[%s7 + $0x58] sm:$0xff]
        %v2996 = vld [vmem:[%s7 + $0x60] sm:$0xff]
        %v2997 = vld [vmem:[%s7 + $0x68] sm:$0xff]
        %v2998 = vld [vmem:[%s7 + $0x70] sm:$0xff]
        %v2999 = vld [vmem:[%s7 + $0x78] sm:$0xff]
        %3001 = vset.pattern.permute.xlu0 0
        %3002 = vperm.xlu0 %3001, %v2984
        %v3003 = vpop.permute.xlu0 %3002
        %3006 = vset.pattern.permute.xlu0 0
        %3007 = vperm.xlu0 %3006, %v2985
        %v3008 = vpop.permute.xlu0 %3007
        %3011 = vset.pattern.permute.xlu0 0
        %3012 = vperm.xlu0 %3011, %v2986
        %v3013 = vpop.permute.xlu0 %3012
        %3016 = vset.pattern.permute.xlu0 0
        %3017 = vperm.xlu0 %3016, %v2987
        %v3018 = vpop.permute.xlu0 %3017
        %3021 = vset.pattern.permute.xlu0 0
        %3022 = vperm.xlu0 %3021, %v2988
        %v3023 = vpop.permute.xlu0 %3022
        %3026 = vset.pattern.permute.xlu0 0
        %3027 = vperm.xlu0 %3026, %v2989
        %v3028 = vpop.permute.xlu0 %3027
        %3031 = vset.pattern.permute.xlu0 0
        %3032 = vperm.xlu0 %3031, %v2990
        %v3033 = vpop.permute.xlu0 %3032
        %3036 = vset.pattern.permute.xlu0 0
        %3037 = vperm.xlu0 %3036, %v2991
        %v3038 = vpop.permute.xlu0 %3037
        %3041 = vset.pattern.permute.xlu0 0
        %3042 = vperm.xlu0 %3041, %v2992
        %v3043 = vpop.permute.xlu0 %3042
        %3046 = vset.pattern.permute.xlu0 0
        %3047 = vperm.xlu0 %3046, %v2993
        %v3048 = vpop.permute.xlu0 %3047
        %3051 = vset.pattern.permute.xlu0 0
        %3052 = vperm.xlu0 %3051, %v2994
        %v3053 = vpop.permute.xlu0 %3052
        %3056 = vset.pattern.permute.xlu0 0
        %3057 = vperm.xlu0 %3056, %v2995
        %v3058 = vpop.permute.xlu0 %3057
        %3061 = vset.pattern.permute.xlu0 0
        %3062 = vperm.xlu0 %3061, %v2996
        %v3063 = vpop.permute.xlu0 %3062
        %3066 = vset.pattern.permute.xlu0 0
        %3067 = vperm.xlu0 %3066, %v2997
        %v3068 = vpop.permute.xlu0 %3067
        %3071 = vset.pattern.permute.xlu0 0
        %3072 = vperm.xlu0 %3071, %v2998
        %v3073 = vpop.permute.xlu0 %3072
        %3076 = vset.pattern.permute.xlu0 0
        %3077 = vperm.xlu0 %3076, %v2999
        %v3078 = vpop.permute.xlu0 %3077
        %v3096 = vunpack.c.l.b16 %v2936
        %v3097 = vunpack.c.l.b16 %v2937
        %v3098 = vunpack.c.l.b16 %v2938
        %v3099 = vunpack.c.l.b16 %v2939
        %v3100 = vunpack.c.l.b16 %v2940
        %v3101 = vunpack.c.l.b16 %v2941
        %v3102 = vunpack.c.l.b16 %v2942
        %v3103 = vunpack.c.l.b16 %v2943
        %v3104 = vunpack.c.l.b16 %v2944
        %v3105 = vunpack.c.l.b16 %v2945
        %v3106 = vunpack.c.l.b16 %v2946
        %v3107 = vunpack.c.l.b16 %v2947
        %v3108 = vunpack.c.l.b16 %v2948
        %v3109 = vunpack.c.l.b16 %v2949
        %v3110 = vunpack.c.l.b16 %v2950
        %v3111 = vunpack.c.l.b16 %v2951
        %v3112 = vpack.c.b16 %v3097, %v3096
        %v3113 = vpack.c.b16 %v3099, %v3098
        %v3114 = vpack.c.b16 %v3101, %v3100
        %v3115 = vpack.c.b16 %v3103, %v3102
        %v3116 = vpack.c.b16 %v3105, %v3104
        %v3117 = vpack.c.b16 %v3107, %v3106
        %v3118 = vpack.c.b16 %v3109, %v3108
        %v3119 = vpack.c.b16 %v3111, %v3110
        %vm3120 = vcmask 523264
        %v3122 = vsel %vm3120, %v3112, 0
        %v3125 = vsel %vm3120, %v3113, 0
        %v3128 = vsel %vm3120, %v3114, 0
        %v3131 = vsel %vm3120, %v3115, 0
        %v3134 = vsel %vm3120, %v3116, 0
        %v3137 = vsel %vm3120, %v3117, 0
        %v3140 = vsel %vm3120, %v3118, 0
        %v3143 = vsel %vm3120, %v3119, 0
        %3145 = vmatprep.subr.bf16.mxu0 %v2953
        %3146 = vmatpush1.bf16.msra.mxu0 %v2952
        %3147 = vmatprep.subr.bf16.mxu0 %v2961
        %3148 = vmatpush1.bf16.msra.mxu0 %v2960
        %3149 = vmatprep.subr.bf16.mxu0 %v2969
        %3150 = vmatpush1.bf16.msra.mxu0 %v2968
        %3151 = vmatprep.subr.bf16.mxu0 %v2977
        %3152 = vmatpush1.bf16.msra.mxu0 %v2976
        %3153 = vmatprep.subr.bf16.mxu0 0
        %3154 = vmatpush1.bf16.msra.mxu0 0
        %3155 = vmatprep.subr.bf16.mxu0 0
        %3156 = vmatpush1.bf16.msra.mxu0 0
        %3157 = vmatprep.subr.bf16.mxu0 0
        %3158 = vmatpush1.bf16.msra.mxu0 0
        %3159 = vmatprep.subr.bf16.mxu0 0
        %3160 = vmatpush1.bf16.msra.mxu0 0
        %3161 = vmatprep.subr.bf16.mxu0 0
        %3162 = vmatpush1.bf16.msra.mxu0 0
        %3163 = vmatprep.subr.bf16.mxu0 0
        %3164 = vmatpush1.bf16.msra.mxu0 0
        %3165 = vmatprep.subr.bf16.mxu0 0
        %3166 = vmatpush1.bf16.msra.mxu0 0
        %3167 = vmatprep.subr.bf16.mxu0 0
        %3168 = vmatpush1.bf16.msra.mxu0 0
        %3169 = vmatprep.subr.bf16.mxu0 0
        %3170 = vmatpush1.bf16.msra.mxu0 0
        %3171 = vmatprep.subr.bf16.mxu0 0
        %3172 = vmatpush1.bf16.msra.mxu0 0
        %3173 = vmatprep.subr.bf16.mxu0 0
        %3174 = vmatpush1.bf16.msra.mxu0 0
        %3175 = vmatprep.subr.bf16.mxu0 0
        %3176 = vmatpush1.bf16.msra.mxu0 0
        %3177 = vmatprep.mubr.bf16.mxu0 0
        %3178 = vmatmul.mubr.bf16.gmra.mrb[0].mxu0 %v3122
        %v3179 = vpop.f32.mrb[0].mxu0
        %v3180 = vadd.f32 %v3003, %v3179
        %v3181 = vpop.f32.mrb[0].mxu0
        %v3182 = vadd.f32 %v3003, %v3181
        %v3183 = vpop.f32.mrb[0].mxu0
        %v3184 = vadd.f32 %v3008, %v3183
        %v3185 = vpop.f32.mrb[0].mxu0
        %v3186 = vadd.f32 %v3008, %v3185
        %3187 = vmatprep.mubr.bf16.mxu0 0
        %3188 = vmatmul.mubr.bf16.gmra.mrb[0].mxu0 %v3125
        %v3189 = vpop.f32.mrb[0].mxu0
        %v3190 = vadd.f32 %v3013, %v3189
        %v3191 = vpop.f32.mrb[0].mxu0
        %v3192 = vadd.f32 %v3013, %v3191
        %v3193 = vpop.f32.mrb[0].mxu0
        %v3194 = vadd.f32 %v3018, %v3193
        %v3195 = vpop.f32.mrb[0].mxu0
        %v3196 = vadd.f32 %v3018, %v3195
        %3197 = vmatprep.mubr.bf16.mxu0 0
        %3198 = vmatmul.mubr.bf16.gmra.mrb[0].mxu0 %v3128
        %v3199 = vpop.f32.mrb[0].mxu0
        %v3200 = vadd.f32 %v3023, %v3199
        %v3201 = vpop.f32.mrb[0].mxu0
        %v3202 = vadd.f32 %v3023, %v3201
        %v3203 = vpop.f32.mrb[0].mxu0
        %v3204 = vadd.f32 %v3028, %v3203
        %v3205 = vpop.f32.mrb[0].mxu0
        %v3206 = vadd.f32 %v3028, %v3205
        %3207 = vmatprep.mubr.bf16.mxu0 0
        %3208 = vmatmul.mubr.bf16.gmra.mrb[0].mxu0 %v3131
        %v3209 = vpop.f32.mrb[0].mxu0
        %v3210 = vadd.f32 %v3033, %v3209
        %v3211 = vpop.f32.mrb[0].mxu0
        %v3212 = vadd.f32 %v3033, %v3211
        %v3213 = vpop.f32.mrb[0].mxu0
        %v3214 = vadd.f32 %v3038, %v3213
        %v3215 = vpop.f32.mrb[0].mxu0
        %v3216 = vadd.f32 %v3038, %v3215
        %3217 = vmatprep.mubr.bf16.mxu0 0
        %3218 = vmatmul.mubr.bf16.gmra.mrb[0].mxu0 %v3134
        %v3219 = vpop.f32.mrb[0].mxu0
        %v3220 = vadd.f32 %v3043, %v3219
        %v3221 = vpop.f32.mrb[0].mxu0
        %v3222 = vadd.f32 %v3043, %v3221
        %v3223 = vpop.f32.mrb[0].mxu0
        %v3224 = vadd.f32 %v3048, %v3223
        %v3225 = vpop.f32.mrb[0].mxu0
        %v3226 = vadd.f32 %v3048, %v3225
        %3227 = vmatprep.mubr.bf16.mxu0 0
        %3228 = vmatmul.mubr.bf16.gmra.mrb[0].mxu0 %v3137
        %v3229 = vpop.f32.mrb[0].mxu0
        %v3230 = vadd.f32 %v3053, %v3229
        %v3231 = vpop.f32.mrb[0].mxu0
        %v3232 = vadd.f32 %v3053, %v3231
        %v3233 = vpop.f32.mrb[0].mxu0
        %v3234 = vadd.f32 %v3058, %v3233
        %v3235 = vpop.f32.mrb[0].mxu0
        %v3236 = vadd.f32 %v3058, %v3235
        %3237 = vmatprep.mubr.bf16.mxu0 0
        %3238 = vmatmul.mubr.bf16.gmra.mrb[0].mxu0 %v3140
        %v3239 = vpop.f32.mrb[0].mxu0
        %v3240 = vadd.f32 %v3063, %v3239
        %v3241 = vpop.f32.mrb[0].mxu0
        %v3242 = vadd.f32 %v3063, %v3241
        %v3243 = vpop.f32.mrb[0].mxu0
        %v3244 = vadd.f32 %v3068, %v3243
        %v3245 = vpop.f32.mrb[0].mxu0
        %v3246 = vadd.f32 %v3068, %v3245
        %3247 = vmatprep.mubr.bf16.mxu0 0
        %3248 = vmatmul.mubr.bf16.gmra.mrb[0].mxu0 %v3143
        %v3249 = vpop.f32.mrb[0].mxu0
        %v3250 = vadd.f32 %v3073, %v3249
        %v3251 = vpop.f32.mrb[0].mxu0
        %v3252 = vadd.f32 %v3073, %v3251
        %v3253 = vpop.f32.mrb[0].mxu0
        %v3254 = vadd.f32 %v3078, %v3253
        %v3255 = vpop.f32.mrb[0].mxu0
        %v3256 = vadd.f32 %v3078, %v3255
        %3257 = vdwg.mxu0
        %3258 = vmatprep.subr.bf16.mxu0 %v2955
        %3259 = vmatpush1.bf16.msra.mxu0 %v2954
        %3260 = vmatprep.subr.bf16.mxu0 %v2963
        %3261 = vmatpush1.bf16.msra.mxu0 %v2962
        %3262 = vmatprep.subr.bf16.mxu0 %v2971
        %3263 = vmatpush1.bf16.msra.mxu0 %v2970
        %3264 = vmatprep.subr.bf16.mxu0 %v2979
        %3265 = vmatpush1.bf16.msra.mxu0 %v2978
        %3266 = vmatprep.subr.bf16.mxu0 0
        %3267 = vmatpush1.bf16.msra.mxu0 0
        %3268 = vmatprep.subr.bf16.mxu0 0
        %3269 = vmatpush1.bf16.msra.mxu0 0
        %3270 = vmatprep.subr.bf16.mxu0 0
        %3271 = vmatpush1.bf16.msra.mxu0 0
        %3272 = vmatprep.subr.bf16.mxu0 0
        %3273 = vmatpush1.bf16.msra.mxu0 0
        %3274 = vmatprep.subr.bf16.mxu0 0
        %3275 = vmatpush1.bf16.msra.mxu0 0
        %3276 = vmatprep.subr.bf16.mxu0 0
        %3277 = vmatpush1.bf16.msra.mxu0 0
        %3278 = vmatprep.subr.bf16.mxu0 0
        %3279 = vmatpush1.bf16.msra.mxu0 0
        %3280 = vmatprep.subr.bf16.mxu0 0
        %3281 = vmatpush1.bf16.msra.mxu0 0
        %3282 = vmatprep.subr.bf16.mxu0 0
        %3283 = vmatpush1.bf16.msra.mxu0 0
        %3284 = vmatprep.subr.bf16.mxu0 0
        %3285 = vmatpush1.bf16.msra.mxu0 0
        %3286 = vmatprep.subr.bf16.mxu0 0
        %3287 = vmatpush1.bf16.msra.mxu0 0
        %3288 = vmatprep.subr.bf16.mxu0 0
        %3289 = vmatpush1.bf16.msra.mxu0 0
        %3290 = vmatprep.mubr.bf16.mxu0 0
        %3291 = vmatmul.mubr.bf16.gmra.mrb[0].mxu0 %v3122
        %v3292 = vpop.f32.mrb[0].mxu0
        %v3293 = vadd.f32 %v3003, %v3292
        %v3294 = vpop.f32.mrb[0].mxu0
        %v3295 = vadd.f32 %v3003, %v3294
        %v3296 = vpop.f32.mrb[0].mxu0
        %v3297 = vadd.f32 %v3008, %v3296
        %v3298 = vpop.f32.mrb[0].mxu0
        %v3299 = vadd.f32 %v3008, %v3298
        %3300 = vmatprep.mubr.bf16.mxu0 0
        %3301 = vmatmul.mubr.bf16.gmra.mrb[0].mxu0 %v3125
        %v3302 = vpop.f32.mrb[0].mxu0
        %v3303 = vadd.f32 %v3013, %v3302
        %v3304 = vpop.f32.mrb[0].mxu0
        %v3305 = vadd.f32 %v3013, %v3304
        %v3306 = vpop.f32.mrb[0].mxu0
        %v3307 = vadd.f32 %v3018, %v3306
        %v3308 = vpop.f32.mrb[0].mxu0
        %v3309 = vadd.f32 %v3018, %v3308
        %3310 = vmatprep.mubr.bf16.mxu0 0
        %3311 = vmatmul.mubr.bf16.gmra.mrb[0].mxu0 %v3128
        %v3312 = vpop.f32.mrb[0].mxu0
        %v3313 = vadd.f32 %v3023, %v3312
        %v3314 = vpop.f32.mrb[0].mxu0
        %v3315 = vadd.f32 %v3023, %v3314
        %v3316 = vpop.f32.mrb[0].mxu0
        %v3317 = vadd.f32 %v3028, %v3316
        %v3318 = vpop.f32.mrb[0].mxu0
        %v3319 = vadd.f32 %v3028, %v3318
        %3320 = vmatprep.mubr.bf16.mxu0 0
        %3321 = vmatmul.mubr.bf16.gmra.mrb[0].mxu0 %v3131
        %v3322 = vpop.f32.mrb[0].mxu0
        %v3323 = vadd.f32 %v3033, %v3322
        %v3324 = vpop.f32.mrb[0].mxu0
        %v3325 = vadd.f32 %v3033, %v3324
        %v3326 = vpop.f32.mrb[0].mxu0
        %v3327 = vadd.f32 %v3038, %v3326
        %v3328 = vpop.f32.mrb[0].mxu0
        %v3329 = vadd.f32 %v3038, %v3328
        %3330 = vmatprep.mubr.bf16.mxu0 0
        %3331 = vmatmul.mubr.bf16.gmra.mrb[0].mxu0 %v3134
        %v3332 = vpop.f32.mrb[0].mxu0
        %v3333 = vadd.f32 %v3043, %v3332
        %v3334 = vpop.f32.mrb[0].mxu0
        %v3335 = vadd.f32 %v3043, %v3334
        %v3336 = vpop.f32.mrb[0].mxu0
        %v3337 = vadd.f32 %v3048, %v3336
        %v3338 = vpop.f32.mrb[0].mxu0
        %v3339 = vadd.f32 %v3048, %v3338
        %3340 = vmatprep.mubr.bf16.mxu0 0
        %3341 = vmatmul.mubr.bf16.gmra.mrb[0].mxu0 %v3137
        %v3342 = vpop.f32.mrb[0].mxu0
        %v3343 = vadd.f32 %v3053, %v3342
        %v3344 = vpop.f32.mrb[0].mxu0
        %v3345 = vadd.f32 %v3053, %v3344
        %v3346 = vpop.f32.mrb[0].mxu0
        %v3347 = vadd.f32 %v3058, %v3346
        %v3348 = vpop.f32.mrb[0].mxu0
        %v3349 = vadd.f32 %v3058, %v3348
        %3350 = vmatprep.mubr.bf16.mxu0 0
        %3351 = vmatmul.mubr.bf16.gmra.mrb[0].mxu0 %v3140
        %v3352 = vpop.f32.mrb[0].mxu0
        %v3353 = vadd.f32 %v3063, %v3352
        %v3354 = vpop.f32.mrb[0].mxu0
        %v3355 = vadd.f32 %v3063, %v3354
        %v3356 = vpop.f32.mrb[0].mxu0
        %v3357 = vadd.f32 %v3068, %v3356
        %v3358 = vpop.f32.mrb[0].mxu0
        %v3359 = vadd.f32 %v3068, %v3358
        %3360 = vmatprep.mubr.bf16.mxu0 0
        %3361 = vmatmul.mubr.bf16.gmra.mrb[0].mxu0 %v3143
        %v3362 = vpop.f32.mrb[0].mxu0
        %v3363 = vadd.f32 %v3073, %v3362
        %v3364 = vpop.f32.mrb[0].mxu0
        %v3365 = vadd.f32 %v3073, %v3364
        %v3366 = vpop.f32.mrb[0].mxu0
        %v3367 = vadd.f32 %v3078, %v3366
        %v3368 = vpop.f32.mrb[0].mxu0
        %v3369 = vadd.f32 %v3078, %v3368
        %3370 = vdwg.mxu0
        %3371 = vmatprep.subr.bf16.mxu0 %v2957
        %3372 = vmatpush1.bf16.msra.mxu0 %v2956
        %3373 = vmatprep.subr.bf16.mxu0 %v2965
        %3374 = vmatpush1.bf16.msra.mxu0 %v2964
        %3375 = vmatprep.subr.bf16.mxu0 %v2973
        %3376 = vmatpush1.bf16.msra.mxu0 %v2972
        %3377 = vmatprep.subr.bf16.mxu0 %v2981
        %3378 = vmatpush1.bf16.msra.mxu0 %v2980
        %3379 = vmatprep.subr.bf16.mxu0 0
        %3380 = vmatpush1.bf16.msra.mxu0 0
        %3381 = vmatprep.subr.bf16.mxu0 0
        %3382 = vmatpush1.bf16.msra.mxu0 0
        %3383 = vmatprep.subr.bf16.mxu0 0
        %3384 = vmatpush1.bf16.msra.mxu0 0
        %3385 = vmatprep.subr.bf16.mxu0 0
        %3386 = vmatpush1.bf16.msra.mxu0 0
        %3387 = vmatprep.subr.bf16.mxu0 0
        %3388 = vmatpush1.bf16.msra.mxu0 0
        %3389 = vmatprep.subr.bf16.mxu0 0
        %3390 = vmatpush1.bf16.msra.mxu0 0
        %3391 = vmatprep.subr.bf16.mxu0 0
        %3392 = vmatpush1.bf16.msra.mxu0 0
        %3393 = vmatprep.subr.bf16.mxu0 0
        %3394 = vmatpush1.bf16.msra.mxu0 0
        %3395 = vmatprep.subr.bf16.mxu0 0
        %3396 = vmatpush1.bf16.msra.mxu0 0
        %3397 = vmatprep.subr.bf16.mxu0 0
        %3398 = vmatpush1.bf16.msra.mxu0 0
        %3399 = vmatprep.subr.bf16.mxu0 0
        %3400 = vmatpush1.bf16.msra.mxu0 0
        %3401 = vmatprep.subr.bf16.mxu0 0
        %3402 = vmatpush1.bf16.msra.mxu0 0
        %3403 = vmatprep.mubr.bf16.mxu0 0
        %3404 = vmatmul.mubr.bf16.gmra.mrb[0].mxu0 %v3122
        %v3405 = vpop.f32.mrb[0].mxu0
        %v3406 = vadd.f32 %v3003, %v3405
        %v3407 = vpop.f32.mrb[0].mxu0
        %v3408 = vadd.f32 %v3003, %v3407
        %v3409 = vpop.f32.mrb[0].mxu0
        %v3410 = vadd.f32 %v3008, %v3409
        %v3411 = vpop.f32.mrb[0].mxu0
        %v3412 = vadd.f32 %v3008, %v3411
        %3413 = vmatprep.mubr.bf16.mxu0 0
        %3414 = vmatmul.mubr.bf16.gmra.mrb[0].mxu0 %v3125
        %v3415 = vpop.f32.mrb[0].mxu0
        %v3416 = vadd.f32 %v3013, %v3415
        %v3417 = vpop.f32.mrb[0].mxu0
        %v3418 = vadd.f32 %v3013, %v3417
        %v3419 = vpop.f32.mrb[0].mxu0
        %v3420 = vadd.f32 %v3018, %v3419
        %v3421 = vpop.f32.mrb[0].mxu0
        %v3422 = vadd.f32 %v3018, %v3421
        %3423 = vmatprep.mubr.bf16.mxu0 0
        %3424 = vmatmul.mubr.bf16.gmra.mrb[0].mxu0 %v3128
        %v3425 = vpop.f32.mrb[0].mxu0
        %v3426 = vadd.f32 %v3023, %v3425
        %v3427 = vpop.f32.mrb[0].mxu0
        %v3428 = vadd.f32 %v3023, %v3427
        %v3429 = vpop.f32.mrb[0].mxu0
        %v3430 = vadd.f32 %v3028, %v3429
        %v3431 = vpop.f32.mrb[0].mxu0
        %v3432 = vadd.f32 %v3028, %v3431
        %3433 = vmatprep.mubr.bf16.mxu0 0
        %3434 = vmatmul.mubr.bf16.gmra.mrb[0].mxu0 %v3131
        %v3435 = vpop.f32.mrb[0].mxu0
        %v3436 = vadd.f32 %v3033, %v3435
        %v3437 = vpop.f32.mrb[0].mxu0
        %v3438 = vadd.f32 %v3033, %v3437
        %v3439 = vpop.f32.mrb[0].mxu0
        %v3440 = vadd.f32 %v3038, %v3439
        %v3441 = vpop.f32.mrb[0].mxu0
        %v3442 = vadd.f32 %v3038, %v3441
        %3443 = vmatprep.mubr.bf16.mxu0 0
        %3444 = vmatmul.mubr.bf16.gmra.mrb[0].mxu0 %v3134
        %v3445 = vpop.f32.mrb[0].mxu0
        %v3446 = vadd.f32 %v3043, %v3445
        %v3447 = vpop.f32.mrb[0].mxu0
        %v3448 = vadd.f32 %v3043, %v3447
        %v3449 = vpop.f32.mrb[0].mxu0
        %v3450 = vadd.f32 %v3048, %v3449
        %v3451 = vpop.f32.mrb[0].mxu0
        %v3452 = vadd.f32 %v3048, %v3451
        %3453 = vmatprep.mubr.bf16.mxu0 0
        %3454 = vmatmul.mubr.bf16.gmra.mrb[0].mxu0 %v3137
        %v3455 = vpop.f32.mrb[0].mxu0
        %v3456 = vadd.f32 %v3053, %v3455
        %v3457 = vpop.f32.mrb[0].mxu0
        %v3458 = vadd.f32 %v3053, %v3457
        %v3459 = vpop.f32.mrb[0].mxu0
        %v3460 = vadd.f32 %v3058, %v3459
        %v3461 = vpop.f32.mrb[0].mxu0
        %v3462 = vadd.f32 %v3058, %v3461
        %3463 = vmatprep.mubr.bf16.mxu0 0
        %3464 = vmatmul.mubr.bf16.gmra.mrb[0].mxu0 %v3140
        %v3465 = vpop.f32.mrb[0].mxu0
        %v3466 = vadd.f32 %v3063, %v3465
        %v3467 = vpop.f32.mrb[0].mxu0
        %v3468 = vadd.f32 %v3063, %v3467
        %v3469 = vpop.f32.mrb[0].mxu0
        %v3470 = vadd.f32 %v3068, %v3469
        %v3471 = vpop.f32.mrb[0].mxu0
        %v3472 = vadd.f32 %v3068, %v3471
        %3473 = vmatprep.mubr.bf16.mxu0 0
        %3474 = vmatmul.mubr.bf16.gmra.mrb[0].mxu0 %v3143
        %v3475 = vpop.f32.mrb[0].mxu0
        %v3476 = vadd.f32 %v3073, %v3475
        %v3477 = vpop.f32.mrb[0].mxu0
        %v3478 = vadd.f32 %v3073, %v3477
        %v3479 = vpop.f32.mrb[0].mxu0
        %v3480 = vadd.f32 %v3078, %v3479
        %v3481 = vpop.f32.mrb[0].mxu0
        %v3482 = vadd.f32 %v3078, %v3481
        %3483 = vdwg.mxu0
        %3484 = vmatprep.subr.bf16.mxu0 %v2959
        %3485 = vmatpush1.bf16.msra.mxu0 %v2958
        %3486 = vmatprep.subr.bf16.mxu0 %v2967
        %3487 = vmatpush1.bf16.msra.mxu0 %v2966
        %3488 = vmatprep.subr.bf16.mxu0 %v2975
        %3489 = vmatpush1.bf16.msra.mxu0 %v2974
        %3490 = vmatprep.subr.bf16.mxu0 %v2983
        %3491 = vmatpush1.bf16.msra.mxu0 %v2982
        %3492 = vmatprep.subr.bf16.mxu0 0
        %3493 = vmatpush1.bf16.msra.mxu0 0
        %3494 = vmatprep.subr.bf16.mxu0 0
        %3495 = vmatpush1.bf16.msra.mxu0 0
        %3496 = vmatprep.subr.bf16.mxu0 0
        %3497 = vmatpush1.bf16.msra.mxu0 0
        %3498 = vmatprep.subr.bf16.mxu0 0
        %3499 = vmatpush1.bf16.msra.mxu0 0
        %3500 = vmatprep.subr.bf16.mxu0 0
        %3501 = vmatpush1.bf16.msra.mxu0 0
        %3502 = vmatprep.subr.bf16.mxu0 0
        %3503 = vmatpush1.bf16.msra.mxu0 0
        %3504 = vmatprep.subr.bf16.mxu0 0
        %3505 = vmatpush1.bf16.msra.mxu0 0
        %3506 = vmatprep.subr.bf16.mxu0 0
        %3507 = vmatpush1.bf16.msra.mxu0 0
        %3508 = vmatprep.subr.bf16.mxu0 0
        %3509 = vmatpush1.bf16.msra.mxu0 0
        %3510 = vmatprep.subr.bf16.mxu0 0
        %3511 = vmatpush1.bf16.msra.mxu0 0
        %3512 = vmatprep.subr.bf16.mxu0 0
        %3513 = vmatpush1.bf16.msra.mxu0 0
        %3514 = vmatprep.subr.bf16.mxu0 0
        %3515 = vmatpush1.bf16.msra.mxu0 0
        %3516 = vmatprep.mubr.bf16.mxu0 0
        %3517 = vmatmul.mubr.bf16.gmra.mrb[0].mxu0 %v3122
        %v3518 = vpop.f32.mrb[0].mxu0
        %v3519 = vadd.f32 %v3003, %v3518
        %v3520 = vpop.f32.mrb[0].mxu0
        %v3521 = vadd.f32 %v3003, %v3520
        %v3522 = vpop.f32.mrb[0].mxu0
        %v3523 = vadd.f32 %v3008, %v3522
        %v3524 = vpop.f32.mrb[0].mxu0
        %v3525 = vadd.f32 %v3008, %v3524
        %3526 = vmatprep.mubr.bf16.mxu0 0
        %3527 = vmatmul.mubr.bf16.gmra.mrb[0].mxu0 %v3125
        %v3528 = vpop.f32.mrb[0].mxu0
        %v3529 = vadd.f32 %v3013, %v3528
        %v3530 = vpop.f32.mrb[0].mxu0
        %v3531 = vadd.f32 %v3013, %v3530
        %v3532 = vpop.f32.mrb[0].mxu0
        %v3533 = vadd.f32 %v3018, %v3532
        %v3534 = vpop.f32.mrb[0].mxu0
        %v3535 = vadd.f32 %v3018, %v3534
        %3536 = vmatprep.mubr.bf16.mxu0 0
        %3537 = vmatmul.mubr.bf16.gmra.mrb[0].mxu0 %v3128
        %v3538 = vpop.f32.mrb[0].mxu0
        %v3539 = vadd.f32 %v3023, %v3538
        %v3540 = vpop.f32.mrb[0].mxu0
        %v3541 = vadd.f32 %v3023, %v3540
        %v3542 = vpop.f32.mrb[0].mxu0
        %v3543 = vadd.f32 %v3028, %v3542
        %v3544 = vpop.f32.mrb[0].mxu0
        %v3545 = vadd.f32 %v3028, %v3544
        %3546 = vmatprep.mubr.bf16.mxu0 0
        %3547 = vmatmul.mubr.bf16.gmra.mrb[0].mxu0 %v3131
        %v3548 = vpop.f32.mrb[0].mxu0
        %v3549 = vadd.f32 %v3033, %v3548
        %v3550 = vpop.f32.mrb[0].mxu0
        %v3551 = vadd.f32 %v3033, %v3550
        %v3552 = vpop.f32.mrb[0].mxu0
        %v3553 = vadd.f32 %v3038, %v3552
        %v3554 = vpop.f32.mrb[0].mxu0
        %v3555 = vadd.f32 %v3038, %v3554
        %3556 = vmatprep.mubr.bf16.mxu0 0
        %3557 = vmatmul.mubr.bf16.gmra.mrb[0].mxu0 %v3134
        %v3558 = vpop.f32.mrb[0].mxu0
        %v3559 = vadd.f32 %v3043, %v3558
        %v3560 = vpop.f32.mrb[0].mxu0
        %v3561 = vadd.f32 %v3043, %v3560
        %v3562 = vpop.f32.mrb[0].mxu0
        %v3563 = vadd.f32 %v3048, %v3562
        %v3564 = vpop.f32.mrb[0].mxu0
        %v3565 = vadd.f32 %v3048, %v3564
        %3566 = vmatprep.mubr.bf16.mxu0 0
        %3567 = vmatmul.mubr.bf16.gmra.mrb[0].mxu0 %v3137
        %v3568 = vpop.f32.mrb[0].mxu0
        %v3569 = vadd.f32 %v3053, %v3568
        %v3570 = vpop.f32.mrb[0].mxu0
        %v3571 = vadd.f32 %v3053, %v3570
        %v3572 = vpop.f32.mrb[0].mxu0
        %v3573 = vadd.f32 %v3058, %v3572
        %v3574 = vpop.f32.mrb[0].mxu0
        %v3575 = vadd.f32 %v3058, %v3574
        %3576 = vmatprep.mubr.bf16.mxu0 0
        %3577 = vmatmul.mubr.bf16.gmra.mrb[0].mxu0 %v3140
        %v3578 = vpop.f32.mrb[0].mxu0
        %v3579 = vadd.f32 %v3063, %v3578
        %v3580 = vpop.f32.mrb[0].mxu0
        %v3581 = vadd.f32 %v3063, %v3580
        %v3582 = vpop.f32.mrb[0].mxu0
        %v3583 = vadd.f32 %v3068, %v3582
        %v3584 = vpop.f32.mrb[0].mxu0
        %v3585 = vadd.f32 %v3068, %v3584
        %3586 = vmatprep.mubr.bf16.mxu0 0
        %3587 = vmatmul.mubr.bf16.gmra.mrb[0].mxu0 %v3143
        %v3588 = vpop.f32.mrb[0].mxu0
        %v3589 = vadd.f32 %v3073, %v3588
        %v3590 = vpop.f32.mrb[0].mxu0
        %v3591 = vadd.f32 %v3073, %v3590
        %v3592 = vpop.f32.mrb[0].mxu0
        %v3593 = vadd.f32 %v3078, %v3592
        %v3594 = vpop.f32.mrb[0].mxu0
        %v3595 = vadd.f32 %v3078, %v3594
        %3596 = vdwg.mxu0
        %v3597 = vadd.f32 %v3180, %v618
        %v3598 = vadd.f32 %v3182, %v619
        %v3599 = vadd.f32 %v3293, %v620
        %v3600 = vadd.f32 %v3295, %v621
        %v3601 = vadd.f32 %v3406, %v622
        %v3602 = vadd.f32 %v3408, %v623
        %v3603 = vadd.f32 %v3519, %v624
        %v3604 = vadd.f32 %v3521, %v625
        %v3605 = vadd.f32 %v3184, %v626
        %v3606 = vadd.f32 %v3186, %v627
        %v3607 = vadd.f32 %v3297, %v628
        %v3608 = vadd.f32 %v3299, %v629
        %v3609 = vadd.f32 %v3410, %v630
        %v3610 = vadd.f32 %v3412, %v631
        %v3611 = vadd.f32 %v3523, %v632
        %v3612 = vadd.f32 %v3525, %v633
        %v3613 = vadd.f32 %v3190, %v634
        %v3614 = vadd.f32 %v3192, %v635
        %v3615 = vadd.f32 %v3303, %v636
        %v3616 = vadd.f32 %v3305, %v637
        %v3617 = vadd.f32 %v3416, %v638
        %v3618 = vadd.f32 %v3418, %v639
        %v3619 = vadd.f32 %v3529, %v640
        %v3620 = vadd.f32 %v3531, %v641
        %v3621 = vadd.f32 %v3194, %v642
        %v3622 = vadd.f32 %v3196, %v643
        %v3623 = vadd.f32 %v3307, %v644
        %v3624 = vadd.f32 %v3309, %v645
        %v3625 = vadd.f32 %v3420, %v646
        %v3626 = vadd.f32 %v3422, %v647
        %v3627 = vadd.f32 %v3533, %v648
        %v3628 = vadd.f32 %v3535, %v649
        %v3629 = vadd.f32 %v3200, %v650
        %v3630 = vadd.f32 %v3202, %v651
        %v3631 = vadd.f32 %v3313, %v652
        %v3632 = vadd.f32 %v3315, %v653
        %v3633 = vadd.f32 %v3426, %v654
        %v3634 = vadd.f32 %v3428, %v655
        %v3635 = vadd.f32 %v3539, %v656
        %v3636 = vadd.f32 %v3541, %v657
        %v3637 = vadd.f32 %v3204, %v658
        %v3638 = vadd.f32 %v3206, %v659
        %v3639 = vadd.f32 %v3317, %v660
        %v3640 = vadd.f32 %v3319, %v661
        %v3641 = vadd.f32 %v3430, %v662
        %v3642 = vadd.f32 %v3432, %v663
        %v3643 = vadd.f32 %v3543, %v664
        %v3644 = vadd.f32 %v3545, %v665
        %v3645 = vadd.f32 %v3210, %v666
        %v3646 = vadd.f32 %v3212, %v667
        %v3647 = vadd.f32 %v3323, %v668
        %v3648 = vadd.f32 %v3325, %v669
        %v3649 = vadd.f32 %v3436, %v670
        %v3650 = vadd.f32 %v3438, %v671
        %v3651 = vadd.f32 %v3549, %v672
        %v3652 = vadd.f32 %v3551, %v673
        %v3653 = vadd.f32 %v3214, %v674
        %v3654 = vadd.f32 %v3216, %v675
        %v3655 = vadd.f32 %v3327, %v676
        %v3656 = vadd.f32 %v3329, %v677
        %v3657 = vadd.f32 %v3440, %v678
        %v3658 = vadd.f32 %v3442, %v679
        %v3659 = vadd.f32 %v3553, %v680
        %v3660 = vadd.f32 %v3555, %v681
        %v3661 = vmul.f32 %v3597, 0.70710677
        %v3662 = vmul.f32 %v3598, 0.70710677
        %v3663 = vmul.f32 %v3599, 0.70710677
        %v3664 = vmul.f32 %v3600, 0.70710677
        %v3665 = vmul.f32 %v3601, 0.70710677
        %v3666 = vmul.f32 %v3602, 0.70710677
        %v3667 = vmul.f32 %v3603, 0.70710677
        %v3668 = vmul.f32 %v3604, 0.70710677
        %v3669 = vmul.f32 %v3605, 0.70710677
        %v3670 = vmul.f32 %v3606, 0.70710677
        %v3671 = vmul.f32 %v3607, 0.70710677
        %v3672 = vmul.f32 %v3608, 0.70710677
        %v3673 = vmul.f32 %v3609, 0.70710677
        %v3674 = vmul.f32 %v3610, 0.70710677
        %v3675 = vmul.f32 %v3611, 0.70710677
        %v3676 = vmul.f32 %v3612, 0.70710677
        %v3677 = vmul.f32 %v3613, 0.70710677
        %v3678 = vmul.f32 %v3614, 0.70710677
        %v3679 = vmul.f32 %v3615, 0.70710677
        %v3680 = vmul.f32 %v3616, 0.70710677
        %v3681 = vmul.f32 %v3617, 0.70710677
        %v3682 = vmul.f32 %v3618, 0.70710677
        %v3683 = vmul.f32 %v3619, 0.70710677
        %v3684 = vmul.f32 %v3620, 0.70710677
        %v3685 = vmul.f32 %v3621, 0.70710677
        %v3686 = vmul.f32 %v3622, 0.70710677
        %v3687 = vmul.f32 %v3623, 0.70710677
        %v3688 = vmul.f32 %v3624, 0.70710677
        %v3689 = vmul.f32 %v3625, 0.70710677
        %v3690 = vmul.f32 %v3626, 0.70710677
        %v3691 = vmul.f32 %v3627, 0.70710677
        %v3692 = vmul.f32 %v3628, 0.70710677
        %v3693 = vmul.f32 %v3629, 0.70710677
        %v3694 = vmul.f32 %v3630, 0.70710677
        %v3695 = vmul.f32 %v3631, 0.70710677
        %v3696 = vmul.f32 %v3632, 0.70710677
        %v3697 = vmul.f32 %v3633, 0.70710677
        %v3698 = vmul.f32 %v3634, 0.70710677
        %v3699 = vmul.f32 %v3635, 0.70710677
        %v3700 = vmul.f32 %v3636, 0.70710677
        %v3701 = vmul.f32 %v3637, 0.70710677
        %v3702 = vmul.f32 %v3638, 0.70710677
        %v3703 = vmul.f32 %v3639, 0.70710677
        %v3704 = vmul.f32 %v3640, 0.70710677
        %v3705 = vmul.f32 %v3641, 0.70710677
        %v3706 = vmul.f32 %v3642, 0.70710677
        %v3707 = vmul.f32 %v3643, 0.70710677
        %v3708 = vmul.f32 %v3644, 0.70710677
        %v3709 = vmul.f32 %v3645, 0.70710677
        %v3710 = vmul.f32 %v3646, 0.70710677
        %v3711 = vmul.f32 %v3647, 0.70710677
        %v3712 = vmul.f32 %v3648, 0.70710677
        %v3713 = vmul.f32 %v3649, 0.70710677
        %v3714 = vmul.f32 %v3650, 0.70710677
        %v3715 = vmul.f32 %v3651, 0.70710677
        %v3716 = vmul.f32 %v3652, 0.70710677
        %v3717 = vmul.f32 %v3653, 0.70710677
        %v3718 = vmul.f32 %v3654, 0.70710677
        %v3719 = vmul.f32 %v3655, 0.70710677
        %v3720 = vmul.f32 %v3656, 0.70710677
        %v3721 = vmul.f32 %v3657, 0.70710677
        %v3722 = vmul.f32 %v3658, 0.70710677
        %v3723 = vmul.f32 %v3659, 0.70710677
        %v3724 = vmul.f32 %v3660, 0.70710677
        %3725 = vst [vmem:[%s591] sm:$0xff] %v3661
        %3726 = vst [vmem:[%s591 + $0x8] sm:$0xff] %v3662
        %3727 = vst [vmem:[%s591 + $0x10] sm:$0xff] %v3663
        %3728 = vst [vmem:[%s591 + $0x18] sm:$0xff] %v3664
        %3729 = vst [vmem:[%s591 + $0x20] sm:$0xff] %v3665
        %3730 = vst [vmem:[%s591 + $0x28] sm:$0xff] %v3666
        %3731 = vst [vmem:[%s591 + $0x30] sm:$0xff] %v3667
        %3732 = vst [vmem:[%s591 + $0x38] sm:$0xff] %v3668
        %3733 = vst [vmem:[%s591 + $0x40] sm:$0xff] %v3669
        %3734 = vst [vmem:[%s591 + $0x48] sm:$0xff] %v3670
        %3735 = vst [vmem:[%s591 + $0x50] sm:$0xff] %v3671
        %3736 = vst [vmem:[%s591 + $0x58] sm:$0xff] %v3672
        %3737 = vst [vmem:[%s591 + $0x60] sm:$0xff] %v3673
        %3738 = vst [vmem:[%s591 + $0x68] sm:$0xff] %v3674
        %3739 = vst [vmem:[%s591 + $0x70] sm:$0xff] %v3675
        %3740 = vst [vmem:[%s591 + $0x78] sm:$0xff] %v3676
        %3741 = vst [vmem:[%s591 + $0x80] sm:$0xff] %v3677
        %3742 = vst [vmem:[%s591 + $0x88] sm:$0xff] %v3678
        %3743 = vst [vmem:[%s591 + $0x90] sm:$0xff] %v3679
        %3744 = vst [vmem:[%s591 + $0x98] sm:$0xff] %v3680
        %3745 = vst [vmem:[%s591 + $0xa0] sm:$0xff] %v3681
        %3746 = vst [vmem:[%s591 + $0xa8] sm:$0xff] %v3682
        %3747 = vst [vmem:[%s591 + $0xb0] sm:$0xff] %v3683
        %3748 = vst [vmem:[%s591 + $0xb8] sm:$0xff] %v3684
        %3749 = vst [vmem:[%s591 + $0xc0] sm:$0xff] %v3685
        %3750 = vst [vmem:[%s591 + $0xc8] sm:$0xff] %v3686
        %3751 = vst [vmem:[%s591 + $0xd0] sm:$0xff] %v3687
        %3752 = vst [vmem:[%s591 + $0xd8] sm:$0xff] %v3688
        %3753 = vst [vmem:[%s591 + $0xe0] sm:$0xff] %v3689
        %3754 = vst [vmem:[%s591 + $0xe8] sm:$0xff] %v3690
        %3755 = vst [vmem:[%s591 + $0xf0] sm:$0xff] %v3691
        %3756 = vst [vmem:[%s591 + $0xf8] sm:$0xff] %v3692
        %3757 = vst [vmem:[%s591 + $0x100] sm:$0xff] %v3693
        %3758 = vst [vmem:[%s591 + $0x108] sm:$0xff] %v3694
        %3759 = vst [vmem:[%s591 + $0x110] sm:$0xff] %v3695
        %3760 = vst [vmem:[%s591 + $0x118] sm:$0xff] %v3696
        %3761 = vst [vmem:[%s591 + $0x120] sm:$0xff] %v3697
        %3762 = vst [vmem:[%s591 + $0x128] sm:$0xff] %v3698
        %3763 = vst [vmem:[%s591 + $0x130] sm:$0xff] %v3699
        %3764 = vst [vmem:[%s591 + $0x138] sm:$0xff] %v3700
        %3765 = vst [vmem:[%s591 + $0x140] sm:$0xff] %v3701
        %3766 = vst [vmem:[%s591 + $0x148] sm:$0xff] %v3702
        %3767 = vst [vmem:[%s591 + $0x150] sm:$0xff] %v3703
        %3768 = vst [vmem:[%s591 + $0x158] sm:$0xff] %v3704
        %3769 = vst [vmem:[%s591 + $0x160] sm:$0xff] %v3705
        %3770 = vst [vmem:[%s591 + $0x168] sm:$0xff] %v3706
        %3771 = vst [vmem:[%s591 + $0x170] sm:$0xff] %v3707
        %3772 = vst [vmem:[%s591 + $0x178] sm:$0xff] %v3708
        %3773 = vst [vmem:[%s591 + $0x180] sm:$0xff] %v3709
        %3774 = vst [vmem:[%s591 + $0x188] sm:$0xff] %v3710
        %3775 = vst [vmem:[%s591 + $0x190] sm:$0xff] %v3711
        %3776 = vst [vmem:[%s591 + $0x198] sm:$0xff] %v3712
        %3777 = vst [vmem:[%s591 + $0x1a0] sm:$0xff] %v3713
        %3778 = vst [vmem:[%s591 + $0x1a8] sm:$0xff] %v3714
        %3779 = vst [vmem:[%s591 + $0x1b0] sm:$0xff] %v3715
        %3780 = vst [vmem:[%s591 + $0x1b8] sm:$0xff] %v3716
        %3781 = vst [vmem:[%s591 + $0x1c0] sm:$0xff] %v3717
        %3782 = vst [vmem:[%s591 + $0x1c8] sm:$0xff] %v3718
        %3783 = vst [vmem:[%s591 + $0x1d0] sm:$0xff] %v3719
        %3784 = vst [vmem:[%s591 + $0x1d8] sm:$0xff] %v3720
        %3785 = vst [vmem:[%s591 + $0x1e0] sm:$0xff] %v3721
        %3786 = vst [vmem:[%s591 + $0x1e8] sm:$0xff] %v3722
        %3787 = vst [vmem:[%s591 + $0x1f0] sm:$0xff] %v3723
        %3788 = vst [vmem:[%s591 + $0x1f8] sm:$0xff] %v3724
        %3789 = vst [vmem:[%s597] sm:$0xff] %v3220
        %3790 = vst [vmem:[%s597 + $0x8] sm:$0xff] %v3222
        %3791 = vst [vmem:[%s597 + $0x10] sm:$0xff] %v3333
        %3792 = vst [vmem:[%s597 + $0x18] sm:$0xff] %v3335
        %3793 = vst [vmem:[%s597 + $0x20] sm:$0xff] %v3446
        %3794 = vst [vmem:[%s597 + $0x28] sm:$0xff] %v3448
        %3795 = vst [vmem:[%s597 + $0x30] sm:$0xff] %v3559
        %3796 = vst [vmem:[%s597 + $0x38] sm:$0xff] %v3561
        %3797 = vst [vmem:[%s597 + $0x40] sm:$0xff] %v3224
        %3798 = vst [vmem:[%s597 + $0x48] sm:$0xff] %v3226
        %3799 = vst [vmem:[%s597 + $0x50] sm:$0xff] %v3337
        %3800 = vst [vmem:[%s597 + $0x58] sm:$0xff] %v3339
        %3801 = vst [vmem:[%s597 + $0x60] sm:$0xff] %v3450
        %3802 = vst [vmem:[%s597 + $0x68] sm:$0xff] %v3452
        %3803 = vst [vmem:[%s597 + $0x70] sm:$0xff] %v3563
        %3804 = vst [vmem:[%s597 + $0x78] sm:$0xff] %v3565
        %3805 = vst [vmem:[%s597 + $0x80] sm:$0xff] %v3230
        %3806 = vst [vmem:[%s597 + $0x88] sm:$0xff] %v3232
        %3807 = vst [vmem:[%s597 + $0x90] sm:$0xff] %v3343
        %3808 = vst [vmem:[%s597 + $0x98] sm:$0xff] %v3345
        %3809 = vst [vmem:[%s597 + $0xa0] sm:$0xff] %v3456
        %3810 = vst [vmem:[%s597 + $0xa8] sm:$0xff] %v3458
        %3811 = vst [vmem:[%s597 + $0xb0] sm:$0xff] %v3569
        %3812 = vst [vmem:[%s597 + $0xb8] sm:$0xff] %v3571
        %3813 = vst [vmem:[%s597 + $0xc0] sm:$0xff] %v3234
        %3814 = vst [vmem:[%s597 + $0xc8] sm:$0xff] %v3236
        %3815 = vst [vmem:[%s597 + $0xd0] sm:$0xff] %v3347
        %3816 = vst [vmem:[%s597 + $0xd8] sm:$0xff] %v3349
        %3817 = vst [vmem:[%s597 + $0xe0] sm:$0xff] %v3460
        %3818 = vst [vmem:[%s597 + $0xe8] sm:$0xff] %v3462
        %3819 = vst [vmem:[%s597 + $0xf0] sm:$0xff] %v3573
        %3820 = vst [vmem:[%s597 + $0xf8] sm:$0xff] %v3575
        %3821 = vst [vmem:[%s597 + $0x100] sm:$0xff] %v3240
        %3822 = vst [vmem:[%s597 + $0x108] sm:$0xff] %v3242
        %3823 = vst [vmem:[%s597 + $0x110] sm:$0xff] %v3353
        %3824 = vst [vmem:[%s597 + $0x118] sm:$0xff] %v3355
        %3825 = vst [vmem:[%s597 + $0x120] sm:$0xff] %v3466
        %3826 = vst [vmem:[%s597 + $0x128] sm:$0xff] %v3468
        %3827 = vst [vmem:[%s597 + $0x130] sm:$0xff] %v3579
        %3828 = vst [vmem:[%s597 + $0x138] sm:$0xff] %v3581
        %3829 = vst [vmem:[%s597 + $0x140] sm:$0xff] %v3244
        %3830 = vst [vmem:[%s597 + $0x148] sm:$0xff] %v3246
        %3831 = vst [vmem:[%s597 + $0x150] sm:$0xff] %v3357
        %3832 = vst [vmem:[%s597 + $0x158] sm:$0xff] %v3359
        %3833 = vst [vmem:[%s597 + $0x160] sm:$0xff] %v3470
        %3834 = vst [vmem:[%s597 + $0x168] sm:$0xff] %v3472
        %3835 = vst [vmem:[%s597 + $0x170] sm:$0xff] %v3583
        %3836 = vst [vmem:[%s597 + $0x178] sm:$0xff] %v3585
        %3837 = vst [vmem:[%s597 + $0x180] sm:$0xff] %v3250
        %3838 = vst [vmem:[%s597 + $0x188] sm:$0xff] %v3252
        %3839 = vst [vmem:[%s597 + $0x190] sm:$0xff] %v3363
        %3840 = vst [vmem:[%s597 + $0x198] sm:$0xff] %v3365
        %3841 = vst [vmem:[%s597 + $0x1a0] sm:$0xff] %v3476
        %3842 = vst [vmem:[%s597 + $0x1a8] sm:$0xff] %v3478
        %3843 = vst [vmem:[%s597 + $0x1b0] sm:$0xff] %v3589
        %3844 = vst [vmem:[%s597 + $0x1b8] sm:$0xff] %v3591
        %3845 = vst [vmem:[%s597 + $0x1c0] sm:$0xff] %v3254
        %3846 = vst [vmem:[%s597 + $0x1c8] sm:$0xff] %v3256
        %3847 = vst [vmem:[%s597 + $0x1d0] sm:$0xff] %v3367
        %3848 = vst [vmem:[%s597 + $0x1d8] sm:$0xff] %v3369
        %3849 = vst [vmem:[%s597 + $0x1e0] sm:$0xff] %v3480
        %3850 = vst [vmem:[%s597 + $0x1e8] sm:$0xff] %v3482
        %3851 = vst [vmem:[%s597 + $0x1f0] sm:$0xff] %v3593
        %3852 = vst [vmem:[%s597 + $0x1f8] sm:$0xff] %v3595
        %s3853 = sand.u32 %s237, 1
        %s3854 = sand.u32 %s237, 1
        %s3855 = smul.addr %s3854, 512
        %s3856 = scalar_lea.vmem [#allocation4], %s3855
        %s3857 = sand.u32 %s265, 1
        %s3858 = sand.u32 %s265, 1
        %s3859 = smul.addr %s3858, 512
        %s3860 = scalar_lea.vmem [#allocation5], %s3859
        // Predicated region
        $region99: #{diffwave_block.1} parent=89 // pred_check
          %p3861 = pneg %p247
        $region100: #{diffwave_block.1} parent=89 // pred_check_branch
          %3863 = sbr.rel (%p3861) target = $region102
        $region101: #{diffwave_block.1} parent=89 // pred_region
          %s3864 = smul.u32 8, %s26
          %s3865 = smul.addr %s25, 128
          %s3866 = sadd.s32 %s3864, %s3865
          %s3867 = smul.addr %s3866, 8
          %s3868 = scalar_lea.vmem %s8, %s3867
          // Predicated region
          $region103: #{diffwave_block.1} parent=101 // pred_check
            _
          $region104: #{diffwave_block.1} parent=101 // pred_check_branch
            %3870 = sbr.rel (0) target = $region106
          $region105: #{diffwave_block.1} parent=101 // pred_region
            // Predicated region
            $region107: #{diffwave_block.1} parent=105 // pred_check
              _
            $region108: #{diffwave_block.1} parent=105 // pred_check_branch
              %3872 = sbr.rel (0) target = $region110
            $region109: #{diffwave_block.1} parent=105 // pred_region
              loop: start=0, step=1, limit=1
              $region111: #{diffwave_block.1} parent=109 // loop_pre_header
                _
              $region112: #{diffwave_block.1} parent=109 // loop_header
                %s3874 = sphi 0, %s3878
                %p3875 = scmp.ge.s32.totalorder %s3874, 1
                %s3879 = sphi %s3856, %s3856
                %s3880 = sphi %s3868, %s3868
              $region113: #{diffwave_block.1} parent=109 // loop_header_branch
                %3877 = sbr.rel (%p3875) target = $region117
              $region114: #{diffwave_block.1} parent=109 // loop_body
                %v3881 = vld [vmem:[%s3879] sm:$0xff]
                %3882 = vst [vmem:[%s3880] sm:$0xff] %v3881
                %v3883 = vld [vmem:[%s3879 + $0x8] sm:$0xff]
                %3884 = vst [vmem:[%s3880 + $0x8] sm:$0xff] %v3883
                %v3885 = vld [vmem:[%s3879 + $0x10] sm:$0xff]
                %3886 = vst [vmem:[%s3880 + $0x10] sm:$0xff] %v3885
                %v3887 = vld [vmem:[%s3879 + $0x18] sm:$0xff]
                %3888 = vst [vmem:[%s3880 + $0x18] sm:$0xff] %v3887
                %v3889 = vld [vmem:[%s3879 + $0x20] sm:$0xff]
                %3890 = vst [vmem:[%s3880 + $0x20] sm:$0xff] %v3889
                %v3891 = vld [vmem:[%s3879 + $0x28] sm:$0xff]
                %3892 = vst [vmem:[%s3880 + $0x28] sm:$0xff] %v3891
                %v3893 = vld [vmem:[%s3879 + $0x30] sm:$0xff]
                %3894 = vst [vmem:[%s3880 + $0x30] sm:$0xff] %v3893
                %v3895 = vld [vmem:[%s3879 + $0x38] sm:$0xff]
                %3896 = vst [vmem:[%s3880 + $0x38] sm:$0xff] %v3895
                %v3897 = vld [vmem:[%s3879 + $0x40] sm:$0xff]
                %3898 = vst [vmem:[%s3880 + $0x80] sm:$0xff] %v3897
                %v3899 = vld [vmem:[%s3879 + $0x48] sm:$0xff]
                %3900 = vst [vmem:[%s3880 + $0x88] sm:$0xff] %v3899
                %v3901 = vld [vmem:[%s3879 + $0x50] sm:$0xff]
                %3902 = vst [vmem:[%s3880 + $0x90] sm:$0xff] %v3901
                %v3903 = vld [vmem:[%s3879 + $0x58] sm:$0xff]
                %3904 = vst [vmem:[%s3880 + $0x98] sm:$0xff] %v3903
                %v3905 = vld [vmem:[%s3879 + $0x60] sm:$0xff]
                %3906 = vst [vmem:[%s3880 + $0xa0] sm:$0xff] %v3905
                %v3907 = vld [vmem:[%s3879 + $0x68] sm:$0xff]
                %3908 = vst [vmem:[%s3880 + $0xa8] sm:$0xff] %v3907
                %v3909 = vld [vmem:[%s3879 + $0x70] sm:$0xff]
                %3910 = vst [vmem:[%s3880 + $0xb0] sm:$0xff] %v3909
                %v3911 = vld [vmem:[%s3879 + $0x78] sm:$0xff]
                %3912 = vst [vmem:[%s3880 + $0xb8] sm:$0xff] %v3911
                %v3913 = vld [vmem:[%s3879 + $0x80] sm:$0xff]
                %3914 = vst [vmem:[%s3880 + $0x100] sm:$0xff] %v3913
                %v3915 = vld [vmem:[%s3879 + $0x88] sm:$0xff]
                %3916 = vst [vmem:[%s3880 + $0x108] sm:$0xff] %v3915
                %v3917 = vld [vmem:[%s3879 + $0x90] sm:$0xff]
                %3918 = vst [vmem:[%s3880 + $0x110] sm:$0xff] %v3917
                %v3919 = vld [vmem:[%s3879 + $0x98] sm:$0xff]
                %3920 = vst [vmem:[%s3880 + $0x118] sm:$0xff] %v3919
                %v3921 = vld [vmem:[%s3879 + $0xa0] sm:$0xff]
                %3922 = vst [vmem:[%s3880 + $0x120] sm:$0xff] %v3921
                %v3923 = vld [vmem:[%s3879 + $0xa8] sm:$0xff]
                %3924 = vst [vmem:[%s3880 + $0x128] sm:$0xff] %v3923
                %v3925 = vld [vmem:[%s3879 + $0xb0] sm:$0xff]
                %3926 = vst [vmem:[%s3880 + $0x130] sm:$0xff] %v3925
                %v3927 = vld [vmem:[%s3879 + $0xb8] sm:$0xff]
                %3928 = vst [vmem:[%s3880 + $0x138] sm:$0xff] %v3927
                %v3929 = vld [vmem:[%s3879 + $0xc0] sm:$0xff]
                %3930 = vst [vmem:[%s3880 + $0x180] sm:$0xff] %v3929
                %v3931 = vld [vmem:[%s3879 + $0xc8] sm:$0xff]
                %3932 = vst [vmem:[%s3880 + $0x188] sm:$0xff] %v3931
                %v3933 = vld [vmem:[%s3879 + $0xd0] sm:$0xff]
                %3934 = vst [vmem:[%s3880 + $0x190] sm:$0xff] %v3933
                %v3935 = vld [vmem:[%s3879 + $0xd8] sm:$0xff]
                %3936 = vst [vmem:[%s3880 + $0x198] sm:$0xff] %v3935
                %v3937 = vld [vmem:[%s3879 + $0xe0] sm:$0xff]
                %3938 = vst [vmem:[%s3880 + $0x1a0] sm:$0xff] %v3937
                %v3939 = vld [vmem:[%s3879 + $0xe8] sm:$0xff]
                %3940 = vst [vmem:[%s3880 + $0x1a8] sm:$0xff] %v3939
                %v3941 = vld [vmem:[%s3879 + $0xf0] sm:$0xff]
                %3942 = vst [vmem:[%s3880 + $0x1b0] sm:$0xff] %v3941
                %v3943 = vld [vmem:[%s3879 + $0xf8] sm:$0xff]
                %3944 = vst [vmem:[%s3880 + $0x1b8] sm:$0xff] %v3943
                %v3945 = vld [vmem:[%s3879 + $0x100] sm:$0xff]
                %3946 = vst [vmem:[%s3880 + $0x200] sm:$0xff] %v3945
                %v3947 = vld [vmem:[%s3879 + $0x108] sm:$0xff]
                %3948 = vst [vmem:[%s3880 + $0x208] sm:$0xff] %v3947
                %v3949 = vld [vmem:[%s3879 + $0x110] sm:$0xff]
                %3950 = vst [vmem:[%s3880 + $0x210] sm:$0xff] %v3949
                %v3951 = vld [vmem:[%s3879 + $0x118] sm:$0xff]
                %3952 = vst [vmem:[%s3880 + $0x218] sm:$0xff] %v3951
                %v3953 = vld [vmem:[%s3879 + $0x120] sm:$0xff]
                %3954 = vst [vmem:[%s3880 + $0x220] sm:$0xff] %v3953
                %v3955 = vld [vmem:[%s3879 + $0x128] sm:$0xff]
                %3956 = vst [vmem:[%s3880 + $0x228] sm:$0xff] %v3955
                %v3957 = vld [vmem:[%s3879 + $0x130] sm:$0xff]
                %3958 = vst [vmem:[%s3880 + $0x230] sm:$0xff] %v3957
                %v3959 = vld [vmem:[%s3879 + $0x138] sm:$0xff]
                %3960 = vst [vmem:[%s3880 + $0x238] sm:$0xff] %v3959
                %v3961 = vld [vmem:[%s3879 + $0x140] sm:$0xff]
                %3962 = vst [vmem:[%s3880 + $0x280] sm:$0xff] %v3961
                %v3963 = vld [vmem:[%s3879 + $0x148] sm:$0xff]
                %3964 = vst [vmem:[%s3880 + $0x288] sm:$0xff] %v3963
                %v3965 = vld [vmem:[%s3879 + $0x150] sm:$0xff]
                %3966 = vst [vmem:[%s3880 + $0x290] sm:$0xff] %v3965
                %v3967 = vld [vmem:[%s3879 + $0x158] sm:$0xff]
                %3968 = vst [vmem:[%s3880 + $0x298] sm:$0xff] %v3967
                %v3969 = vld [vmem:[%s3879 + $0x160] sm:$0xff]
                %3970 = vst [vmem:[%s3880 + $0x2a0] sm:$0xff] %v3969
                %v3971 = vld [vmem:[%s3879 + $0x168] sm:$0xff]
                %3972 = vst [vmem:[%s3880 + $0x2a8] sm:$0xff] %v3971
                %v3973 = vld [vmem:[%s3879 + $0x170] sm:$0xff]
                %3974 = vst [vmem:[%s3880 + $0x2b0] sm:$0xff] %v3973
                %v3975 = vld [vmem:[%s3879 + $0x178] sm:$0xff]
                %3976 = vst [vmem:[%s3880 + $0x2b8] sm:$0xff] %v3975
                %v3977 = vld [vmem:[%s3879 + $0x180] sm:$0xff]
                %3978 = vst [vmem:[%s3880 + $0x300] sm:$0xff] %v3977
                %v3979 = vld [vmem:[%s3879 + $0x188] sm:$0xff]
                %3980 = vst [vmem:[%s3880 + $0x308] sm:$0xff] %v3979
                %v3981 = vld [vmem:[%s3879 + $0x190] sm:$0xff]
                %3982 = vst [vmem:[%s3880 + $0x310] sm:$0xff] %v3981
                %v3983 = vld [vmem:[%s3879 + $0x198] sm:$0xff]
                %3984 = vst [vmem:[%s3880 + $0x318] sm:$0xff] %v3983
                %v3985 = vld [vmem:[%s3879 + $0x1a0] sm:$0xff]
                %3986 = vst [vmem:[%s3880 + $0x320] sm:$0xff] %v3985
                %v3987 = vld [vmem:[%s3879 + $0x1a8] sm:$0xff]
                %3988 = vst [vmem:[%s3880 + $0x328] sm:$0xff] %v3987
                %v3989 = vld [vmem:[%s3879 + $0x1b0] sm:$0xff]
                %3990 = vst [vmem:[%s3880 + $0x330] sm:$0xff] %v3989
                %v3991 = vld [vmem:[%s3879 + $0x1b8] sm:$0xff]
                %3992 = vst [vmem:[%s3880 + $0x338] sm:$0xff] %v3991
                %v3993 = vld [vmem:[%s3879 + $0x1c0] sm:$0xff]
                %3994 = vst [vmem:[%s3880 + $0x380] sm:$0xff] %v3993
                %v3995 = vld [vmem:[%s3879 + $0x1c8] sm:$0xff]
                %3996 = vst [vmem:[%s3880 + $0x388] sm:$0xff] %v3995
                %v3997 = vld [vmem:[%s3879 + $0x1d0] sm:$0xff]
                %3998 = vst [vmem:[%s3880 + $0x390] sm:$0xff] %v3997
                %v3999 = vld [vmem:[%s3879 + $0x1d8] sm:$0xff]
                %4000 = vst [vmem:[%s3880 + $0x398] sm:$0xff] %v3999
                %v4001 = vld [vmem:[%s3879 + $0x1e0] sm:$0xff]
                %4002 = vst [vmem:[%s3880 + $0x3a0] sm:$0xff] %v4001
                %v4003 = vld [vmem:[%s3879 + $0x1e8] sm:$0xff]
                %4004 = vst [vmem:[%s3880 + $0x3a8] sm:$0xff] %v4003
                %v4005 = vld [vmem:[%s3879 + $0x1f0] sm:$0xff]
                %4006 = vst [vmem:[%s3880 + $0x3b0] sm:$0xff] %v4005
                %v4007 = vld [vmem:[%s3879 + $0x1f8] sm:$0xff]
                %4008 = vst [vmem:[%s3880 + $0x3b8] sm:$0xff] %v4007
              $region115: #{diffwave_block.1} parent=109 // loop_footer
                %s3878 = sadd.s32 1, %s3874
              $region116: #{diffwave_block.1} parent=109 // loop_footer_branch
                %3873 = sbr.rel target = $region112
              $region117: #{diffwave_block.1} parent=109 // loop_exit
                _
            $region110: #{diffwave_block.1} parent=105 // pred_fallthru
              _
            // Predicated region
            $region118: #{diffwave_block.1} parent=105 // pred_check
              _
            $region119: #{diffwave_block.1} parent=105 // pred_check_branch
              %4010 = sbr.rel target = $region121
            $region120: #{diffwave_block.1} parent=105 // pred_region
              _
            $region121: #{diffwave_block.1} parent=105 // pred_fallthru
              _
          $region106: #{diffwave_block.1} parent=101 // pred_fallthru
            _
          %4011 = vnop
        $region102: #{diffwave_block.1} parent=89 // pred_fallthru
          _
        // Predicated region
        $region122: #{diffwave_block.1} parent=89 // pred_check
          %p4012 = pneg %p275
        $region123: #{diffwave_block.1} parent=89 // pred_check_branch
          %4014 = sbr.rel (%p4012) target = $region125
        $region124: #{diffwave_block.1} parent=89 // pred_region
          %s4015 = smul.u32 8, %s26
          %s4016 = smul.addr %s25, 128
          %s4017 = sadd.s32 %s4015, %s4016
          %s4018 = smul.addr %s4017, 8
          %s4019 = scalar_lea.vmem %s9, %s4018
          // Predicated region
          $region126: #{diffwave_block.1} parent=124 // pred_check
            _
          $region127: #{diffwave_block.1} parent=124 // pred_check_branch
            %4021 = sbr.rel (0) target = $region129
          $region128: #{diffwave_block.1} parent=124 // pred_region
            // Predicated region
            $region130: #{diffwave_block.1} parent=128 // pred_check
              _
            $region131: #{diffwave_block.1} parent=128 // pred_check_branch
              %4023 = sbr.rel (0) target = $region133
            $region132: #{diffwave_block.1} parent=128 // pred_region
              loop: start=0, step=1, limit=1
              $region134: #{diffwave_block.1} parent=132 // loop_pre_header
                _
              $region135: #{diffwave_block.1} parent=132 // loop_header
                %s4025 = sphi 0, %s4029
                %p4026 = scmp.ge.s32.totalorder %s4025, 1
                %s4030 = sphi %s3860, %s3860
                %s4031 = sphi %s4019, %s4019
              $region136: #{diffwave_block.1} parent=132 // loop_header_branch
                %4028 = sbr.rel (%p4026) target = $region140
              $region137: #{diffwave_block.1} parent=132 // loop_body
                %v4032 = vld [vmem:[%s4030] sm:$0xff]
                %4033 = vst [vmem:[%s4031] sm:$0xff] %v4032
                %v4034 = vld [vmem:[%s4030 + $0x8] sm:$0xff]
                %4035 = vst [vmem:[%s4031 + $0x8] sm:$0xff] %v4034
                %v4036 = vld [vmem:[%s4030 + $0x10] sm:$0xff]
                %4037 = vst [vmem:[%s4031 + $0x10] sm:$0xff] %v4036
                %v4038 = vld [vmem:[%s4030 + $0x18] sm:$0xff]
                %4039 = vst [vmem:[%s4031 + $0x18] sm:$0xff] %v4038
                %v4040 = vld [vmem:[%s4030 + $0x20] sm:$0xff]
                %4041 = vst [vmem:[%s4031 + $0x20] sm:$0xff] %v4040
                %v4042 = vld [vmem:[%s4030 + $0x28] sm:$0xff]
                %4043 = vst [vmem:[%s4031 + $0x28] sm:$0xff] %v4042
                %v4044 = vld [vmem:[%s4030 + $0x30] sm:$0xff]
                %4045 = vst [vmem:[%s4031 + $0x30] sm:$0xff] %v4044
                %v4046 = vld [vmem:[%s4030 + $0x38] sm:$0xff]
                %4047 = vst [vmem:[%s4031 + $0x38] sm:$0xff] %v4046
                %v4048 = vld [vmem:[%s4030 + $0x40] sm:$0xff]
                %4049 = vst [vmem:[%s4031 + $0x80] sm:$0xff] %v4048
                %v4050 = vld [vmem:[%s4030 + $0x48] sm:$0xff]
                %4051 = vst [vmem:[%s4031 + $0x88] sm:$0xff] %v4050
                %v4052 = vld [vmem:[%s4030 + $0x50] sm:$0xff]
                %4053 = vst [vmem:[%s4031 + $0x90] sm:$0xff] %v4052
                %v4054 = vld [vmem:[%s4030 + $0x58] sm:$0xff]
                %4055 = vst [vmem:[%s4031 + $0x98] sm:$0xff] %v4054
                %v4056 = vld [vmem:[%s4030 + $0x60] sm:$0xff]
                %4057 = vst [vmem:[%s4031 + $0xa0] sm:$0xff] %v4056
                %v4058 = vld [vmem:[%s4030 + $0x68] sm:$0xff]
                %4059 = vst [vmem:[%s4031 + $0xa8] sm:$0xff] %v4058
                %v4060 = vld [vmem:[%s4030 + $0x70] sm:$0xff]
                %4061 = vst [vmem:[%s4031 + $0xb0] sm:$0xff] %v4060
                %v4062 = vld [vmem:[%s4030 + $0x78] sm:$0xff]
                %4063 = vst [vmem:[%s4031 + $0xb8] sm:$0xff] %v4062
                %v4064 = vld [vmem:[%s4030 + $0x80] sm:$0xff]
                %4065 = vst [vmem:[%s4031 + $0x100] sm:$0xff] %v4064
                %v4066 = vld [vmem:[%s4030 + $0x88] sm:$0xff]
                %4067 = vst [vmem:[%s4031 + $0x108] sm:$0xff] %v4066
                %v4068 = vld [vmem:[%s4030 + $0x90] sm:$0xff]
                %4069 = vst [vmem:[%s4031 + $0x110] sm:$0xff] %v4068
                %v4070 = vld [vmem:[%s4030 + $0x98] sm:$0xff]
                %4071 = vst [vmem:[%s4031 + $0x118] sm:$0xff] %v4070
                %v4072 = vld [vmem:[%s4030 + $0xa0] sm:$0xff]
                %4073 = vst [vmem:[%s4031 + $0x120] sm:$0xff] %v4072
                %v4074 = vld [vmem:[%s4030 + $0xa8] sm:$0xff]
                %4075 = vst [vmem:[%s4031 + $0x128] sm:$0xff] %v4074
                %v4076 = vld [vmem:[%s4030 + $0xb0] sm:$0xff]
                %4077 = vst [vmem:[%s4031 + $0x130] sm:$0xff] %v4076
                %v4078 = vld [vmem:[%s4030 + $0xb8] sm:$0xff]
                %4079 = vst [vmem:[%s4031 + $0x138] sm:$0xff] %v4078
                %v4080 = vld [vmem:[%s4030 + $0xc0] sm:$0xff]
                %4081 = vst [vmem:[%s4031 + $0x180] sm:$0xff] %v4080
                %v4082 = vld [vmem:[%s4030 + $0xc8] sm:$0xff]
                %4083 = vst [vmem:[%s4031 + $0x188] sm:$0xff] %v4082
                %v4084 = vld [vmem:[%s4030 + $0xd0] sm:$0xff]
                %4085 = vst [vmem:[%s4031 + $0x190] sm:$0xff] %v4084
                %v4086 = vld [vmem:[%s4030 + $0xd8] sm:$0xff]
                %4087 = vst [vmem:[%s4031 + $0x198] sm:$0xff] %v4086
                %v4088 = vld [vmem:[%s4030 + $0xe0] sm:$0xff]
                %4089 = vst [vmem:[%s4031 + $0x1a0] sm:$0xff] %v4088
                %v4090 = vld [vmem:[%s4030 + $0xe8] sm:$0xff]
                %4091 = vst [vmem:[%s4031 + $0x1a8] sm:$0xff] %v4090
                %v4092 = vld [vmem:[%s4030 + $0xf0] sm:$0xff]
                %4093 = vst [vmem:[%s4031 + $0x1b0] sm:$0xff] %v4092
                %v4094 = vld [vmem:[%s4030 + $0xf8] sm:$0xff]
                %4095 = vst [vmem:[%s4031 + $0x1b8] sm:$0xff] %v4094
                %v4096 = vld [vmem:[%s4030 + $0x100] sm:$0xff]
                %4097 = vst [vmem:[%s4031 + $0x200] sm:$0xff] %v4096
                %v4098 = vld [vmem:[%s4030 + $0x108] sm:$0xff]
                %4099 = vst [vmem:[%s4031 + $0x208] sm:$0xff] %v4098
                %v4100 = vld [vmem:[%s4030 + $0x110] sm:$0xff]
                %4101 = vst [vmem:[%s4031 + $0x210] sm:$0xff] %v4100
                %v4102 = vld [vmem:[%s4030 + $0x118] sm:$0xff]
                %4103 = vst [vmem:[%s4031 + $0x218] sm:$0xff] %v4102
                %v4104 = vld [vmem:[%s4030 + $0x120] sm:$0xff]
                %4105 = vst [vmem:[%s4031 + $0x220] sm:$0xff] %v4104
                %v4106 = vld [vmem:[%s4030 + $0x128] sm:$0xff]
                %4107 = vst [vmem:[%s4031 + $0x228] sm:$0xff] %v4106
                %v4108 = vld [vmem:[%s4030 + $0x130] sm:$0xff]
                %4109 = vst [vmem:[%s4031 + $0x230] sm:$0xff] %v4108
                %v4110 = vld [vmem:[%s4030 + $0x138] sm:$0xff]
                %4111 = vst [vmem:[%s4031 + $0x238] sm:$0xff] %v4110
                %v4112 = vld [vmem:[%s4030 + $0x140] sm:$0xff]
                %4113 = vst [vmem:[%s4031 + $0x280] sm:$0xff] %v4112
                %v4114 = vld [vmem:[%s4030 + $0x148] sm:$0xff]
                %4115 = vst [vmem:[%s4031 + $0x288] sm:$0xff] %v4114
                %v4116 = vld [vmem:[%s4030 + $0x150] sm:$0xff]
                %4117 = vst [vmem:[%s4031 + $0x290] sm:$0xff] %v4116
                %v4118 = vld [vmem:[%s4030 + $0x158] sm:$0xff]
                %4119 = vst [vmem:[%s4031 + $0x298] sm:$0xff] %v4118
                %v4120 = vld [vmem:[%s4030 + $0x160] sm:$0xff]
                %4121 = vst [vmem:[%s4031 + $0x2a0] sm:$0xff] %v4120
                %v4122 = vld [vmem:[%s4030 + $0x168] sm:$0xff]
                %4123 = vst [vmem:[%s4031 + $0x2a8] sm:$0xff] %v4122
                %v4124 = vld [vmem:[%s4030 + $0x170] sm:$0xff]
                %4125 = vst [vmem:[%s4031 + $0x2b0] sm:$0xff] %v4124
                %v4126 = vld [vmem:[%s4030 + $0x178] sm:$0xff]
                %4127 = vst [vmem:[%s4031 + $0x2b8] sm:$0xff] %v4126
                %v4128 = vld [vmem:[%s4030 + $0x180] sm:$0xff]
                %4129 = vst [vmem:[%s4031 + $0x300] sm:$0xff] %v4128
                %v4130 = vld [vmem:[%s4030 + $0x188] sm:$0xff]
                %4131 = vst [vmem:[%s4031 + $0x308] sm:$0xff] %v4130
                %v4132 = vld [vmem:[%s4030 + $0x190] sm:$0xff]
                %4133 = vst [vmem:[%s4031 + $0x310] sm:$0xff] %v4132
                %v4134 = vld [vmem:[%s4030 + $0x198] sm:$0xff]
                %4135 = vst [vmem:[%s4031 + $0x318] sm:$0xff] %v4134
                %v4136 = vld [vmem:[%s4030 + $0x1a0] sm:$0xff]
                %4137 = vst [vmem:[%s4031 + $0x320] sm:$0xff] %v4136
                %v4138 = vld [vmem:[%s4030 + $0x1a8] sm:$0xff]
                %4139 = vst [vmem:[%s4031 + $0x328] sm:$0xff] %v4138
                %v4140 = vld [vmem:[%s4030 + $0x1b0] sm:$0xff]
                %4141 = vst [vmem:[%s4031 + $0x330] sm:$0xff] %v4140
                %v4142 = vld [vmem:[%s4030 + $0x1b8] sm:$0xff]
                %4143 = vst [vmem:[%s4031 + $0x338] sm:$0xff] %v4142
                %v4144 = vld [vmem:[%s4030 + $0x1c0] sm:$0xff]
                %4145 = vst [vmem:[%s4031 + $0x380] sm:$0xff] %v4144
                %v4146 = vld [vmem:[%s4030 + $0x1c8] sm:$0xff]
                %4147 = vst [vmem:[%s4031 + $0x388] sm:$0xff] %v4146
                %v4148 = vld [vmem:[%s4030 + $0x1d0] sm:$0xff]
                %4149 = vst [vmem:[%s4031 + $0x390] sm:$0xff] %v4148
                %v4150 = vld [vmem:[%s4030 + $0x1d8] sm:$0xff]
                %4151 = vst [vmem:[%s4031 + $0x398] sm:$0xff] %v4150
                %v4152 = vld [vmem:[%s4030 + $0x1e0] sm:$0xff]
                %4153 = vst [vmem:[%s4031 + $0x3a0] sm:$0xff] %v4152
                %v4154 = vld [vmem:[%s4030 + $0x1e8] sm:$0xff]
                %4155 = vst [vmem:[%s4031 + $0x3a8] sm:$0xff] %v4154
                %v4156 = vld [vmem:[%s4030 + $0x1f0] sm:$0xff]
                %4157 = vst [vmem:[%s4031 + $0x3b0] sm:$0xff] %v4156
                %v4158 = vld [vmem:[%s4030 + $0x1f8] sm:$0xff]
                %4159 = vst [vmem:[%s4031 + $0x3b8] sm:$0xff] %v4158
              $region138: #{diffwave_block.1} parent=132 // loop_footer
                %s4029 = sadd.s32 1, %s4025
              $region139: #{diffwave_block.1} parent=132 // loop_footer_branch
                %4024 = sbr.rel target = $region135
              $region140: #{diffwave_block.1} parent=132 // loop_exit
                _
            $region133: #{diffwave_block.1} parent=128 // pred_fallthru
              _
            // Predicated region
            $region141: #{diffwave_block.1} parent=128 // pred_check
              _
            $region142: #{diffwave_block.1} parent=128 // pred_check_branch
              %4161 = sbr.rel target = $region144
            $region143: #{diffwave_block.1} parent=128 // pred_region
              _
            $region144: #{diffwave_block.1} parent=128 // pred_fallthru
              _
          $region129: #{diffwave_block.1} parent=124 // pred_fallthru
            _
          %4162 = vnop
        $region125: #{diffwave_block.1} parent=89 // pred_fallthru
          _
      $region90: #{diffwave_block.1} parent=5 // pred_fallthru
        _
      %p4163 = scmp.le.s32.totalorder 2, %s16
      // Predicated region
      $region145: #{diffwave_block.1} parent=5 // pred_check
        %p4164 = pneg %p4163
      $region146: #{diffwave_block.1} parent=5 // pred_check_branch
        %4166 = sbr.rel (%p4164) target = $region148
      $region147: #{diffwave_block.1} parent=5 // pred_region
        %s4167 = ssub.s32 %s16, 2
        // Predicated region
        $region149: #{diffwave_block.1} parent=147 // pred_check
          %p4168 = pneg %p253
        $region150: #{diffwave_block.1} parent=147 // pred_check_branch
          %4170 = sbr.rel (%p4168) target = $region152
        $region151: #{diffwave_block.1} parent=147 // pred_region
          %s4171 = sand.u32 %s238, 1
          %s4172 = sand.u32 %s238, 1
          %s4173 = smul.addr %s4172, 512
          %s4174 = scalar_lea.vmem [#allocation4], %s4173
        $region152: #{diffwave_block.1} parent=147 // pred_fallthru
          _
        // Predicated region
        $region153: #{diffwave_block.1} parent=147 // pred_check
          %p4175 = pneg %p281
        $region154: #{diffwave_block.1} parent=147 // pred_check_branch
          %4177 = sbr.rel (%p4175) target = $region156
        $region155: #{diffwave_block.1} parent=147 // pred_region
          %s4178 = sand.u32 %s266, 1
          %s4179 = sand.u32 %s266, 1
          %s4180 = smul.addr %s4179, 512
          %s4181 = scalar_lea.vmem [#allocation5], %s4180
        $region156: #{diffwave_block.1} parent=147 // pred_fallthru
          _
      $region148: #{diffwave_block.1} parent=5 // pred_fallthru
        _
    $region6: #{diffwave_block.1} parent=1 // loop_footer
      %s20 = sadd.s32 1, %s16
    $region7: #{diffwave_block.1} parent=1 // loop_footer_branch
      %15 = sbr.rel target = $region3
    $region8: #{diffwave_block.1} parent=1 // loop_exit
      _

</llo_original>
